<compile_context>
chip_gen: v7x
topology: tpu7x:2x2x1
jax: 0.10.0
libtpu: 0.0.40
codegen_flags: <defaults>
</compile_context>

<pallas_src>
import math

import numpy as np
import jax
import jax.numpy as jnp
from jax.experimental import pallas as pl
from jax.experimental.pallas import tpu as pltpu

D_MODEL = 32
N_HEADS = 4
D_HEAD = D_MODEL // N_HEADS
D_FF = 64
N_LAYERS = 2
EPS = 1e-6

# weight-slab geometry (per layer); all offsets are 8-sublane / 128-lane tidy
WSLAB_ROWS = 128          # rows 0:96 = Wqkv^T, rows 96:128 = Wo^T
WSLAB_COLS = 192          # cols 0:32 = transposed weights, col 32 = bias col,
                          # cols 128:192 = W1 (rows 0:32) / W2 (rows 32:96)
VEC_ROWS = 16             # 6 rows per layer + 2 final-norm rows, padded to 16


# ---------------------------------------------------------------------------
# Kernel-side helpers
# ---------------------------------------------------------------------------
def _torch_layernorm(x, a, b):
    # Reproduces the module's LayerNorm: a*(x-mean)/(std+eps)+b with torch's
    # default unbiased std (divide by D-1) and eps added to std (not var).
    mean = jnp.mean(x, axis=-1, keepdims=True)
    xc = x - mean
    var = jnp.sum(xc * xc, axis=-1, keepdims=True) * (1.0 / (x.shape[-1] - 1))
    inv = pl.reciprocal(jnp.sqrt(var) + EPS, approx=False)
    return a * xc * inv + b


def encoder_kernel(x_ref, keep_ref, w_ref, vec_ref, o_ref):
    """Full encoder (all layers + final norm) in one kernel invocation.

    x_ref:    [M, D]   activations, M = B*S folded tokens
    keep_ref: [M, M]   token-level mask (1.0 = may attend, 0.0 = masked)
    w_ref:    [N_LAYERS, 128, 192] packed weight slab (attention weights
              stored transposed, biases in column 32, FFN weights in the
              128:192 column group)
    vec_ref:  [16, 128] packed LayerNorm params / FFN biases / final norm
    """
    M = x_ref.shape[0]
    x = x_ref[...]                                            # [M, D]

    # Hoisted: mask shared by every head of every layer.
    keep3 = jnp.broadcast_to(keep_ref[...].reshape(1, M, M),
                             (N_HEADS, M, M))                 # [H, M, M]
    scale = 1.0 / math.sqrt(D_HEAD)

    for l in range(N_LAYERS):                                 # static, unrolled
        r = 6 * l
        ln1_a = vec_ref[r + 0:r + 1, 0:D_MODEL]
        ln1_b = vec_ref[r + 1:r + 2, 0:D_MODEL]
        ln2_a = vec_ref[r + 2:r + 3, 0:D_MODEL]
        ln2_b = vec_ref[r + 3:r + 4, 0:D_MODEL]
        b1 = vec_ref[r + 4:r + 5, 0:D_FF]
        b2 = vec_ref[r + 5:r + 6, 0:D_MODEL]

        wqkvT = w_ref[l, 0:3 * D_MODEL, 0:D_MODEL]            # [3D, D]
        bqkvT = w_ref[l, 0:3 * D_MODEL, D_MODEL:D_MODEL + 1]  # [3D, 1]
        woT = w_ref[l, 3 * D_MODEL:4 * D_MODEL, 0:D_MODEL]    # [D, D]
        boT = w_ref[l, 3 * D_MODEL:4 * D_MODEL, D_MODEL:D_MODEL + 1]
        w1 = w_ref[l, 0:D_MODEL, 128:128 + D_FF]              # [D, D_FF]
        w2 = w_ref[l, D_MODEL:D_MODEL + D_FF, 128:128 + D_MODEL]  # [D_FF, D]

        # ---- sublayer 1: x + self_attn(norm(x)) ---------------------------
        y = _torch_layernorm(x, ln1_a, ln1_b)                 # [M, D]
        # Channel-major QKV: the head split lands on the sublane axis, so the
        # reshape below is tile-aligned (no per-head lane slices).
        qkvT = jnp.dot(wqkvT, y.T,
                       preferred_element_type=jnp.float32) + bqkvT   # [3D, M]
        qkvT = qkvT.reshape(3, N_HEADS, D_HEAD, M)
        qT, kT, vT = qkvT[0], qkvT[1], qkvT[2]                # [H, Dh, M]

        q = jnp.swapaxes(qT, 1, 2)                            # [H, M, Dh]
        sc = jnp.einsum("hqd,hdk->hqk", q, kT,
                        preferred_element_type=jnp.float32) * scale  # [H, M, M]
        # Replace (not add), matching torch's masked_fill semantics exactly.
        sc = jnp.where(keep3 == 0.0, -1e9, sc)
        sc = sc - jnp.max(sc, axis=-1, keepdims=True)
        p = jnp.exp(sc)
        p = p * pl.reciprocal(jnp.sum(p, axis=-1, keepdims=True),
                              approx=False)
        # pvT[h, d, q] = sum_k vT[h, d, k] * p[h, q, k]
        pvT = jnp.einsum("hdk,hqk->hdq", vT, p,
                         preferred_element_type=jnp.float32)          # [H,Dh,M]
        # head re-concat is a free tile-aligned merge in channel-major layout
        attnT = jnp.dot(woT, pvT.reshape(D_MODEL, M),
                        preferred_element_type=jnp.float32) + boT     # [D, M]
        x = x + attnT.T                                       # residual (p=0)

        # ---- sublayer 2: x + ffn(norm(x)) ---------------------------------
        y2 = _torch_layernorm(x, ln2_a, ln2_b)
        h1 = jnp.maximum(
            jnp.dot(y2, w1, preferred_element_type=jnp.float32) + b1, 0.0)
        x = x + jnp.dot(h1, w2, preferred_element_type=jnp.float32) + b2

    # ---- final LayerNorm, single store -------------------------------------
    fa = vec_ref[6 * N_LAYERS:6 * N_LAYERS + 1, 0:D_MODEL]
    fb = vec_ref[6 * N_LAYERS + 1:6 * N_LAYERS + 2, 0:D_MODEL]
    o_ref[...] = _torch_layernorm(x, fa, fb)


# ---------------------------------------------------------------------------
# pallas_call wrapper (single fused call, 4 input DMAs)
# ---------------------------------------------------------------------------
def _whole(shape):
    n = len(shape)
    return pl.BlockSpec(shape, lambda i, _n=n: (0,) * _n)


def pack_params(p):
    """Pack all per-layer weights into one slab and all small vectors into a
    second slab, cutting 14 per-parameter DMAs down to 2."""
    W = jnp.zeros((N_LAYERS, WSLAB_ROWS, WSLAB_COLS), jnp.float32)
    W = W.at[:, 0:3 * D_MODEL, 0:D_MODEL].set(jnp.swapaxes(p["wqkv"], 1, 2))
    W = W.at[:, 0:3 * D_MODEL, D_MODEL].set(p["bqkv"])
    W = W.at[:, 3 * D_MODEL:4 * D_MODEL, 0:D_MODEL].set(
        jnp.swapaxes(p["wo"], 1, 2))
    W = W.at[:, 3 * D_MODEL:4 * D_MODEL, D_MODEL].set(p["bo"])
    W = W.at[:, 0:D_MODEL, 128:128 + D_FF].set(p["w1"])
    W = W.at[:, D_MODEL:D_MODEL + D_FF, 128:128 + D_MODEL].set(p["w2"])

    V = jnp.zeros((VEC_ROWS, 128), jnp.float32)
    for l in range(N_LAYERS):
        r = 6 * l
        V = V.at[r + 0, 0:D_MODEL].set(p["ln1_a"][l])
        V = V.at[r + 1, 0:D_MODEL].set(p["ln1_b"][l])
        V = V.at[r + 2, 0:D_MODEL].set(p["ln2_a"][l])
        V = V.at[r + 3, 0:D_MODEL].set(p["ln2_b"][l])
        V = V.at[r + 4, 0:D_FF].set(p["b1"][l])
        V = V.at[r + 5, 0:D_MODEL].set(p["b2"][l])
    V = V.at[6 * N_LAYERS, 0:D_MODEL].set(p["final_a"])
    V = V.at[6 * N_LAYERS + 1, 0:D_MODEL].set(p["final_b"])
    return W, V


def encoder_forward(x, mask, w_slab, vec_slab):
    B, S, _ = x.shape
    M = B * S
    x2d = x.reshape(M, D_MODEL)

    # Token-level attention mask: token i may attend key j iff both tokens are
    # in the same batch element AND key j is kept by `mask`.  Lets the kernel
    # batch all heads over the folded [B*S] token axis; masked probabilities
    # underflow to exactly 0, so results match per-batch attention exactly.
    tok_b = jnp.repeat(jnp.arange(B), S)
    same_b = tok_b[:, None] == tok_b[None, :]
    key_keep = (mask.reshape(M) != 0.0)
    attn_keep = (same_b & key_keep[None, :]).astype(jnp.float32)   # [M, M]

    out2d = pl.pallas_call(
        encoder_kernel,
        out_shape=jax.ShapeDtypeStruct((M, D_MODEL), jnp.float32),
        grid_spec=pltpu.PrefetchScalarGridSpec(
            num_scalar_prefetch=0,
            grid=(1,),
            in_specs=[
                _whole((M, D_MODEL)),                 # x
                _whole((M, M)),                       # token mask
                _whole(tuple(w_slab.shape)),          # packed weights
                _whole(tuple(vec_slab.shape)),        # packed vectors
            ],
            out_specs=_whole((M, D_MODEL)),
        ),
        compiler_params=pltpu.CompilerParams(
            dimension_semantics=("arbitrary",),
        ),
    )(x2d, attn_keep, w_slab, vec_slab)
    return out2d.reshape(B, S, D_MODEL)


# ---------------------------------------------------------------------------
# Pure-JAX reference (mirrors the PyTorch forward exactly)
# ---------------------------------------------------------------------------
def _ref_layernorm(x, a, b):
    mean = x.mean(-1, keepdims=True)
    var = ((x - mean) ** 2).sum(-1, keepdims=True) / (x.shape[-1] - 1)
    return a * (x - mean) / (jnp.sqrt(var) + EPS) + b


def encoder_reference(x, mask, p):
    for l in range(N_LAYERS):
        y = _ref_layernorm(x, p["ln1_a"][l], p["ln1_b"][l])
        qkv = y @ p["wqkv"][l] + p["bqkv"][l]
        q = qkv[..., :D_MODEL]
        k = qkv[..., D_MODEL:2 * D_MODEL]
        v = qkv[..., 2 * D_MODEL:]
        heads = []
        for h in range(N_HEADS):
            sl = slice(h * D_HEAD, (h + 1) * D_HEAD)
            qh, kh, vh = q[..., sl], k[..., sl], v[..., sl]
            scores = jnp.einsum("bqd,bkd->bqk", qh, kh) / math.sqrt(D_HEAD)
            scores = jnp.where(mask == 0.0, -1e9, scores)  # [B,1,S] broadcasts
            pa = jax.nn.softmax(scores, axis=-1)
            heads.append(jnp.einsum("bqk,bkd->bqd", pa, vh))
        attn = jnp.concatenate(heads, axis=-1) @ p["wo"][l] + p["bo"][l]
        x = x + attn
        y2 = _ref_layernorm(x, p["ln2_a"][l], p["ln2_b"][l])
        ff = jnp.maximum(y2 @ p["w1"][l] + p["b1"][l], 0.0) @ p["w2"][l] + p["b2"][l]
        x = x + ff
    return _ref_layernorm(x, p["final_a"], p["final_b"])


# ---------------------------------------------------------------------------
# Deterministic parameter init + driver
# ---------------------------------------------------------------------------
def init_params(key):
    p = {
        "ln1_a": jnp.ones((N_LAYERS, D_MODEL), jnp.float32),
        "ln1_b": jnp.zeros((N_LAYERS, D_MODEL), jnp.float32),
        "ln2_a": jnp.ones((N_LAYERS, D_MODEL), jnp.float32),
        "ln2_b": jnp.zeros((N_LAYERS, D_MODEL), jnp.float32),
        "final_a": jnp.ones((D_MODEL,), jnp.float32),
        "final_b": jnp.zeros((D_MODEL,), jnp.float32),
    }
    wqkv, bqkv, wo, bo, w1, b1, w2, b2 = [], [], [], [], [], [], [], []
    for _ in range(N_LAYERS):
        key, k1, k2, k3, k4, k5 = jax.random.split(key, 6)
        wqkv.append(0.1 * jax.random.normal(k1, (D_MODEL, 3 * D_MODEL), jnp.float32))
        bqkv.append(0.01 * jax.random.normal(k2, (3 * D_MODEL,), jnp.float32))
        wo.append(0.1 * jax.random.normal(k3, (D_MODEL, D_MODEL), jnp.float32))
        bo.append(jnp.zeros((D_MODEL,), jnp.float32))
        w1.append(0.1 * jax.random.normal(k4, (D_MODEL, D_FF), jnp.float32))
        b1.append(jnp.zeros((D_FF,), jnp.float32))
        w2.append(0.1 * jax.random.normal(k5, (D_FF, D_MODEL), jnp.float32))
        b2.append(jnp.zeros((D_MODEL,), jnp.float32))
    p.update(
        wqkv=jnp.stack(wqkv), bqkv=jnp.stack(bqkv),
        wo=jnp.stack(wo), bo=jnp.stack(bo),
        w1=jnp.stack(w1), b1=jnp.stack(b1),
        w2=jnp.stack(w2), b2=jnp.stack(b2),
    )
    return p, key


if __name__ == "__main__":
    B, S = 2, 8
    key = jax.random.PRNGKey(0)
    params, key = init_params(key)
    w_slab, vec_slab = pack_params(params)

    key, kx = jax.random.split(key)
    x = jax.random.normal(kx, (B, S, D_MODEL), jnp.float32)
    mask = jnp.ones((B, 1, S), jnp.float32)
    mask = mask.at[1, 0, -2:].set(0.0)   # mask last two key positions of batch 1

    out = encoder_forward(x, mask, w_slab, vec_slab)
    out = jax.block_until_ready(out)

    ref = encoder_reference(x, mask, params)
    np.testing.assert_allclose(np.asarray(out), np.asarray(ref),
                               rtol=1e-4, atol=1e-4)
    print("KERNEL_OK")
</pallas_src>

<mosaic_0001>
module attributes {stable_mosaic.version = 11 : i64} {
  func.func @encoder_kernel(%arg0: i32, %arg1: memref<16x32xf32, #tpu.memory_space<vmem>>, %arg2: memref<16x16xf32, #tpu.memory_space<vmem>>, %arg3: memref<2x128x192xf32, #tpu.memory_space<vmem>>, %arg4: memref<16x128xf32, #tpu.memory_space<vmem>>, %arg5: memref<16x32xf32, #tpu.memory_space<vmem>>) attributes {dimension_semantics = [#tpu.dimension_semantics<arbitrary>], iteration_bounds = array<i64: 1>, scalar_prefetch = 0 : i64, scratch_operands = 0 : i64, tpu.core_type = #tpu.core_type<tc>, window_params = [{pipeline_mode = #tpu.pipeline_mode<synchronous>, transform_indices = @transform_0, window_bounds = array<i64: 16, 32>}, {pipeline_mode = #tpu.pipeline_mode<synchronous>, transform_indices = @transform_1, window_bounds = array<i64: 16, 16>}, {pipeline_mode = #tpu.pipeline_mode<synchronous>, transform_indices = @transform_2, window_bounds = array<i64: 2, 128, 192>}, {pipeline_mode = #tpu.pipeline_mode<synchronous>, transform_indices = @transform_3, window_bounds = array<i64: 16, 128>}, {pipeline_mode = #tpu.pipeline_mode<synchronous>, transform_indices = @transform_4, window_bounds = array<i64: 16, 32>}]} {
    %c0 = arith.constant 0 : index
    %c0_0 = arith.constant 0 : index
    %0 = vector.load %arg1[%c0, %c0_0] : memref<16x32xf32, #tpu.memory_space<vmem>>, vector<16x32xf32>
    %c0_1 = arith.constant 0 : index
    %c0_2 = arith.constant 0 : index
    %1 = vector.load %arg2[%c0_1, %c0_2] : memref<16x16xf32, #tpu.memory_space<vmem>>, vector<16x16xf32>
    %2 = vector.shape_cast %1 : vector<16x16xf32> to vector<1x16x16xf32>
    %3 = vector.shape_cast %2 : vector<1x16x16xf32> to vector<1x16x16xf32>
    %4 = vector.broadcast %3 : vector<1x16x16xf32> to vector<4x16x16xf32>
    %c0_3 = arith.constant 0 : index
    %c0_4 = arith.constant 0 : index
    %5 = vector.load %arg4[%c0_3, %c0_4] : memref<16x128xf32, #tpu.memory_space<vmem>>, vector<1x32xf32>
    %c1 = arith.constant 1 : index
    %c0_5 = arith.constant 0 : index
    %6 = vector.load %arg4[%c1, %c0_5] : memref<16x128xf32, #tpu.memory_space<vmem>>, vector<1x32xf32>
    %c2 = arith.constant 2 : index
    %c0_6 = arith.constant 0 : index
    %7 = vector.load %arg4[%c2, %c0_6] : memref<16x128xf32, #tpu.memory_space<vmem>>, vector<1x32xf32>
    %c3 = arith.constant 3 : index
    %c0_7 = arith.constant 0 : index
    %8 = vector.load %arg4[%c3, %c0_7] : memref<16x128xf32, #tpu.memory_space<vmem>>, vector<1x32xf32>
    %c4 = arith.constant 4 : index
    %c0_8 = arith.constant 0 : index
    %9 = vector.load %arg4[%c4, %c0_8] : memref<16x128xf32, #tpu.memory_space<vmem>>, vector<1x64xf32>
    %c5 = arith.constant 5 : index
    %c0_9 = arith.constant 0 : index
    %10 = vector.load %arg4[%c5, %c0_9] : memref<16x128xf32, #tpu.memory_space<vmem>>, vector<1x32xf32>
    %c0_10 = arith.constant 0 : index
    %c0_11 = arith.constant 0 : index
    %c0_12 = arith.constant 0 : index
    %11 = vector.load %arg3[%c0_10, %c0_11, %c0_12] : memref<2x128x192xf32, #tpu.memory_space<vmem>>, vector<1x96x32xf32>
    %12 = vector.shape_cast %11 : vector<1x96x32xf32> to vector<96x32xf32>
    %c0_13 = arith.constant 0 : index
    %c0_14 = arith.constant 0 : index
    %c32 = arith.constant 32 : index
    %13 = vector.load %arg3[%c0_13, %c0_14, %c32] : memref<2x128x192xf32, #tpu.memory_space<vmem>>, vector<1x96x1xf32>
    %14 = vector.shape_cast %13 : vector<1x96x1xf32> to vector<96x1xf32>
    %c0_15 = arith.constant 0 : index
    %c96 = arith.constant 96 : index
    %c0_16 = arith.constant 0 : index
    %15 = vector.load %arg3[%c0_15, %c96, %c0_16] : memref<2x128x192xf32, #tpu.memory_space<vmem>>, vector<1x32x32xf32>
    %16 = vector.shape_cast %15 : vector<1x32x32xf32> to vector<32x32xf32>
    %c0_17 = arith.constant 0 : index
    %c96_18 = arith.constant 96 : index
    %c32_19 = arith.constant 32 : index
    %17 = vector.load %arg3[%c0_17, %c96_18, %c32_19] : memref<2x128x192xf32, #tpu.memory_space<vmem>>, vector<1x32x1xf32>
    %18 = vector.shape_cast %17 : vector<1x32x1xf32> to vector<32x1xf32>
    %c0_20 = arith.constant 0 : index
    %c0_21 = arith.constant 0 : index
    %c128 = arith.constant 128 : index
    %19 = vector.load %arg3[%c0_20, %c0_21, %c128] : memref<2x128x192xf32, #tpu.memory_space<vmem>>, vector<1x32x64xf32>
    %20 = vector.shape_cast %19 : vector<1x32x64xf32> to vector<32x64xf32>
    %c0_22 = arith.constant 0 : index
    %c32_23 = arith.constant 32 : index
    %c128_24 = arith.constant 128 : index
    %21 = vector.load %arg3[%c0_22, %c32_23, %c128_24] : memref<2x128x192xf32, #tpu.memory_space<vmem>>, vector<1x64x32xf32>
    %22 = vector.shape_cast %21 : vector<1x64x32xf32> to vector<64x32xf32>
    %cst = arith.constant dense<0.000000e+00> : vector<16xf32>
    %23 = vector.multi_reduction <add>, %0, %cst [1] : vector<16x32xf32> to vector<16xf32>
    %24 = vector.shape_cast %23 : vector<16xf32> to vector<16x1xf32>
    %cst_25 = arith.constant 3.200000e+01 : f32
    %25 = vector.broadcast %cst_25 : f32 to vector<16x1xf32>
    %26 = arith.divf %24, %25 : vector<16x1xf32>
    %27 = vector.broadcast %26 : vector<16x1xf32> to vector<16x32xf32>
    %28 = arith.subf %0, %27 : vector<16x32xf32>
    %29 = arith.mulf %28, %28 : vector<16x32xf32>
    %cst_26 = arith.constant dense<0.000000e+00> : vector<16xf32>
    %30 = vector.multi_reduction <add>, %29, %cst_26 [1] : vector<16x32xf32> to vector<16xf32>
    %31 = vector.shape_cast %30 : vector<16xf32> to vector<16x1xf32>
    %cst_27 = arith.constant 0.0322580636 : f32
    %32 = vector.broadcast %cst_27 : f32 to vector<16x1xf32>
    %33 = arith.mulf %31, %32 : vector<16x1xf32>
    %34 = math.sqrt %33 : vector<16x1xf32>
    %cst_28 = arith.constant 9.99999997E-7 : f32
    %35 = vector.broadcast %cst_28 : f32 to vector<16x1xf32>
    %36 = arith.addf %34, %35 : vector<16x1xf32>
    %37 = tpu.reciprocal %36 : vector<16x1xf32> -> vector<16x1xf32>
    %38 = vector.broadcast %5 : vector<1x32xf32> to vector<16x32xf32>
    %39 = arith.mulf %38, %28 : vector<16x32xf32>
    %40 = vector.broadcast %37 : vector<16x1xf32> to vector<16x32xf32>
    %41 = arith.mulf %39, %40 : vector<16x32xf32>
    %42 = vector.broadcast %6 : vector<1x32xf32> to vector<16x32xf32>
    %43 = arith.addf %41, %42 : vector<16x32xf32>
    %44 = tpu.transpose %43, [1, 0] : vector<16x32xf32> -> vector<32x16xf32>
    %cst_29 = arith.constant dense<0.000000e+00> : vector<96x16xf32>
    %45 = tpu.matmul %12, %44, %cst_29 {dimension_numbers = #tpu.dot_dimension_numbers<[1], [0], [0], [1], [0, 0, 1, 1], [], []>} : vector<96x32xf32>, vector<32x16xf32>, vector<96x16xf32> -> vector<96x16xf32>
    %46 = vector.broadcast %14 : vector<96x1xf32> to vector<96x16xf32>
    %47 = arith.addf %45, %46 : vector<96x16xf32>
    %48 = vector.shape_cast %47 : vector<96x16xf32> to vector<3x4x8x16xf32>
    %49 = vector.extract_strided_slice %48 {offsets = [0, 0, 0, 0], sizes = [1, 4, 8, 16], strides = [1, 1, 1, 1]} : vector<3x4x8x16xf32> to vector<1x4x8x16xf32>
    %50 = vector.shape_cast %49 : vector<1x4x8x16xf32> to vector<4x8x16xf32>
    %51 = vector.extract_strided_slice %48 {offsets = [1, 0, 0, 0], sizes = [1, 4, 8, 16], strides = [1, 1, 1, 1]} : vector<3x4x8x16xf32> to vector<1x4x8x16xf32>
    %52 = vector.shape_cast %51 : vector<1x4x8x16xf32> to vector<4x8x16xf32>
    %53 = vector.extract_strided_slice %48 {offsets = [2, 0, 0, 0], sizes = [1, 4, 8, 16], strides = [1, 1, 1, 1]} : vector<3x4x8x16xf32> to vector<1x4x8x16xf32>
    %54 = vector.shape_cast %53 : vector<1x4x8x16xf32> to vector<4x8x16xf32>
    %55 = tpu.transpose %50, [0, 2, 1] : vector<4x8x16xf32> -> vector<4x16x8xf32>
    "tpu.trace_start"() <{level = 10 : i32, message = "hqd,hdk->hqk"}> : () -> ()
    %cst_30 = arith.constant dense<0.000000e+00> : vector<4x16x16xf32>
    %56 = tpu.matmul %55, %52, %cst_30 {dimension_numbers = #tpu.dot_dimension_numbers<[2], [1], [1], [2], [0, 0, 0, 1, 1, 2], [0], [0]>} : vector<4x16x8xf32>, vector<4x8x16xf32>, vector<4x16x16xf32> -> vector<4x16x16xf32>
    "tpu.trace_stop"() : () -> ()
    %cst_31 = arith.constant 0.353553385 : f32
    %57 = vector.broadcast %cst_31 : f32 to vector<4x16x16xf32>
    %58 = arith.mulf %56, %57 : vector<4x16x16xf32>
    %cst_32 = arith.constant 0.000000e+00 : f32
    %59 = vector.broadcast %cst_32 : f32 to vector<4x16x16xf32>
    %60 = arith.cmpf oeq, %4, %59 : vector<4x16x16xf32>
    %cst_33 = arith.constant -1.000000e+09 : f32
    %61 = vector.broadcast %cst_33 : f32 to vector<4x16x16xf32>
    %62 = arith.select %60, %61, %58 : vector<4x16x16xi1>, vector<4x16x16xf32>
    %cst_34 = arith.constant dense<0xFF800000> : vector<4x16xf32>
    %63 = vector.multi_reduction <maximumf>, %62, %cst_34 [2] : vector<4x16x16xf32> to vector<4x16xf32>
    %64 = vector.shape_cast %63 : vector<4x16xf32> to vector<4x16x1xf32>
    %65 = vector.broadcast %64 : vector<4x16x1xf32> to vector<4x16x16xf32>
    %66 = arith.subf %62, %65 : vector<4x16x16xf32>
    %67 = math.exp %66 : vector<4x16x16xf32>
    %cst_35 = arith.constant dense<0.000000e+00> : vector<4x16xf32>
    %68 = vector.multi_reduction <add>, %67, %cst_35 [2] : vector<4x16x16xf32> to vector<4x16xf32>
    %69 = vector.shape_cast %68 : vector<4x16xf32> to vector<4x16x1xf32>
    %70 = tpu.reciprocal %69 : vector<4x16x1xf32> -> vector<4x16x1xf32>
    %71 = vector.broadcast %70 : vector<4x16x1xf32> to vector<4x16x16xf32>
    %72 = arith.mulf %67, %71 : vector<4x16x16xf32>
    "tpu.trace_start"() <{level = 10 : i32, message = "hdk,hqk->hdq"}> : () -> ()
    %cst_36 = arith.constant dense<0.000000e+00> : vector<4x8x16xf32>
    %73 = tpu.matmul %54, %72, %cst_36 {dimension_numbers = #tpu.dot_dimension_numbers<[2], [2], [1], [1], [0, 0, 0, 1, 1, 1], [0], [0]>} : vector<4x8x16xf32>, vector<4x16x16xf32>, vector<4x8x16xf32> -> vector<4x8x16xf32>
    "tpu.trace_stop"() : () -> ()
    %74 = vector.shape_cast %73 : vector<4x8x16xf32> to vector<32x16xf32>
    %cst_37 = arith.constant dense<0.000000e+00> : vector<32x16xf32>
    %75 = tpu.matmul %16, %74, %cst_37 {dimension_numbers = #tpu.dot_dimension_numbers<[1], [0], [0], [1], [0, 0, 1, 1], [], []>} : vector<32x32xf32>, vector<32x16xf32>, vector<32x16xf32> -> vector<32x16xf32>
    %76 = vector.broadcast %18 : vector<32x1xf32> to vector<32x16xf32>
    %77 = arith.addf %75, %76 : vector<32x16xf32>
    %78 = tpu.transpose %77, [1, 0] : vector<32x16xf32> -> vector<16x32xf32>
    %79 = arith.addf %0, %78 : vector<16x32xf32>
    %cst_38 = arith.constant dense<0.000000e+00> : vector<16xf32>
    %80 = vector.multi_reduction <add>, %79, %cst_38 [1] : vector<16x32xf32> to vector<16xf32>
    %81 = vector.shape_cast %80 : vector<16xf32> to vector<16x1xf32>
    %cst_39 = arith.constant 3.200000e+01 : f32
    %82 = vector.broadcast %cst_39 : f32 to vector<16x1xf32>
    %83 = arith.divf %81, %82 : vector<16x1xf32>
    %84 = vector.broadcast %83 : vector<16x1xf32> to vector<16x32xf32>
    %85 = arith.subf %79, %84 : vector<16x32xf32>
    %86 = arith.mulf %85, %85 : vector<16x32xf32>
    %cst_40 = arith.constant dense<0.000000e+00> : vector<16xf32>
    %87 = vector.multi_reduction <add>, %86, %cst_40 [1] : vector<16x32xf32> to vector<16xf32>
    %88 = vector.shape_cast %87 : vector<16xf32> to vector<16x1xf32>
    %cst_41 = arith.constant 0.0322580636 : f32
    %89 = vector.broadcast %cst_41 : f32 to vector<16x1xf32>
    %90 = arith.mulf %88, %89 : vector<16x1xf32>
    %91 = math.sqrt %90 : vector<16x1xf32>
    %cst_42 = arith.constant 9.99999997E-7 : f32
    %92 = vector.broadcast %cst_42 : f32 to vector<16x1xf32>
    %93 = arith.addf %91, %92 : vector<16x1xf32>
    %94 = tpu.reciprocal %93 : vector<16x1xf32> -> vector<16x1xf32>
    %95 = vector.broadcast %7 : vector<1x32xf32> to vector<16x32xf32>
    %96 = arith.mulf %95, %85 : vector<16x32xf32>
    %97 = vector.broadcast %94 : vector<16x1xf32> to vector<16x32xf32>
    %98 = arith.mulf %96, %97 : vector<16x32xf32>
    %99 = vector.broadcast %8 : vector<1x32xf32> to vector<16x32xf32>
    %100 = arith.addf %98, %99 : vector<16x32xf32>
    %cst_43 = arith.constant dense<0.000000e+00> : vector<16x64xf32>
    %101 = tpu.matmul %100, %20, %cst_43 {dimension_numbers = #tpu.dot_dimension_numbers<[1], [0], [0], [1], [0, 0, 1, 1], [], []>} : vector<16x32xf32>, vector<32x64xf32>, vector<16x64xf32> -> vector<16x64xf32>
    %102 = vector.broadcast %9 : vector<1x64xf32> to vector<16x64xf32>
    %103 = arith.addf %101, %102 : vector<16x64xf32>
    %cst_44 = arith.constant 0.000000e+00 : f32
    %104 = vector.broadcast %cst_44 : f32 to vector<16x64xf32>
    %105 = arith.maximumf %103, %104 : vector<16x64xf32>
    %cst_45 = arith.constant dense<0.000000e+00> : vector<16x32xf32>
    %106 = tpu.matmul %105, %22, %cst_45 {dimension_numbers = #tpu.dot_dimension_numbers<[1], [0], [0], [1], [0, 0, 1, 1], [], []>} : vector<16x64xf32>, vector<64x32xf32>, vector<16x32xf32> -> vector<16x32xf32>
    %107 = arith.addf %79, %106 : vector<16x32xf32>
    %108 = vector.broadcast %10 : vector<1x32xf32> to vector<16x32xf32>
    %109 = arith.addf %107, %108 : vector<16x32xf32>
    %c6 = arith.constant 6 : index
    %c0_46 = arith.constant 0 : index
    %110 = vector.load %arg4[%c6, %c0_46] : memref<16x128xf32, #tpu.memory_space<vmem>>, vector<1x32xf32>
    %c7 = arith.constant 7 : index
    %c0_47 = arith.constant 0 : index
    %111 = vector.load %arg4[%c7, %c0_47] : memref<16x128xf32, #tpu.memory_space<vmem>>, vector<1x32xf32>
    %c8 = arith.constant 8 : index
    %c0_48 = arith.constant 0 : index
    %112 = vector.load %arg4[%c8, %c0_48] : memref<16x128xf32, #tpu.memory_space<vmem>>, vector<1x32xf32>
    %c9 = arith.constant 9 : index
    %c0_49 = arith.constant 0 : index
    %113 = vector.load %arg4[%c9, %c0_49] : memref<16x128xf32, #tpu.memory_space<vmem>>, vector<1x32xf32>
    %c10 = arith.constant 10 : index
    %c0_50 = arith.constant 0 : index
    %114 = vector.load %arg4[%c10, %c0_50] : memref<16x128xf32, #tpu.memory_space<vmem>>, vector<1x64xf32>
    %c11 = arith.constant 11 : index
    %c0_51 = arith.constant 0 : index
    %115 = vector.load %arg4[%c11, %c0_51] : memref<16x128xf32, #tpu.memory_space<vmem>>, vector<1x32xf32>
    %c1_52 = arith.constant 1 : index
    %c0_53 = arith.constant 0 : index
    %c0_54 = arith.constant 0 : index
    %116 = vector.load %arg3[%c1_52, %c0_53, %c0_54] : memref<2x128x192xf32, #tpu.memory_space<vmem>>, vector<1x96x32xf32>
    %117 = vector.shape_cast %116 : vector<1x96x32xf32> to vector<96x32xf32>
    %c1_55 = arith.constant 1 : index
    %c0_56 = arith.constant 0 : index
    %c32_57 = arith.constant 32 : index
    %118 = vector.load %arg3[%c1_55, %c0_56, %c32_57] : memref<2x128x192xf32, #tpu.memory_space<vmem>>, vector<1x96x1xf32>
    %119 = vector.shape_cast %118 : vector<1x96x1xf32> to vector<96x1xf32>
    %c1_58 = arith.constant 1 : index
    %c96_59 = arith.constant 96 : index
    %c0_60 = arith.constant 0 : index
    %120 = vector.load %arg3[%c1_58, %c96_59, %c0_60] : memref<2x128x192xf32, #tpu.memory_space<vmem>>, vector<1x32x32xf32>
    %121 = vector.shape_cast %120 : vector<1x32x32xf32> to vector<32x32xf32>
    %c1_61 = arith.constant 1 : index
    %c96_62 = arith.constant 96 : index
    %c32_63 = arith.constant 32 : index
    %122 = vector.load %arg3[%c1_61, %c96_62, %c32_63] : memref<2x128x192xf32, #tpu.memory_space<vmem>>, vector<1x32x1xf32>
    %123 = vector.shape_cast %122 : vector<1x32x1xf32> to vector<32x1xf32>
    %c1_64 = arith.constant 1 : index
    %c0_65 = arith.constant 0 : index
    %c128_66 = arith.constant 128 : index
    %124 = vector.load %arg3[%c1_64, %c0_65, %c128_66] : memref<2x128x192xf32, #tpu.memory_space<vmem>>, vector<1x32x64xf32>
    %125 = vector.shape_cast %124 : vector<1x32x64xf32> to vector<32x64xf32>
    %c1_67 = arith.constant 1 : index
    %c32_68 = arith.constant 32 : index
    %c128_69 = arith.constant 128 : index
    %126 = vector.load %arg3[%c1_67, %c32_68, %c128_69] : memref<2x128x192xf32, #tpu.memory_space<vmem>>, vector<1x64x32xf32>
    %127 = vector.shape_cast %126 : vector<1x64x32xf32> to vector<64x32xf32>
    %cst_70 = arith.constant dense<0.000000e+00> : vector<16xf32>
    %128 = vector.multi_reduction <add>, %109, %cst_70 [1] : vector<16x32xf32> to vector<16xf32>
    %129 = vector.shape_cast %128 : vector<16xf32> to vector<16x1xf32>
    %cst_71 = arith.constant 3.200000e+01 : f32
    %130 = vector.broadcast %cst_71 : f32 to vector<16x1xf32>
    %131 = arith.divf %129, %130 : vector<16x1xf32>
    %132 = vector.broadcast %131 : vector<16x1xf32> to vector<16x32xf32>
    %133 = arith.subf %109, %132 : vector<16x32xf32>
    %134 = arith.mulf %133, %133 : vector<16x32xf32>
    %cst_72 = arith.constant dense<0.000000e+00> : vector<16xf32>
    %135 = vector.multi_reduction <add>, %134, %cst_72 [1] : vector<16x32xf32> to vector<16xf32>
    %136 = vector.shape_cast %135 : vector<16xf32> to vector<16x1xf32>
    %cst_73 = arith.constant 0.0322580636 : f32
    %137 = vector.broadcast %cst_73 : f32 to vector<16x1xf32>
    %138 = arith.mulf %136, %137 : vector<16x1xf32>
    %139 = math.sqrt %138 : vector<16x1xf32>
    %cst_74 = arith.constant 9.99999997E-7 : f32
    %140 = vector.broadcast %cst_74 : f32 to vector<16x1xf32>
    %141 = arith.addf %139, %140 : vector<16x1xf32>
    %142 = tpu.reciprocal %141 : vector<16x1xf32> -> vector<16x1xf32>
    %143 = vector.broadcast %110 : vector<1x32xf32> to vector<16x32xf32>
    %144 = arith.mulf %143, %133 : vector<16x32xf32>
    %145 = vector.broadcast %142 : vector<16x1xf32> to vector<16x32xf32>
    %146 = arith.mulf %144, %145 : vector<16x32xf32>
    %147 = vector.broadcast %111 : vector<1x32xf32> to vector<16x32xf32>
    %148 = arith.addf %146, %147 : vector<16x32xf32>
    %149 = tpu.transpose %148, [1, 0] : vector<16x32xf32> -> vector<32x16xf32>
    %cst_75 = arith.constant dense<0.000000e+00> : vector<96x16xf32>
    %150 = tpu.matmul %117, %149, %cst_75 {dimension_numbers = #tpu.dot_dimension_numbers<[1], [0], [0], [1], [0, 0, 1, 1], [], []>} : vector<96x32xf32>, vector<32x16xf32>, vector<96x16xf32> -> vector<96x16xf32>
    %151 = vector.broadcast %119 : vector<96x1xf32> to vector<96x16xf32>
    %152 = arith.addf %150, %151 : vector<96x16xf32>
    %153 = vector.shape_cast %152 : vector<96x16xf32> to vector<3x4x8x16xf32>
    %154 = vector.extract_strided_slice %153 {offsets = [0, 0, 0, 0], sizes = [1, 4, 8, 16], strides = [1, 1, 1, 1]} : vector<3x4x8x16xf32> to vector<1x4x8x16xf32>
    %155 = vector.shape_cast %154 : vector<1x4x8x16xf32> to vector<4x8x16xf32>
    %156 = vector.extract_strided_slice %153 {offsets = [1, 0, 0, 0], sizes = [1, 4, 8, 16], strides = [1, 1, 1, 1]} : vector<3x4x8x16xf32> to vector<1x4x8x16xf32>
    %157 = vector.shape_cast %156 : vector<1x4x8x16xf32> to vector<4x8x16xf32>
    %158 = vector.extract_strided_slice %153 {offsets = [2, 0, 0, 0], sizes = [1, 4, 8, 16], strides = [1, 1, 1, 1]} : vector<3x4x8x16xf32> to vector<1x4x8x16xf32>
    %159 = vector.shape_cast %158 : vector<1x4x8x16xf32> to vector<4x8x16xf32>
    %160 = tpu.transpose %155, [0, 2, 1] : vector<4x8x16xf32> -> vector<4x16x8xf32>
    "tpu.trace_start"() <{level = 10 : i32, message = "hqd,hdk->hqk"}> : () -> ()
    %cst_76 = arith.constant dense<0.000000e+00> : vector<4x16x16xf32>
    %161 = tpu.matmul %160, %157, %cst_76 {dimension_numbers = #tpu.dot_dimension_numbers<[2], [1], [1], [2], [0, 0, 0, 1, 1, 2], [0], [0]>} : vector<4x16x8xf32>, vector<4x8x16xf32>, vector<4x16x16xf32> -> vector<4x16x16xf32>
    "tpu.trace_stop"() : () -> ()
    %cst_77 = arith.constant 0.353553385 : f32
    %162 = vector.broadcast %cst_77 : f32 to vector<4x16x16xf32>
    %163 = arith.mulf %161, %162 : vector<4x16x16xf32>
    %cst_78 = arith.constant 0.000000e+00 : f32
    %164 = vector.broadcast %cst_78 : f32 to vector<4x16x16xf32>
    %165 = arith.cmpf oeq, %4, %164 : vector<4x16x16xf32>
    %cst_79 = arith.constant -1.000000e+09 : f32
    %166 = vector.broadcast %cst_79 : f32 to vector<4x16x16xf32>
    %167 = arith.select %165, %166, %163 : vector<4x16x16xi1>, vector<4x16x16xf32>
    %cst_80 = arith.constant dense<0xFF800000> : vector<4x16xf32>
    %168 = vector.multi_reduction <maximumf>, %167, %cst_80 [2] : vector<4x16x16xf32> to vector<4x16xf32>
    %169 = vector.shape_cast %168 : vector<4x16xf32> to vector<4x16x1xf32>
    %170 = vector.broadcast %169 : vector<4x16x1xf32> to vector<4x16x16xf32>
    %171 = arith.subf %167, %170 : vector<4x16x16xf32>
    %172 = math.exp %171 : vector<4x16x16xf32>
    %cst_81 = arith.constant dense<0.000000e+00> : vector<4x16xf32>
    %173 = vector.multi_reduction <add>, %172, %cst_81 [2] : vector<4x16x16xf32> to vector<4x16xf32>
    %174 = vector.shape_cast %173 : vector<4x16xf32> to vector<4x16x1xf32>
    %175 = tpu.reciprocal %174 : vector<4x16x1xf32> -> vector<4x16x1xf32>
    %176 = vector.broadcast %175 : vector<4x16x1xf32> to vector<4x16x16xf32>
    %177 = arith.mulf %172, %176 : vector<4x16x16xf32>
    "tpu.trace_start"() <{level = 10 : i32, message = "hdk,hqk->hdq"}> : () -> ()
    %cst_82 = arith.constant dense<0.000000e+00> : vector<4x8x16xf32>
    %178 = tpu.matmul %159, %177, %cst_82 {dimension_numbers = #tpu.dot_dimension_numbers<[2], [2], [1], [1], [0, 0, 0, 1, 1, 1], [0], [0]>} : vector<4x8x16xf32>, vector<4x16x16xf32>, vector<4x8x16xf32> -> vector<4x8x16xf32>
    "tpu.trace_stop"() : () -> ()
    %179 = vector.shape_cast %178 : vector<4x8x16xf32> to vector<32x16xf32>
    %cst_83 = arith.constant dense<0.000000e+00> : vector<32x16xf32>
    %180 = tpu.matmul %121, %179, %cst_83 {dimension_numbers = #tpu.dot_dimension_numbers<[1], [0], [0], [1], [0, 0, 1, 1], [], []>} : vector<32x32xf32>, vector<32x16xf32>, vector<32x16xf32> -> vector<32x16xf32>
    %181 = vector.broadcast %123 : vector<32x1xf32> to vector<32x16xf32>
    %182 = arith.addf %180, %181 : vector<32x16xf32>
    %183 = tpu.transpose %182, [1, 0] : vector<32x16xf32> -> vector<16x32xf32>
    %184 = arith.addf %109, %183 : vector<16x32xf32>
    %cst_84 = arith.constant dense<0.000000e+00> : vector<16xf32>
    %185 = vector.multi_reduction <add>, %184, %cst_84 [1] : vector<16x32xf32> to vector<16xf32>
    %186 = vector.shape_cast %185 : vector<16xf32> to vector<16x1xf32>
    %cst_85 = arith.constant 3.200000e+01 : f32
    %187 = vector.broadcast %cst_85 : f32 to vector<16x1xf32>
    %188 = arith.divf %186, %187 : vector<16x1xf32>
    %189 = vector.broadcast %188 : vector<16x1xf32> to vector<16x32xf32>
    %190 = arith.subf %184, %189 : vector<16x32xf32>
    %191 = arith.mulf %190, %190 : vector<16x32xf32>
    %cst_86 = arith.constant dense<0.000000e+00> : vector<16xf32>
    %192 = vector.multi_reduction <add>, %191, %cst_86 [1] : vector<16x32xf32> to vector<16xf32>
    %193 = vector.shape_cast %192 : vector<16xf32> to vector<16x1xf32>
    %cst_87 = arith.constant 0.0322580636 : f32
    %194 = vector.broadcast %cst_87 : f32 to vector<16x1xf32>
    %195 = arith.mulf %193, %194 : vector<16x1xf32>
    %196 = math.sqrt %195 : vector<16x1xf32>
    %cst_88 = arith.constant 9.99999997E-7 : f32
    %197 = vector.broadcast %cst_88 : f32 to vector<16x1xf32>
    %198 = arith.addf %196, %197 : vector<16x1xf32>
    %199 = tpu.reciprocal %198 : vector<16x1xf32> -> vector<16x1xf32>
    %200 = vector.broadcast %112 : vector<1x32xf32> to vector<16x32xf32>
    %201 = arith.mulf %200, %190 : vector<16x32xf32>
    %202 = vector.broadcast %199 : vector<16x1xf32> to vector<16x32xf32>
    %203 = arith.mulf %201, %202 : vector<16x32xf32>
    %204 = vector.broadcast %113 : vector<1x32xf32> to vector<16x32xf32>
    %205 = arith.addf %203, %204 : vector<16x32xf32>
    %cst_89 = arith.constant dense<0.000000e+00> : vector<16x64xf32>
    %206 = tpu.matmul %205, %125, %cst_89 {dimension_numbers = #tpu.dot_dimension_numbers<[1], [0], [0], [1], [0, 0, 1, 1], [], []>} : vector<16x32xf32>, vector<32x64xf32>, vector<16x64xf32> -> vector<16x64xf32>
    %207 = vector.broadcast %114 : vector<1x64xf32> to vector<16x64xf32>
    %208 = arith.addf %206, %207 : vector<16x64xf32>
    %cst_90 = arith.constant 0.000000e+00 : f32
    %209 = vector.broadcast %cst_90 : f32 to vector<16x64xf32>
    %210 = arith.maximumf %208, %209 : vector<16x64xf32>
    %cst_91 = arith.constant dense<0.000000e+00> : vector<16x32xf32>
    %211 = tpu.matmul %210, %127, %cst_91 {dimension_numbers = #tpu.dot_dimension_numbers<[1], [0], [0], [1], [0, 0, 1, 1], [], []>} : vector<16x64xf32>, vector<64x32xf32>, vector<16x32xf32> -> vector<16x32xf32>
    %212 = arith.addf %184, %211 : vector<16x32xf32>
    %213 = vector.broadcast %115 : vector<1x32xf32> to vector<16x32xf32>
    %214 = arith.addf %212, %213 : vector<16x32xf32>
    %c12 = arith.constant 12 : index
    %c0_92 = arith.constant 0 : index
    %215 = vector.load %arg4[%c12, %c0_92] : memref<16x128xf32, #tpu.memory_space<vmem>>, vector<1x32xf32>
    %c13 = arith.constant 13 : index
    %c0_93 = arith.constant 0 : index
    %216 = vector.load %arg4[%c13, %c0_93] : memref<16x128xf32, #tpu.memory_space<vmem>>, vector<1x32xf32>
    %cst_94 = arith.constant dense<0.000000e+00> : vector<16xf32>
    %217 = vector.multi_reduction <add>, %214, %cst_94 [1] : vector<16x32xf32> to vector<16xf32>
    %218 = vector.shape_cast %217 : vector<16xf32> to vector<16x1xf32>
    %cst_95 = arith.constant 3.200000e+01 : f32
    %219 = vector.broadcast %cst_95 : f32 to vector<16x1xf32>
    %220 = arith.divf %218, %219 : vector<16x1xf32>
    %221 = vector.broadcast %220 : vector<16x1xf32> to vector<16x32xf32>
    %222 = arith.subf %214, %221 : vector<16x32xf32>
    %223 = arith.mulf %222, %222 : vector<16x32xf32>
    %cst_96 = arith.constant dense<0.000000e+00> : vector<16xf32>
    %224 = vector.multi_reduction <add>, %223, %cst_96 [1] : vector<16x32xf32> to vector<16xf32>
    %225 = vector.shape_cast %224 : vector<16xf32> to vector<16x1xf32>
    %cst_97 = arith.constant 0.0322580636 : f32
    %226 = vector.broadcast %cst_97 : f32 to vector<16x1xf32>
    %227 = arith.mulf %225, %226 : vector<16x1xf32>
    %228 = math.sqrt %227 : vector<16x1xf32>
    %cst_98 = arith.constant 9.99999997E-7 : f32
    %229 = vector.broadcast %cst_98 : f32 to vector<16x1xf32>
    %230 = arith.addf %228, %229 : vector<16x1xf32>
    %231 = tpu.reciprocal %230 : vector<16x1xf32> -> vector<16x1xf32>
    %232 = vector.broadcast %215 : vector<1x32xf32> to vector<16x32xf32>
    %233 = arith.mulf %232, %222 : vector<16x32xf32>
    %234 = vector.broadcast %231 : vector<16x1xf32> to vector<16x32xf32>
    %235 = arith.mulf %233, %234 : vector<16x32xf32>
    %236 = vector.broadcast %216 : vector<1x32xf32> to vector<16x32xf32>
    %237 = arith.addf %235, %236 : vector<16x32xf32>
    %c0_99 = arith.constant 0 : index
    %c0_100 = arith.constant 0 : index
    %238 = vector.load %arg5[%c0_99, %c0_100] : memref<16x32xf32, #tpu.memory_space<vmem>>, vector<16x32xf32>
    tpu.vector_store %arg5[%c0_99, %c0_100], %237 {strides = array<i32>} : memref<16x32xf32, #tpu.memory_space<vmem>>, vector<16x32xf32>,
    return
  }
  func.func @transform_0(%arg0: i32) -> (i32, i32) {
    %c0_i32 = arith.constant 0 : i32
    %c0_i32_0 = arith.constant 0 : i32
    %c0_i32_1 = arith.constant 0 : i32
    return %c0_i32, %c0_i32_0 : i32, i32
  }
  func.func @transform_1(%arg0: i32) -> (i32, i32) {
    %c0_i32 = arith.constant 0 : i32
    %c0_i32_0 = arith.constant 0 : i32
    %c0_i32_1 = arith.constant 0 : i32
    return %c0_i32, %c0_i32_0 : i32, i32
  }
  func.func @transform_2(%arg0: i32) -> (i32, i32, i32) {
    %c0_i32 = arith.constant 0 : i32
    %c0_i32_0 = arith.constant 0 : i32
    %c0_i32_1 = arith.constant 0 : i32
    %c0_i32_2 = arith.constant 0 : i32
    return %c0_i32, %c0_i32_0, %c0_i32_1 : i32, i32, i32
  }
  func.func @transform_3(%arg0: i32) -> (i32, i32) {
    %c0_i32 = arith.constant 0 : i32
    %c0_i32_0 = arith.constant 0 : i32
    %c0_i32_1 = arith.constant 0 : i32
    return %c0_i32, %c0_i32_0 : i32, i32
  }
  func.func @transform_4(%arg0: i32) -> (i32, i32) {
    %c0_i32 = arith.constant 0 : i32
    %c0_i32_0 = arith.constant 0 : i32
    %c0_i32_1 = arith.constant 0 : i32
    return %c0_i32, %c0_i32_0 : i32, i32
  }
}

</mosaic_0001>

<llo_original>
// kernel: tpu_custom_call.1
$region0: #{tpu_custom_call.1}
  #allocation0 [shape = 'u32[]', space=smem, size = 0x4, offset = 0x4, fixed_abs, tag = 'smem constant byte address 0x4 - core index']
  #allocation1 [shape = 'u32[144,128]{1,0:T(1,128)}', space=vmem, size = 0x12000, scoped, tag = 'internal scratch']
  %s0 = inlined_call_operand.vmem [shape: f32[16,32], index: 0, kind: input, shape index: {}]
  %s1 = inlined_call_operand.vmem [shape: f32[16,16], index: 1, kind: input, shape index: {}]
  %s2 = inlined_call_operand.vmem [shape: f32[2,128,192], index: 2, kind: input, shape index: {}]
  %s3 = inlined_call_operand.vmem [shape: f32[16,128], index: 3, kind: input, shape index: {}]
  %s4 = inlined_call_operand.hbm [shape: f32[16,32], index: 4, kind: output, shape index: {}]
  %s5 = sld [smem:[#allocation0]]
  $region26: #{tpu_custom_call.1} parent=0
    _
  %s7 = ssub.s32 1, %s5
  %s8 = scalar_select 0, %s7, %s5
  $region1: #{tpu_custom_call.1} parent=0
    #allocation2 [shape = 'u8[8192]{0}', space=vmem, size = 0x2000, scoped, tag = 'output window, operand 0, single buffered']
    #allocation3 [shape = 's32[1]{0}', space=sflag, size = 0x4, scoped, tag = 'scoped memory for tpu_custom_call.1']
    %9 = vsyncpa [#allocation3], 0
    // Predicated region
    $region2: #{tpu_custom_call.1} parent=1 // pred_check
      _
    $region3: #{tpu_custom_call.1} parent=1 // pred_check_branch
      %11 = sbr.rel (0) target = $region5
    $region4: #{tpu_custom_call.1} parent=1 // pred_region
      _
    $region5: #{tpu_custom_call.1} parent=1 // pred_fallthru
      _
    // Predicated region
    $region6: #{tpu_custom_call.1} parent=1 // pred_check
      _
    $region7: #{tpu_custom_call.1} parent=1 // pred_check_branch
      %13 = sbr.rel (0) target = $region9
    $region8: #{tpu_custom_call.1} parent=1 // pred_region
      _
    $region9: #{tpu_custom_call.1} parent=1 // pred_fallthru
      _
    // Predicated region
    $region10: #{tpu_custom_call.1} parent=1 // pred_check
      _
    $region11: #{tpu_custom_call.1} parent=1 // pred_check_branch
      %15 = sbr.rel (0) target = $region13
    $region12: #{tpu_custom_call.1} parent=1 // pred_region
      _
    $region13: #{tpu_custom_call.1} parent=1 // pred_fallthru
      _
    // Predicated region
    $region14: #{tpu_custom_call.1} parent=1 // pred_check
      _
    $region15: #{tpu_custom_call.1} parent=1 // pred_check_branch
      %17 = sbr.rel (0) target = $region17
    $region16: #{tpu_custom_call.1} parent=1 // pred_region
      _
    $region17: #{tpu_custom_call.1} parent=1 // pred_fallthru
      _
    %v18 = vld [vmem:[%s0] sm:$0xff]
    %v19 = vld [vmem:[%s0 + $0x8] sm:$0xff]
    %v20 = vld [vmem:[%s1] sm:$0xff]
    %v21 = vld [vmem:[%s1 + $0x8] sm:$0xff]
    %v22 = vld [vmem:[%s3] sm:$0x1]
    %v23 = vld [vmem:[%s3 + $0x1] sm:$0x1]
    %v24 = vld [vmem:[%s3 + $0x2] sm:$0x1]
    %v25 = vld [vmem:[%s3 + $0x3] sm:$0x1]
    %v26 = vld [vmem:[%s3 + $0x4] sm:$0x1]
    %v27 = vld [vmem:[%s3 + $0x5] sm:$0x1]
    %v28 = vld [vmem:[%s2] sm:$0xff]
    %v29 = vld [vmem:[%s2 + $0x10] sm:$0xff]
    %v30 = vld [vmem:[%s2 + $0x20] sm:$0xff]
    %v31 = vld [vmem:[%s2 + $0x30] sm:$0xff]
    %v32 = vld [vmem:[%s2 + $0x40] sm:$0xff]
    %v33 = vld [vmem:[%s2 + $0x50] sm:$0xff]
    %v34 = vld [vmem:[%s2 + $0x60] sm:$0xff]
    %v35 = vld [vmem:[%s2 + $0x70] sm:$0xff]
    %v36 = vld [vmem:[%s2 + $0x80] sm:$0xff]
    %v37 = vld [vmem:[%s2 + $0x90] sm:$0xff]
    %v38 = vld [vmem:[%s2 + $0xa0] sm:$0xff]
    %v39 = vld [vmem:[%s2 + $0xb0] sm:$0xff]
    %v40 = vld [vmem:[%s2 + $0xc0] sm:$0xff]
    %v41 = vld [vmem:[%s2 + $0xd0] sm:$0xff]
    %v42 = vld [vmem:[%s2 + $0xe0] sm:$0xff]
    %v43 = vld [vmem:[%s2 + $0xf0] sm:$0xff]
    %v44 = vld [vmem:[%s2 + $0x8] sm:$0xff]
    %v45 = vld [vmem:[%s2 + $0x18] sm:$0xff]
    %v46 = vld [vmem:[%s2 + $0x28] sm:$0xff]
    %v47 = vld [vmem:[%s2 + $0x38] sm:$0xff]
    %v48 = vld [vmem:[%s2 + $0x48] sm:$0xff]
    %v49 = vld [vmem:[%s2 + $0x58] sm:$0xff]
    %v50 = vld [vmem:[%s2 + $0x68] sm:$0xff]
    %v51 = vld [vmem:[%s2 + $0x78] sm:$0xff]
    %v52 = vld [vmem:[%s2 + $0x88] sm:$0xff]
    %v53 = vld [vmem:[%s2 + $0x98] sm:$0xff]
    %v54 = vld [vmem:[%s2 + $0xa8] sm:$0xff]
    %v55 = vld [vmem:[%s2 + $0xb8] sm:$0xff]
    %vm56 = vcmask 261120
    %v57 = vsel %vm56, %v18, 0.0
    %58 = vadd.xlane.f32.xlu0 %v57
    %v59 = vpop.xlane.xlu0 %58
    %v60 = vsel %vm56, %v19, 0.0
    %61 = vadd.xlane.f32.xlu0 %v60
    %v62 = vpop.xlane.xlu0 %61
    %v63 = vrcp.pop 32.0
    %v64 = vmul.f32 %v59, %v63
    %v65 = vmul.f32 %v62, %v63
    %v66 = vsub.f32 %v18, %v64
    %v67 = vsub.f32 %v19, %v65
    %v68 = vmul.f32 %v66, %v66
    %v69 = vmul.f32 %v67, %v67
    %v70 = vsel %vm56, %v68, 0.0
    %71 = vadd.xlane.f32.xlu0 %v70
    %v72 = vpop.xlane.xlu0 %71
    %v73 = vsel %vm56, %v69, 0.0
    %74 = vadd.xlane.f32.xlu0 %v73
    %v75 = vpop.xlane.xlu0 %74
    %v76 = vmul.f32 %v72, 0.032258064
    %v77 = vmul.f32 %v75, 0.032258064
    %v78 = vrsqrt.pop %v76
    %v79 = vmul.f32 %v76, %v78
    %vm80 = vcmp.eq.f32.partialorder %v76, inf
    %v81 = vsel %vm80, %v76, %v79
    %vm82 = vcmp.eq.f32.partialorder %v76, 0.0
    %v83 = vand.u32 %v76, 2147483648
    %v84 = vsel %vm82, %v83, %v81
    %v85 = vrsqrt.pop %v77
    %v86 = vmul.f32 %v77, %v85
    %vm87 = vcmp.eq.f32.partialorder %v77, inf
    %v88 = vsel %vm87, %v77, %v86
    %vm89 = vcmp.eq.f32.partialorder %v77, 0.0
    %v90 = vand.u32 %v77, 2147483648
    %v91 = vsel %vm89, %v90, %v88
    %v92 = vadd.f32 %v84, 1e-06
    %v93 = vadd.f32 %v91, 1e-06
    %v94 = vrcp.pop %v92
    %v95 = vrcp.pop %v93
    %v96 = vlaneseq
    %v97 = vshrl.u32 %v96, 7
    %v98 = vsub.s32 0, %v97
    %v99 = vrot.slane %v22, %v98
    %v100 = vmul.f32 %v99, %v66
    %v101 = vmul.f32 %v99, %v67
    %v102 = vmul.f32 %v100, %v94
    %v103 = vmul.f32 %v101, %v95
    %v104 = vlaneseq
    %v105 = vshrl.u32 %v104, 7
    %v106 = vsub.s32 0, %v105
    %v107 = vrot.slane %v23, %v106
    %v108 = vadd.f32 %v102, %v107
    %v109 = vadd.f32 %v103, %v107
    %111 = vset.pattern.permute.xlu0 32
    %112 = vperm.xlu0 %111, %v28
    %v113 = vpop.permute.xlu0 %112
    %116 = vset.pattern.permute.xlu0 32
    %117 = vperm.xlu0 %116, %v29
    %v118 = vpop.permute.xlu0 %117
    %121 = vset.pattern.permute.xlu0 32
    %122 = vperm.xlu0 %121, %v30
    %v123 = vpop.permute.xlu0 %122
    %126 = vset.pattern.permute.xlu0 32
    %127 = vperm.xlu0 %126, %v31
    %v128 = vpop.permute.xlu0 %127
    %131 = vset.pattern.permute.xlu0 32
    %132 = vperm.xlu0 %131, %v32
    %v133 = vpop.permute.xlu0 %132
    %136 = vset.pattern.permute.xlu0 32
    %137 = vperm.xlu0 %136, %v33
    %v138 = vpop.permute.xlu0 %137
    %141 = vset.pattern.permute.xlu0 32
    %142 = vperm.xlu0 %141, %v34
    %v143 = vpop.permute.xlu0 %142
    %146 = vset.pattern.permute.xlu0 32
    %147 = vperm.xlu0 %146, %v35
    %v148 = vpop.permute.xlu0 %147
    %151 = vset.pattern.permute.xlu0 32
    %152 = vperm.xlu0 %151, %v36
    %v153 = vpop.permute.xlu0 %152
    %156 = vset.pattern.permute.xlu0 32
    %157 = vperm.xlu0 %156, %v37
    %v158 = vpop.permute.xlu0 %157
    %161 = vset.pattern.permute.xlu0 32
    %162 = vperm.xlu0 %161, %v38
    %v163 = vpop.permute.xlu0 %162
    %166 = vset.pattern.permute.xlu0 32
    %167 = vperm.xlu0 %166, %v39
    %v168 = vpop.permute.xlu0 %167
    %v170 = vsel %vm56, %v28, 0
    %v172 = vsel %vm56, %v29, 0
    %v174 = vsel %vm56, %v30, 0
    %v176 = vsel %vm56, %v31, 0
    %v178 = vsel %vm56, %v32, 0
    %v180 = vsel %vm56, %v33, 0
    %v182 = vsel %vm56, %v34, 0
    %v184 = vsel %vm56, %v35, 0
    %v186 = vsel %vm56, %v36, 0
    %v188 = vsel %vm56, %v37, 0
    %v190 = vsel %vm56, %v38, 0
    %v192 = vsel %vm56, %v39, 0
    %v195 = vsel %vm56, %v108, 0
    %v198 = vsel %vm56, %v109, 0
    %200 = vmatprep.subr.mxu0 0.0
    %201 = vmatpush1.xpose.msra.mxu0 %v195
    %202 = vmatprep.subr.mxu0 0.0
    %203 = vmatpush1.xpose.msra.mxu0 %v198
    %204 = vmatprep.subr.mxu0 0.0
    %205 = vmatpush1.xpose.msra.mxu0 0.0
    %206 = vmatprep.subr.mxu0 0.0
    %207 = vmatpush1.xpose.msra.mxu0 0.0
    %208 = vmatprep.subr.mxu0 0.0
    %209 = vmatpush1.xpose.msra.mxu0 0.0
    %210 = vmatprep.subr.mxu0 0.0
    %211 = vmatpush1.xpose.msra.mxu0 0.0
    %212 = vmatprep.subr.mxu0 0.0
    %213 = vmatpush1.xpose.msra.mxu0 0.0
    %214 = vmatprep.subr.mxu0 0.0
    %215 = vmatpush1.xpose.msra.mxu0 0.0
    %216 = vmatprep.subr.mxu0 0.0
    %217 = vmatpush1.xpose.msra.mxu0 0.0
    %218 = vmatprep.subr.mxu0 0.0
    %219 = vmatpush1.xpose.msra.mxu0 0.0
    %220 = vmatprep.subr.mxu0 0.0
    %221 = vmatpush1.xpose.msra.mxu0 0.0
    %222 = vmatprep.subr.mxu0 0.0
    %223 = vmatpush1.xpose.msra.mxu0 0.0
    %224 = vmatprep.subr.mxu0 0.0
    %225 = vmatpush1.xpose.msra.mxu0 0.0
    %226 = vmatprep.subr.mxu0 0.0
    %227 = vmatpush1.xpose.msra.mxu0 0.0
    %228 = vmatprep.subr.mxu0 0.0
    %229 = vmatpush1.xpose.msra.mxu0 0.0
    %230 = vmatprep.subr.mxu0 0.0
    %231 = vmatpush1.xpose.msra.mxu0 0.0
    %232 = vmatprep.subr.mxu0 0.0
    %233 = vmatpush1.xpose.msra.mxu0 0.0
    %234 = vmatprep.subr.mxu0 0.0
    %235 = vmatpush1.xpose.msra.mxu0 0.0
    %236 = vmatprep.subr.mxu0 0.0
    %237 = vmatpush1.xpose.msra.mxu0 0.0
    %238 = vmatprep.subr.mxu0 0.0
    %239 = vmatpush1.xpose.msra.mxu0 0.0
    %240 = vmatprep.subr.mxu0 0.0
    %241 = vmatpush1.xpose.msra.mxu0 0.0
    %242 = vmatprep.subr.mxu0 0.0
    %243 = vmatpush1.xpose.msra.mxu0 0.0
    %244 = vmatprep.subr.mxu0 0.0
    %245 = vmatpush1.xpose.msra.mxu0 0.0
    %246 = vmatprep.subr.mxu0 0.0
    %247 = vmatpush1.xpose.msra.mxu0 0.0
    %248 = vmatprep.subr.mxu0 0.0
    %249 = vmatpush1.xpose.msra.mxu0 0.0
    %250 = vmatprep.subr.mxu0 0.0
    %251 = vmatpush1.xpose.msra.mxu0 0.0
    %252 = vmatprep.subr.mxu0 0.0
    %253 = vmatpush1.xpose.msra.mxu0 0.0
    %254 = vmatprep.subr.mxu0 0.0
    %255 = vmatpush1.xpose.msra.mxu0 0.0
    %256 = vmatprep.subr.mxu0 0.0
    %257 = vmatpush1.xpose.msra.mxu0 0.0
    %258 = vmatprep.subr.mxu0 0.0
    %259 = vmatpush1.xpose.msra.mxu0 0.0
    %260 = vmatprep.subr.mxu0 0.0
    %261 = vmatpush1.xpose.msra.mxu0 0.0
    %262 = vmatprep.subr.mxu0 0.0
    %263 = vmatpush1.xpose.msra.mxu0 0.0
    %264 = vmatprep.mubr.f32.mxu0 0.0
    %265 = vmatmul.mubr.f32.gmra.mrb[0].mxu0 %v170
    %v266 = vpop.f32.mrb[0].mxu0
    %v267 = vadd.f32 %v113, %v266
    %v268 = vpop.f32.mrb[0].mxu0
    %269 = vmatprep.mubr.f32.mxu0 0.0
    %270 = vmatmul.mubr.f32.gmra.mrb[0].mxu0 %v172
    %v271 = vpop.f32.mrb[0].mxu0
    %v272 = vadd.f32 %v118, %v271
    %v273 = vpop.f32.mrb[0].mxu0
    %274 = vmatprep.mubr.f32.mxu0 0.0
    %275 = vmatmul.mubr.f32.gmra.mrb[0].mxu0 %v174
    %v276 = vpop.f32.mrb[0].mxu0
    %v277 = vadd.f32 %v123, %v276
    %v278 = vpop.f32.mrb[0].mxu0
    %279 = vmatprep.mubr.f32.mxu0 0.0
    %280 = vmatmul.mubr.f32.gmra.mrb[0].mxu0 %v176
    %v281 = vpop.f32.mrb[0].mxu0
    %v282 = vadd.f32 %v128, %v281
    %v283 = vpop.f32.mrb[0].mxu0
    %284 = vmatprep.mubr.f32.mxu0 0.0
    %285 = vmatmul.mubr.f32.gmra.mrb[0].mxu0 %v178
    %v286 = vpop.f32.mrb[0].mxu0
    %v287 = vadd.f32 %v133, %v286
    %v288 = vpop.f32.mrb[0].mxu0
    %289 = vmatprep.mubr.f32.mxu0 0.0
    %290 = vmatmul.mubr.f32.gmra.mrb[0].mxu0 %v180
    %v291 = vpop.f32.mrb[0].mxu0
    %v292 = vadd.f32 %v138, %v291
    %v293 = vpop.f32.mrb[0].mxu0
    %294 = vmatprep.mubr.f32.mxu0 0.0
    %295 = vmatmul.mubr.f32.gmra.mrb[0].mxu0 %v182
    %v296 = vpop.f32.mrb[0].mxu0
    %v297 = vadd.f32 %v143, %v296
    %v298 = vpop.f32.mrb[0].mxu0
    %299 = vmatprep.mubr.f32.mxu0 0.0
    %300 = vmatmul.mubr.f32.gmra.mrb[0].mxu0 %v184
    %v301 = vpop.f32.mrb[0].mxu0
    %v302 = vadd.f32 %v148, %v301
    %v303 = vpop.f32.mrb[0].mxu0
    %304 = vmatprep.mubr.f32.mxu0 0.0
    %305 = vmatmul.mubr.f32.gmra.mrb[0].mxu0 %v186
    %v306 = vpop.f32.mrb[0].mxu0
    %v307 = vadd.f32 %v153, %v306
    %v308 = vpop.f32.mrb[0].mxu0
    %309 = vmatprep.mubr.f32.mxu0 0.0
    %310 = vmatmul.mubr.f32.gmra.mrb[0].mxu0 %v188
    %v311 = vpop.f32.mrb[0].mxu0
    %v312 = vadd.f32 %v158, %v311
    %v313 = vpop.f32.mrb[0].mxu0
    %314 = vmatprep.mubr.f32.mxu0 0.0
    %315 = vmatmul.mubr.f32.gmra.mrb[0].mxu0 %v190
    %v316 = vpop.f32.mrb[0].mxu0
    %v317 = vadd.f32 %v163, %v316
    %v318 = vpop.f32.mrb[0].mxu0
    %319 = vmatprep.mubr.f32.mxu0 0.0
    %320 = vmatmul.mubr.f32.gmra.mrb[0].mxu0 %v192
    %v321 = vpop.f32.mrb[0].mxu0
    %v322 = vadd.f32 %v168, %v321
    %v323 = vpop.f32.mrb[0].mxu0
    %324 = vdwg.mxu0
    %325 = vxpose.xlu0.b32.start [1/16] %v267, 128
    %326 = vxpose.xlu0.b32.cont [2/16] 0.0, 128
    %327 = vxpose.xlu0.b32.cont [3/16] 0.0, 128
    %328 = vxpose.xlu0.b32.cont [4/16] 0.0, 128
    %329 = vxpose.xlu0.b32.cont [5/16] 0.0, 128
    %330 = vxpose.xlu0.b32.cont [6/16] 0.0, 128
    %331 = vxpose.xlu0.b32.cont [7/16] 0.0, 128
    %332 = vxpose.xlu0.b32.cont [8/16] 0.0, 128
    %333 = vxpose.xlu0.b32.cont [9/16] 0.0, 128
    %334 = vxpose.xlu0.b32.cont [10/16] 0.0, 128
    %335 = vxpose.xlu0.b32.cont [11/16] 0.0, 128
    %336 = vxpose.xlu0.b32.cont [12/16] 0.0, 128
    %337 = vxpose.xlu0.b32.cont [13/16] 0.0, 128
    %338 = vxpose.xlu0.b32.cont [14/16] 0.0, 128
    %339 = vxpose.xlu0.b32.cont [15/16] 0.0, 128
    %340 = vxpose.xlu0.b32.end [16/16] 0.0, 128
    %v341 = vpop.trf.xlu0
    %v342 = vpop.trf.xlu0
    %v343 = vpop.trf.xlu0
    %v344 = vpop.trf.xlu0
    %v345 = vpop.trf.xlu0
    %v346 = vpop.trf.xlu0
    %v347 = vpop.trf.xlu0
    %v348 = vpop.trf.xlu0
    %v349 = vpop.trf.xlu0
    %v350 = vpop.trf.xlu0
    %v351 = vpop.trf.xlu0
    %v352 = vpop.trf.xlu0
    %v353 = vpop.trf.xlu0
    %v354 = vpop.trf.xlu0
    %v355 = vpop.trf.xlu0
    %v356 = vpop.trf.xlu0
    %357 = vxpose.xlu0.b32.start [1/16] %v272, 128
    %358 = vxpose.xlu0.b32.cont [2/16] 0.0, 128
    %359 = vxpose.xlu0.b32.cont [3/16] 0.0, 128
    %360 = vxpose.xlu0.b32.cont [4/16] 0.0, 128
    %361 = vxpose.xlu0.b32.cont [5/16] 0.0, 128
    %362 = vxpose.xlu0.b32.cont [6/16] 0.0, 128
    %363 = vxpose.xlu0.b32.cont [7/16] 0.0, 128
    %364 = vxpose.xlu0.b32.cont [8/16] 0.0, 128
    %365 = vxpose.xlu0.b32.cont [9/16] 0.0, 128
    %366 = vxpose.xlu0.b32.cont [10/16] 0.0, 128
    %367 = vxpose.xlu0.b32.cont [11/16] 0.0, 128
    %368 = vxpose.xlu0.b32.cont [12/16] 0.0, 128
    %369 = vxpose.xlu0.b32.cont [13/16] 0.0, 128
    %370 = vxpose.xlu0.b32.cont [14/16] 0.0, 128
    %371 = vxpose.xlu0.b32.cont [15/16] 0.0, 128
    %372 = vxpose.xlu0.b32.end [16/16] 0.0, 128
    %v373 = vpop.trf.xlu0
    %v374 = vpop.trf.xlu0
    %v375 = vpop.trf.xlu0
    %v376 = vpop.trf.xlu0
    %v377 = vpop.trf.xlu0
    %v378 = vpop.trf.xlu0
    %v379 = vpop.trf.xlu0
    %v380 = vpop.trf.xlu0
    %v381 = vpop.trf.xlu0
    %v382 = vpop.trf.xlu0
    %v383 = vpop.trf.xlu0
    %v384 = vpop.trf.xlu0
    %v385 = vpop.trf.xlu0
    %v386 = vpop.trf.xlu0
    %v387 = vpop.trf.xlu0
    %v388 = vpop.trf.xlu0
    %389 = vxpose.xlu0.b32.start [1/16] %v277, 128
    %390 = vxpose.xlu0.b32.cont [2/16] 0.0, 128
    %391 = vxpose.xlu0.b32.cont [3/16] 0.0, 128
    %392 = vxpose.xlu0.b32.cont [4/16] 0.0, 128
    %393 = vxpose.xlu0.b32.cont [5/16] 0.0, 128
    %394 = vxpose.xlu0.b32.cont [6/16] 0.0, 128
    %395 = vxpose.xlu0.b32.cont [7/16] 0.0, 128
    %396 = vxpose.xlu0.b32.cont [8/16] 0.0, 128
    %397 = vxpose.xlu0.b32.cont [9/16] 0.0, 128
    %398 = vxpose.xlu0.b32.cont [10/16] 0.0, 128
    %399 = vxpose.xlu0.b32.cont [11/16] 0.0, 128
    %400 = vxpose.xlu0.b32.cont [12/16] 0.0, 128
    %401 = vxpose.xlu0.b32.cont [13/16] 0.0, 128
    %402 = vxpose.xlu0.b32.cont [14/16] 0.0, 128
    %403 = vxpose.xlu0.b32.cont [15/16] 0.0, 128
    %404 = vxpose.xlu0.b32.end [16/16] 0.0, 128
    %v405 = vpop.trf.xlu0
    %v406 = vpop.trf.xlu0
    %v407 = vpop.trf.xlu0
    %v408 = vpop.trf.xlu0
    %v409 = vpop.trf.xlu0
    %v410 = vpop.trf.xlu0
    %v411 = vpop.trf.xlu0
    %v412 = vpop.trf.xlu0
    %v413 = vpop.trf.xlu0
    %v414 = vpop.trf.xlu0
    %v415 = vpop.trf.xlu0
    %v416 = vpop.trf.xlu0
    %v417 = vpop.trf.xlu0
    %v418 = vpop.trf.xlu0
    %v419 = vpop.trf.xlu0
    %v420 = vpop.trf.xlu0
    %421 = vxpose.xlu0.b32.start [1/16] %v282, 128
    %422 = vxpose.xlu0.b32.cont [2/16] 0.0, 128
    %423 = vxpose.xlu0.b32.cont [3/16] 0.0, 128
    %424 = vxpose.xlu0.b32.cont [4/16] 0.0, 128
    %425 = vxpose.xlu0.b32.cont [5/16] 0.0, 128
    %426 = vxpose.xlu0.b32.cont [6/16] 0.0, 128
    %427 = vxpose.xlu0.b32.cont [7/16] 0.0, 128
    %428 = vxpose.xlu0.b32.cont [8/16] 0.0, 128
    %429 = vxpose.xlu0.b32.cont [9/16] 0.0, 128
    %430 = vxpose.xlu0.b32.cont [10/16] 0.0, 128
    %431 = vxpose.xlu0.b32.cont [11/16] 0.0, 128
    %432 = vxpose.xlu0.b32.cont [12/16] 0.0, 128
    %433 = vxpose.xlu0.b32.cont [13/16] 0.0, 128
    %434 = vxpose.xlu0.b32.cont [14/16] 0.0, 128
    %435 = vxpose.xlu0.b32.cont [15/16] 0.0, 128
    %436 = vxpose.xlu0.b32.end [16/16] 0.0, 128
    %v437 = vpop.trf.xlu0
    %v438 = vpop.trf.xlu0
    %v439 = vpop.trf.xlu0
    %v440 = vpop.trf.xlu0
    %v441 = vpop.trf.xlu0
    %v442 = vpop.trf.xlu0
    %v443 = vpop.trf.xlu0
    %v444 = vpop.trf.xlu0
    %v445 = vpop.trf.xlu0
    %v446 = vpop.trf.xlu0
    %v447 = vpop.trf.xlu0
    %v448 = vpop.trf.xlu0
    %v449 = vpop.trf.xlu0
    %v450 = vpop.trf.xlu0
    %v451 = vpop.trf.xlu0
    %v452 = vpop.trf.xlu0
    %vm453 = vcmask 64512
    %v455 = vsel %vm453, %v341, 0
    %v458 = vsel %vm453, %v342, 0
    %460 = vmatprep.subr.mxu0 0.0
    %461 = vmatpush1.msra.mxu0 %v287
    %462 = vmatprep.subr.mxu0 0.0
    %463 = vmatpush1.msra.mxu0 0.0
    %464 = vmatprep.subr.mxu0 0.0
    %465 = vmatpush1.msra.mxu0 0.0
    %466 = vmatprep.subr.mxu0 0.0
    %467 = vmatpush1.msra.mxu0 0.0
    %468 = vmatprep.subr.mxu0 0.0
    %469 = vmatpush1.msra.mxu0 0.0
    %470 = vmatprep.subr.mxu0 0.0
    %471 = vmatpush1.msra.mxu0 0.0
    %472 = vmatprep.subr.mxu0 0.0
    %473 = vmatpush1.msra.mxu0 0.0
    %474 = vmatprep.subr.mxu0 0.0
    %475 = vmatpush1.msra.mxu0 0.0
    %476 = vmatprep.subr.mxu0 0.0
    %477 = vmatpush1.msra.mxu0 0.0
    %478 = vmatprep.subr.mxu0 0.0
    %479 = vmatpush1.msra.mxu0 0.0
    %480 = vmatprep.subr.mxu0 0.0
    %481 = vmatpush1.msra.mxu0 0.0
    %482 = vmatprep.subr.mxu0 0.0
    %483 = vmatpush1.msra.mxu0 0.0
    %484 = vmatprep.subr.mxu0 0.0
    %485 = vmatpush1.msra.mxu0 0.0
    %486 = vmatprep.subr.mxu0 0.0
    %487 = vmatpush1.msra.mxu0 0.0
    %488 = vmatprep.subr.mxu0 0.0
    %489 = vmatpush1.msra.mxu0 0.0
    %490 = vmatprep.subr.mxu0 0.0
    %491 = vmatpush1.msra.mxu0 0.0
    %492 = vmatprep.subr.mxu0 0.0
    %493 = vmatpush1.msra.mxu0 0.0
    %494 = vmatprep.subr.mxu0 0.0
    %495 = vmatpush1.msra.mxu0 0.0
    %496 = vmatprep.subr.mxu0 0.0
    %497 = vmatpush1.msra.mxu0 0.0
    %498 = vmatprep.subr.mxu0 0.0
    %499 = vmatpush1.msra.mxu0 0.0
    %500 = vmatprep.subr.mxu0 0.0
    %501 = vmatpush1.msra.mxu0 0.0
    %502 = vmatprep.subr.mxu0 0.0
    %503 = vmatpush1.msra.mxu0 0.0
    %504 = vmatprep.subr.mxu0 0.0
    %505 = vmatpush1.msra.mxu0 0.0
    %506 = vmatprep.subr.mxu0 0.0
    %507 = vmatpush1.msra.mxu0 0.0
    %508 = vmatprep.subr.mxu0 0.0
    %509 = vmatpush1.msra.mxu0 0.0
    %510 = vmatprep.subr.mxu0 0.0
    %511 = vmatpush1.msra.mxu0 0.0
    %512 = vmatprep.subr.mxu0 0.0
    %513 = vmatpush1.msra.mxu0 0.0
    %514 = vmatprep.subr.mxu0 0.0
    %515 = vmatpush1.msra.mxu0 0.0
    %516 = vmatprep.subr.mxu0 0.0
    %517 = vmatpush1.msra.mxu0 0.0
    %518 = vmatprep.subr.mxu0 0.0
    %519 = vmatpush1.msra.mxu0 0.0
    %520 = vmatprep.subr.mxu0 0.0
    %521 = vmatpush1.msra.mxu0 0.0
    %522 = vmatprep.subr.mxu0 0.0
    %523 = vmatpush1.msra.mxu0 0.0
    %524 = vmatprep.mubr.f32.mxu0 0.0
    %525 = vmatmul.mubr.f32.gmra.mrb[0].mxu0 %v455
    %v526 = vpop.f32.mrb[0].mxu0
    %v527 = vadd.f32 0.0, %v526
    %v528 = vpop.f32.mrb[0].mxu0
    %529 = vmatprep.mubr.f32.mxu0 0.0
    %530 = vmatmul.mubr.f32.gmra.mrb[0].mxu0 %v458
    %v531 = vpop.f32.mrb[0].mxu0
    %v532 = vadd.f32 0.0, %v531
    %v533 = vpop.f32.mrb[0].mxu0
    %534 = vdwg.mxu0
    %v536 = vsel %vm453, %v373, 0
    %v539 = vsel %vm453, %v374, 0
    %541 = vmatprep.subr.mxu0 0.0
    %542 = vmatpush1.msra.mxu0 %v292
    %543 = vmatprep.subr.mxu0 0.0
    %544 = vmatpush1.msra.mxu0 0.0
    %545 = vmatprep.subr.mxu0 0.0
    %546 = vmatpush1.msra.mxu0 0.0
    %547 = vmatprep.subr.mxu0 0.0
    %548 = vmatpush1.msra.mxu0 0.0
    %549 = vmatprep.subr.mxu0 0.0
    %550 = vmatpush1.msra.mxu0 0.0
    %551 = vmatprep.subr.mxu0 0.0
    %552 = vmatpush1.msra.mxu0 0.0
    %553 = vmatprep.subr.mxu0 0.0
    %554 = vmatpush1.msra.mxu0 0.0
    %555 = vmatprep.subr.mxu0 0.0
    %556 = vmatpush1.msra.mxu0 0.0
    %557 = vmatprep.subr.mxu0 0.0
    %558 = vmatpush1.msra.mxu0 0.0
    %559 = vmatprep.subr.mxu0 0.0
    %560 = vmatpush1.msra.mxu0 0.0
    %561 = vmatprep.subr.mxu0 0.0
    %562 = vmatpush1.msra.mxu0 0.0
    %563 = vmatprep.subr.mxu0 0.0
    %564 = vmatpush1.msra.mxu0 0.0
    %565 = vmatprep.subr.mxu0 0.0
    %566 = vmatpush1.msra.mxu0 0.0
    %567 = vmatprep.subr.mxu0 0.0
    %568 = vmatpush1.msra.mxu0 0.0
    %569 = vmatprep.subr.mxu0 0.0
    %570 = vmatpush1.msra.mxu0 0.0
    %571 = vmatprep.subr.mxu0 0.0
    %572 = vmatpush1.msra.mxu0 0.0
    %573 = vmatprep.subr.mxu0 0.0
    %574 = vmatpush1.msra.mxu0 0.0
    %575 = vmatprep.subr.mxu0 0.0
    %576 = vmatpush1.msra.mxu0 0.0
    %577 = vmatprep.subr.mxu0 0.0
    %578 = vmatpush1.msra.mxu0 0.0
    %579 = vmatprep.subr.mxu0 0.0
    %580 = vmatpush1.msra.mxu0 0.0
    %581 = vmatprep.subr.mxu0 0.0
    %582 = vmatpush1.msra.mxu0 0.0
    %583 = vmatprep.subr.mxu0 0.0
    %584 = vmatpush1.msra.mxu0 0.0
    %585 = vmatprep.subr.mxu0 0.0
    %586 = vmatpush1.msra.mxu0 0.0
    %587 = vmatprep.subr.mxu0 0.0
    %588 = vmatpush1.msra.mxu0 0.0
    %589 = vmatprep.subr.mxu0 0.0
    %590 = vmatpush1.msra.mxu0 0.0
    %591 = vmatprep.subr.mxu0 0.0
    %592 = vmatpush1.msra.mxu0 0.0
    %593 = vmatprep.subr.mxu0 0.0
    %594 = vmatpush1.msra.mxu0 0.0
    %595 = vmatprep.subr.mxu0 0.0
    %596 = vmatpush1.msra.mxu0 0.0
    %597 = vmatprep.subr.mxu0 0.0
    %598 = vmatpush1.msra.mxu0 0.0
    %599 = vmatprep.subr.mxu0 0.0
    %600 = vmatpush1.msra.mxu0 0.0
    %601 = vmatprep.subr.mxu0 0.0
    %602 = vmatpush1.msra.mxu0 0.0
    %603 = vmatprep.subr.mxu0 0.0
    %604 = vmatpush1.msra.mxu0 0.0
    %605 = vmatprep.mubr.f32.mxu0 0.0
    %606 = vmatmul.mubr.f32.gmra.mrb[0].mxu0 %v536
    %v607 = vpop.f32.mrb[0].mxu0
    %v608 = vadd.f32 0.0, %v607
    %v609 = vpop.f32.mrb[0].mxu0
    %610 = vmatprep.mubr.f32.mxu0 0.0
    %611 = vmatmul.mubr.f32.gmra.mrb[0].mxu0 %v539
    %v612 = vpop.f32.mrb[0].mxu0
    %v613 = vadd.f32 0.0, %v612
    %v614 = vpop.f32.mrb[0].mxu0
    %615 = vdwg.mxu0
    %v617 = vsel %vm453, %v405, 0
    %v620 = vsel %vm453, %v406, 0
    %622 = vmatprep.subr.mxu0 0.0
    %623 = vmatpush1.msra.mxu0 %v297
    %624 = vmatprep.subr.mxu0 0.0
    %625 = vmatpush1.msra.mxu0 0.0
    %626 = vmatprep.subr.mxu0 0.0
    %627 = vmatpush1.msra.mxu0 0.0
    %628 = vmatprep.subr.mxu0 0.0
    %629 = vmatpush1.msra.mxu0 0.0
    %630 = vmatprep.subr.mxu0 0.0
    %631 = vmatpush1.msra.mxu0 0.0
    %632 = vmatprep.subr.mxu0 0.0
    %633 = vmatpush1.msra.mxu0 0.0
    %634 = vmatprep.subr.mxu0 0.0
    %635 = vmatpush1.msra.mxu0 0.0
    %636 = vmatprep.subr.mxu0 0.0
    %637 = vmatpush1.msra.mxu0 0.0
    %638 = vmatprep.subr.mxu0 0.0
    %639 = vmatpush1.msra.mxu0 0.0
    %640 = vmatprep.subr.mxu0 0.0
    %641 = vmatpush1.msra.mxu0 0.0
    %642 = vmatprep.subr.mxu0 0.0
    %643 = vmatpush1.msra.mxu0 0.0
    %644 = vmatprep.subr.mxu0 0.0
    %645 = vmatpush1.msra.mxu0 0.0
    %646 = vmatprep.subr.mxu0 0.0
    %647 = vmatpush1.msra.mxu0 0.0
    %648 = vmatprep.subr.mxu0 0.0
    %649 = vmatpush1.msra.mxu0 0.0
    %650 = vmatprep.subr.mxu0 0.0
    %651 = vmatpush1.msra.mxu0 0.0
    %652 = vmatprep.subr.mxu0 0.0
    %653 = vmatpush1.msra.mxu0 0.0
    %654 = vmatprep.subr.mxu0 0.0
    %655 = vmatpush1.msra.mxu0 0.0
    %656 = vmatprep.subr.mxu0 0.0
    %657 = vmatpush1.msra.mxu0 0.0
    %658 = vmatprep.subr.mxu0 0.0
    %659 = vmatpush1.msra.mxu0 0.0
    %660 = vmatprep.subr.mxu0 0.0
    %661 = vmatpush1.msra.mxu0 0.0
    %662 = vmatprep.subr.mxu0 0.0
    %663 = vmatpush1.msra.mxu0 0.0
    %664 = vmatprep.subr.mxu0 0.0
    %665 = vmatpush1.msra.mxu0 0.0
    %666 = vmatprep.subr.mxu0 0.0
    %667 = vmatpush1.msra.mxu0 0.0
    %668 = vmatprep.subr.mxu0 0.0
    %669 = vmatpush1.msra.mxu0 0.0
    %670 = vmatprep.subr.mxu0 0.0
    %671 = vmatpush1.msra.mxu0 0.0
    %672 = vmatprep.subr.mxu0 0.0
    %673 = vmatpush1.msra.mxu0 0.0
    %674 = vmatprep.subr.mxu0 0.0
    %675 = vmatpush1.msra.mxu0 0.0
    %676 = vmatprep.subr.mxu0 0.0
    %677 = vmatpush1.msra.mxu0 0.0
    %678 = vmatprep.subr.mxu0 0.0
    %679 = vmatpush1.msra.mxu0 0.0
    %680 = vmatprep.subr.mxu0 0.0
    %681 = vmatpush1.msra.mxu0 0.0
    %682 = vmatprep.subr.mxu0 0.0
    %683 = vmatpush1.msra.mxu0 0.0
    %684 = vmatprep.subr.mxu0 0.0
    %685 = vmatpush1.msra.mxu0 0.0
    %686 = vmatprep.mubr.f32.mxu0 0.0
    %687 = vmatmul.mubr.f32.gmra.mrb[0].mxu0 %v617
    %v688 = vpop.f32.mrb[0].mxu0
    %v689 = vadd.f32 0.0, %v688
    %v690 = vpop.f32.mrb[0].mxu0
    %691 = vmatprep.mubr.f32.mxu0 0.0
    %692 = vmatmul.mubr.f32.gmra.mrb[0].mxu0 %v620
    %v693 = vpop.f32.mrb[0].mxu0
    %v694 = vadd.f32 0.0, %v693
    %v695 = vpop.f32.mrb[0].mxu0
    %696 = vdwg.mxu0
    %v698 = vsel %vm453, %v437, 0
    %v701 = vsel %vm453, %v438, 0
    %703 = vmatprep.subr.mxu0 0.0
    %704 = vmatpush1.msra.mxu0 %v302
    %705 = vmatprep.subr.mxu0 0.0
    %706 = vmatpush1.msra.mxu0 0.0
    %707 = vmatprep.subr.mxu0 0.0
    %708 = vmatpush1.msra.mxu0 0.0
    %709 = vmatprep.subr.mxu0 0.0
    %710 = vmatpush1.msra.mxu0 0.0
    %711 = vmatprep.subr.mxu0 0.0
    %712 = vmatpush1.msra.mxu0 0.0
    %713 = vmatprep.subr.mxu0 0.0
    %714 = vmatpush1.msra.mxu0 0.0
    %715 = vmatprep.subr.mxu0 0.0
    %716 = vmatpush1.msra.mxu0 0.0
    %717 = vmatprep.subr.mxu0 0.0
    %718 = vmatpush1.msra.mxu0 0.0
    %719 = vmatprep.subr.mxu0 0.0
    %720 = vmatpush1.msra.mxu0 0.0
    %721 = vmatprep.subr.mxu0 0.0
    %722 = vmatpush1.msra.mxu0 0.0
    %723 = vmatprep.subr.mxu0 0.0
    %724 = vmatpush1.msra.mxu0 0.0
    %725 = vmatprep.subr.mxu0 0.0
    %726 = vmatpush1.msra.mxu0 0.0
    %727 = vmatprep.subr.mxu0 0.0
    %728 = vmatpush1.msra.mxu0 0.0
    %729 = vmatprep.subr.mxu0 0.0
    %730 = vmatpush1.msra.mxu0 0.0
    %731 = vmatprep.subr.mxu0 0.0
    %732 = vmatpush1.msra.mxu0 0.0
    %733 = vmatprep.subr.mxu0 0.0
    %734 = vmatpush1.msra.mxu0 0.0
    %735 = vmatprep.subr.mxu0 0.0
    %736 = vmatpush1.msra.mxu0 0.0
    %737 = vmatprep.subr.mxu0 0.0
    %738 = vmatpush1.msra.mxu0 0.0
    %739 = vmatprep.subr.mxu0 0.0
    %740 = vmatpush1.msra.mxu0 0.0
    %741 = vmatprep.subr.mxu0 0.0
    %742 = vmatpush1.msra.mxu0 0.0
    %743 = vmatprep.subr.mxu0 0.0
    %744 = vmatpush1.msra.mxu0 0.0
    %745 = vmatprep.subr.mxu0 0.0
    %746 = vmatpush1.msra.mxu0 0.0
    %747 = vmatprep.subr.mxu0 0.0
    %748 = vmatpush1.msra.mxu0 0.0
    %749 = vmatprep.subr.mxu0 0.0
    %750 = vmatpush1.msra.mxu0 0.0
    %751 = vmatprep.subr.mxu0 0.0
    %752 = vmatpush1.msra.mxu0 0.0
    %753 = vmatprep.subr.mxu0 0.0
    %754 = vmatpush1.msra.mxu0 0.0
    %755 = vmatprep.subr.mxu0 0.0
    %756 = vmatpush1.msra.mxu0 0.0
    %757 = vmatprep.subr.mxu0 0.0
    %758 = vmatpush1.msra.mxu0 0.0
    %759 = vmatprep.subr.mxu0 0.0
    %760 = vmatpush1.msra.mxu0 0.0
    %761 = vmatprep.subr.mxu0 0.0
    %762 = vmatpush1.msra.mxu0 0.0
    %763 = vmatprep.subr.mxu0 0.0
    %764 = vmatpush1.msra.mxu0 0.0
    %765 = vmatprep.subr.mxu0 0.0
    %766 = vmatpush1.msra.mxu0 0.0
    %767 = vmatprep.mubr.f32.mxu0 0.0
    %768 = vmatmul.mubr.f32.gmra.mrb[0].mxu0 %v698
    %v769 = vpop.f32.mrb[0].mxu0
    %v770 = vadd.f32 0.0, %v769
    %v771 = vpop.f32.mrb[0].mxu0
    %772 = vmatprep.mubr.f32.mxu0 0.0
    %773 = vmatmul.mubr.f32.gmra.mrb[0].mxu0 %v701
    %v774 = vpop.f32.mrb[0].mxu0
    %v775 = vadd.f32 0.0, %v774
    %v776 = vpop.f32.mrb[0].mxu0
    %777 = vdwg.mxu0
    %v778 = vmul.f32 %v527, 0.35355338
    %v779 = vmul.f32 %v532, 0.35355338
    %v780 = vmul.f32 %v608, 0.35355338
    %v781 = vmul.f32 %v613, 0.35355338
    %v782 = vmul.f32 %v689, 0.35355338
    %v783 = vmul.f32 %v694, 0.35355338
    %v784 = vmul.f32 %v770, 0.35355338
    %v785 = vmul.f32 %v775, 0.35355338
    %vm786 = vcmp.eq.f32.partialorder %v20, 0.0
    %vm787 = vcmp.eq.f32.partialorder %v21, 0.0
    %v788 = vsel %vm786, -1e+09, %v778
    %v789 = vsel %vm787, -1e+09, %v779
    %v790 = vsel %vm786, -1e+09, %v780
    %v791 = vsel %vm787, -1e+09, %v781
    %v792 = vsel %vm786, -1e+09, %v782
    %v793 = vsel %vm787, -1e+09, %v783
    %v794 = vsel %vm786, -1e+09, %v784
    %v795 = vsel %vm787, -1e+09, %v785
    %vm796 = vcmask 130048
    %v797 = vsel %vm796, %v788, -inf
    %798 = vmax.xlane.f32.xlu0 %v797
    %v799 = vpop.xlane.xlu0 %798
    %v800 = vsel %vm796, %v789, -inf
    %801 = vmax.xlane.f32.xlu0 %v800
    %v802 = vpop.xlane.xlu0 %801
    %v803 = vsel %vm796, %v790, -inf
    %804 = vmax.xlane.f32.xlu0 %v803
    %v805 = vpop.xlane.xlu0 %804
    %v806 = vsel %vm796, %v791, -inf
    %807 = vmax.xlane.f32.xlu0 %v806
    %v808 = vpop.xlane.xlu0 %807
    %v809 = vsel %vm796, %v792, -inf
    %810 = vmax.xlane.f32.xlu0 %v809
    %v811 = vpop.xlane.xlu0 %810
    %v812 = vsel %vm796, %v793, -inf
    %813 = vmax.xlane.f32.xlu0 %v812
    %v814 = vpop.xlane.xlu0 %813
    %v815 = vsel %vm796, %v794, -inf
    %816 = vmax.xlane.f32.xlu0 %v815
    %v817 = vpop.xlane.xlu0 %816
    %v818 = vsel %vm796, %v795, -inf
    %819 = vmax.xlane.f32.xlu0 %v818
    %v820 = vpop.xlane.xlu0 %819
    %v821 = vsub.f32 %v788, %v799
    %v822 = vsub.f32 %v789, %v802
    %v823 = vsub.f32 %v790, %v805
    %v824 = vsub.f32 %v791, %v808
    %v825 = vsub.f32 %v792, %v811
    %v826 = vsub.f32 %v793, %v814
    %v827 = vsub.f32 %v794, %v817
    %v828 = vsub.f32 %v795, %v820
    %v829 = vmul.f32 %v821, 1.442695
    %v830 = vpow.pop %v829
    %v831 = vmul.f32 %v822, 1.442695
    %v832 = vpow.pop %v831
    %v833 = vmul.f32 %v823, 1.442695
    %v834 = vpow.pop %v833
    %v835 = vmul.f32 %v824, 1.442695
    %v836 = vpow.pop %v835
    %v837 = vmul.f32 %v825, 1.442695
    %v838 = vpow.pop %v837
    %v839 = vmul.f32 %v826, 1.442695
    %v840 = vpow.pop %v839
    %v841 = vmul.f32 %v827, 1.442695
    %v842 = vpow.pop %v841
    %v843 = vmul.f32 %v828, 1.442695
    %v844 = vpow.pop %v843
    %v845 = vsel %vm796, %v830, 0.0
    %846 = vadd.xlane.f32.xlu0 %v845
    %v847 = vpop.xlane.xlu0 %846
    %v848 = vsel %vm796, %v832, 0.0
    %849 = vadd.xlane.f32.xlu0 %v848
    %v850 = vpop.xlane.xlu0 %849
    %v851 = vsel %vm796, %v834, 0.0
    %852 = vadd.xlane.f32.xlu0 %v851
    %v853 = vpop.xlane.xlu0 %852
    %v854 = vsel %vm796, %v836, 0.0
    %855 = vadd.xlane.f32.xlu0 %v854
    %v856 = vpop.xlane.xlu0 %855
    %v857 = vsel %vm796, %v838, 0.0
    %858 = vadd.xlane.f32.xlu0 %v857
    %v859 = vpop.xlane.xlu0 %858
    %v860 = vsel %vm796, %v840, 0.0
    %861 = vadd.xlane.f32.xlu0 %v860
    %v862 = vpop.xlane.xlu0 %861
    %v863 = vsel %vm796, %v842, 0.0
    %864 = vadd.xlane.f32.xlu0 %v863
    %v865 = vpop.xlane.xlu0 %864
    %v866 = vsel %vm796, %v844, 0.0
    %867 = vadd.xlane.f32.xlu0 %v866
    %v868 = vpop.xlane.xlu0 %867
    %v869 = vrcp.pop %v847
    %v870 = vrcp.pop %v850
    %v871 = vrcp.pop %v853
    %v872 = vrcp.pop %v856
    %v873 = vrcp.pop %v859
    %v874 = vrcp.pop %v862
    %v875 = vrcp.pop %v865
    %v876 = vrcp.pop %v868
    %v877 = vmul.f32 %v830, %v869
    %v878 = vmul.f32 %v832, %v870
    %v879 = vmul.f32 %v834, %v871
    %v880 = vmul.f32 %v836, %v872
    %v881 = vmul.f32 %v838, %v873
    %v882 = vmul.f32 %v840, %v874
    %v883 = vmul.f32 %v842, %v875
    %v884 = vmul.f32 %v844, %v876
    %v886 = vsel %vm796, %v307, 0
    %v889 = vsel %vm796, %v877, 0
    %v892 = vsel %vm796, %v878, 0
    %894 = vmatprep.subr.mxu0 0.0
    %895 = vmatpush1.xpose.msra.mxu0 %v889
    %896 = vmatprep.subr.mxu0 0.0
    %897 = vmatpush1.xpose.msra.mxu0 %v892
    %898 = vmatprep.subr.mxu0 0.0
    %899 = vmatpush1.xpose.msra.mxu0 0.0
    %900 = vmatprep.subr.mxu0 0.0
    %901 = vmatpush1.xpose.msra.mxu0 0.0
    %902 = vmatprep.subr.mxu0 0.0
    %903 = vmatpush1.xpose.msra.mxu0 0.0
    %904 = vmatprep.subr.mxu0 0.0
    %905 = vmatpush1.xpose.msra.mxu0 0.0
    %906 = vmatprep.subr.mxu0 0.0
    %907 = vmatpush1.xpose.msra.mxu0 0.0
    %908 = vmatprep.subr.mxu0 0.0
    %909 = vmatpush1.xpose.msra.mxu0 0.0
    %910 = vmatprep.subr.mxu0 0.0
    %911 = vmatpush1.xpose.msra.mxu0 0.0
    %912 = vmatprep.subr.mxu0 0.0
    %913 = vmatpush1.xpose.msra.mxu0 0.0
    %914 = vmatprep.subr.mxu0 0.0
    %915 = vmatpush1.xpose.msra.mxu0 0.0
    %916 = vmatprep.subr.mxu0 0.0
    %917 = vmatpush1.xpose.msra.mxu0 0.0
    %918 = vmatprep.subr.mxu0 0.0
    %919 = vmatpush1.xpose.msra.mxu0 0.0
    %920 = vmatprep.subr.mxu0 0.0
    %921 = vmatpush1.xpose.msra.mxu0 0.0
    %922 = vmatprep.subr.mxu0 0.0
    %923 = vmatpush1.xpose.msra.mxu0 0.0
    %924 = vmatprep.subr.mxu0 0.0
    %925 = vmatpush1.xpose.msra.mxu0 0.0
    %926 = vmatprep.subr.mxu0 0.0
    %927 = vmatpush1.xpose.msra.mxu0 0.0
    %928 = vmatprep.subr.mxu0 0.0
    %929 = vmatpush1.xpose.msra.mxu0 0.0
    %930 = vmatprep.subr.mxu0 0.0
    %931 = vmatpush1.xpose.msra.mxu0 0.0
    %932 = vmatprep.subr.mxu0 0.0
    %933 = vmatpush1.xpose.msra.mxu0 0.0
    %934 = vmatprep.subr.mxu0 0.0
    %935 = vmatpush1.xpose.msra.mxu0 0.0
    %936 = vmatprep.subr.mxu0 0.0
    %937 = vmatpush1.xpose.msra.mxu0 0.0
    %938 = vmatprep.subr.mxu0 0.0
    %939 = vmatpush1.xpose.msra.mxu0 0.0
    %940 = vmatprep.subr.mxu0 0.0
    %941 = vmatpush1.xpose.msra.mxu0 0.0
    %942 = vmatprep.subr.mxu0 0.0
    %943 = vmatpush1.xpose.msra.mxu0 0.0
    %944 = vmatprep.subr.mxu0 0.0
    %945 = vmatpush1.xpose.msra.mxu0 0.0
    %946 = vmatprep.subr.mxu0 0.0
    %947 = vmatpush1.xpose.msra.mxu0 0.0
    %948 = vmatprep.subr.mxu0 0.0
    %949 = vmatpush1.xpose.msra.mxu0 0.0
    %950 = vmatprep.subr.mxu0 0.0
    %951 = vmatpush1.xpose.msra.mxu0 0.0
    %952 = vmatprep.subr.mxu0 0.0
    %953 = vmatpush1.xpose.msra.mxu0 0.0
    %954 = vmatprep.subr.mxu0 0.0
    %955 = vmatpush1.xpose.msra.mxu0 0.0
    %956 = vmatprep.subr.mxu0 0.0
    %957 = vmatpush1.xpose.msra.mxu0 0.0
    %958 = vmatprep.mubr.f32.mxu0 0.0
    %959 = vmatmul.mubr.f32.gmra.mrb[0].mxu0 %v886
    %v960 = vpop.f32.mrb[0].mxu0
    %v961 = vadd.f32 0.0, %v960
    %v962 = vpop.f32.mrb[0].mxu0
    %963 = vdwg.mxu0
    %v965 = vsel %vm796, %v312, 0
    %v968 = vsel %vm796, %v879, 0
    %v971 = vsel %vm796, %v880, 0
    %973 = vmatprep.subr.mxu0 0.0
    %974 = vmatpush1.xpose.msra.mxu0 %v968
    %975 = vmatprep.subr.mxu0 0.0
    %976 = vmatpush1.xpose.msra.mxu0 %v971
    %977 = vmatprep.subr.mxu0 0.0
    %978 = vmatpush1.xpose.msra.mxu0 0.0
    %979 = vmatprep.subr.mxu0 0.0
    %980 = vmatpush1.xpose.msra.mxu0 0.0
    %981 = vmatprep.subr.mxu0 0.0
    %982 = vmatpush1.xpose.msra.mxu0 0.0
    %983 = vmatprep.subr.mxu0 0.0
    %984 = vmatpush1.xpose.msra.mxu0 0.0
    %985 = vmatprep.subr.mxu0 0.0
    %986 = vmatpush1.xpose.msra.mxu0 0.0
    %987 = vmatprep.subr.mxu0 0.0
    %988 = vmatpush1.xpose.msra.mxu0 0.0
    %989 = vmatprep.subr.mxu0 0.0
    %990 = vmatpush1.xpose.msra.mxu0 0.0
    %991 = vmatprep.subr.mxu0 0.0
    %992 = vmatpush1.xpose.msra.mxu0 0.0
    %993 = vmatprep.subr.mxu0 0.0
    %994 = vmatpush1.xpose.msra.mxu0 0.0
    %995 = vmatprep.subr.mxu0 0.0
    %996 = vmatpush1.xpose.msra.mxu0 0.0
    %997 = vmatprep.subr.mxu0 0.0
    %998 = vmatpush1.xpose.msra.mxu0 0.0
    %999 = vmatprep.subr.mxu0 0.0
    %1000 = vmatpush1.xpose.msra.mxu0 0.0
    %1001 = vmatprep.subr.mxu0 0.0
    %1002 = vmatpush1.xpose.msra.mxu0 0.0
    %1003 = vmatprep.subr.mxu0 0.0
    %1004 = vmatpush1.xpose.msra.mxu0 0.0
    %1005 = vmatprep.subr.mxu0 0.0
    %1006 = vmatpush1.xpose.msra.mxu0 0.0
    %1007 = vmatprep.subr.mxu0 0.0
    %1008 = vmatpush1.xpose.msra.mxu0 0.0
    %1009 = vmatprep.subr.mxu0 0.0
    %1010 = vmatpush1.xpose.msra.mxu0 0.0
    %1011 = vmatprep.subr.mxu0 0.0
    %1012 = vmatpush1.xpose.msra.mxu0 0.0
    %1013 = vmatprep.subr.mxu0 0.0
    %1014 = vmatpush1.xpose.msra.mxu0 0.0
    %1015 = vmatprep.subr.mxu0 0.0
    %1016 = vmatpush1.xpose.msra.mxu0 0.0
    %1017 = vmatprep.subr.mxu0 0.0
    %1018 = vmatpush1.xpose.msra.mxu0 0.0
    %1019 = vmatprep.subr.mxu0 0.0
    %1020 = vmatpush1.xpose.msra.mxu0 0.0
    %1021 = vmatprep.subr.mxu0 0.0
    %1022 = vmatpush1.xpose.msra.mxu0 0.0
    %1023 = vmatprep.subr.mxu0 0.0
    %1024 = vmatpush1.xpose.msra.mxu0 0.0
    %1025 = vmatprep.subr.mxu0 0.0
    %1026 = vmatpush1.xpose.msra.mxu0 0.0
    %1027 = vmatprep.subr.mxu0 0.0
    %1028 = vmatpush1.xpose.msra.mxu0 0.0
    %1029 = vmatprep.subr.mxu0 0.0
    %1030 = vmatpush1.xpose.msra.mxu0 0.0
    %1031 = vmatprep.subr.mxu0 0.0
    %1032 = vmatpush1.xpose.msra.mxu0 0.0
    %1033 = vmatprep.subr.mxu0 0.0
    %1034 = vmatpush1.xpose.msra.mxu0 0.0
    %1035 = vmatprep.subr.mxu0 0.0
    %1036 = vmatpush1.xpose.msra.mxu0 0.0
    %1037 = vmatprep.mubr.f32.mxu0 0.0
    %1038 = vmatmul.mubr.f32.gmra.mrb[0].mxu0 %v965
    %v1039 = vpop.f32.mrb[0].mxu0
    %v1040 = vadd.f32 0.0, %v1039
    %v1041 = vpop.f32.mrb[0].mxu0
    %1042 = vdwg.mxu0
    %v1044 = vsel %vm796, %v317, 0
    %v1047 = vsel %vm796, %v881, 0
    %v1050 = vsel %vm796, %v882, 0
    %1052 = vmatprep.subr.mxu0 0.0
    %1053 = vmatpush1.xpose.msra.mxu0 %v1047
    %1054 = vmatprep.subr.mxu0 0.0
    %1055 = vmatpush1.xpose.msra.mxu0 %v1050
    %1056 = vmatprep.subr.mxu0 0.0
    %1057 = vmatpush1.xpose.msra.mxu0 0.0
    %1058 = vmatprep.subr.mxu0 0.0
    %1059 = vmatpush1.xpose.msra.mxu0 0.0
    %1060 = vmatprep.subr.mxu0 0.0
    %1061 = vmatpush1.xpose.msra.mxu0 0.0
    %1062 = vmatprep.subr.mxu0 0.0
    %1063 = vmatpush1.xpose.msra.mxu0 0.0
    %1064 = vmatprep.subr.mxu0 0.0
    %1065 = vmatpush1.xpose.msra.mxu0 0.0
    %1066 = vmatprep.subr.mxu0 0.0
    %1067 = vmatpush1.xpose.msra.mxu0 0.0
    %1068 = vmatprep.subr.mxu0 0.0
    %1069 = vmatpush1.xpose.msra.mxu0 0.0
    %1070 = vmatprep.subr.mxu0 0.0
    %1071 = vmatpush1.xpose.msra.mxu0 0.0
    %1072 = vmatprep.subr.mxu0 0.0
    %1073 = vmatpush1.xpose.msra.mxu0 0.0
    %1074 = vmatprep.subr.mxu0 0.0
    %1075 = vmatpush1.xpose.msra.mxu0 0.0
    %1076 = vmatprep.subr.mxu0 0.0
    %1077 = vmatpush1.xpose.msra.mxu0 0.0
    %1078 = vmatprep.subr.mxu0 0.0
    %1079 = vmatpush1.xpose.msra.mxu0 0.0
    %1080 = vmatprep.subr.mxu0 0.0
    %1081 = vmatpush1.xpose.msra.mxu0 0.0
    %1082 = vmatprep.subr.mxu0 0.0
    %1083 = vmatpush1.xpose.msra.mxu0 0.0
    %1084 = vmatprep.subr.mxu0 0.0
    %1085 = vmatpush1.xpose.msra.mxu0 0.0
    %1086 = vmatprep.subr.mxu0 0.0
    %1087 = vmatpush1.xpose.msra.mxu0 0.0
    %1088 = vmatprep.subr.mxu0 0.0
    %1089 = vmatpush1.xpose.msra.mxu0 0.0
    %1090 = vmatprep.subr.mxu0 0.0
    %1091 = vmatpush1.xpose.msra.mxu0 0.0
    %1092 = vmatprep.subr.mxu0 0.0
    %1093 = vmatpush1.xpose.msra.mxu0 0.0
    %1094 = vmatprep.subr.mxu0 0.0
    %1095 = vmatpush1.xpose.msra.mxu0 0.0
    %1096 = vmatprep.subr.mxu0 0.0
    %1097 = vmatpush1.xpose.msra.mxu0 0.0
    %1098 = vmatprep.subr.mxu0 0.0
    %1099 = vmatpush1.xpose.msra.mxu0 0.0
    %1100 = vmatprep.subr.mxu0 0.0
    %1101 = vmatpush1.xpose.msra.mxu0 0.0
    %1102 = vmatprep.subr.mxu0 0.0
    %1103 = vmatpush1.xpose.msra.mxu0 0.0
    %1104 = vmatprep.subr.mxu0 0.0
    %1105 = vmatpush1.xpose.msra.mxu0 0.0
    %1106 = vmatprep.subr.mxu0 0.0
    %1107 = vmatpush1.xpose.msra.mxu0 0.0
    %1108 = vmatprep.subr.mxu0 0.0
    %1109 = vmatpush1.xpose.msra.mxu0 0.0
    %1110 = vmatprep.subr.mxu0 0.0
    %1111 = vmatpush1.xpose.msra.mxu0 0.0
    %1112 = vmatprep.subr.mxu0 0.0
    %1113 = vmatpush1.xpose.msra.mxu0 0.0
    %1114 = vmatprep.subr.mxu0 0.0
    %1115 = vmatpush1.xpose.msra.mxu0 0.0
    %1116 = vmatprep.mubr.f32.mxu0 0.0
    %1117 = vmatmul.mubr.f32.gmra.mrb[0].mxu0 %v1044
    %v1118 = vpop.f32.mrb[0].mxu0
    %v1119 = vadd.f32 0.0, %v1118
    %v1120 = vpop.f32.mrb[0].mxu0
    %1121 = vdwg.mxu0
    %v1123 = vsel %vm796, %v322, 0
    %v1126 = vsel %vm796, %v883, 0
    %v1129 = vsel %vm796, %v884, 0
    %1131 = vmatprep.subr.mxu0 0.0
    %1132 = vmatpush1.xpose.msra.mxu0 %v1126
    %1133 = vmatprep.subr.mxu0 0.0
    %1134 = vmatpush1.xpose.msra.mxu0 %v1129
    %1135 = vmatprep.subr.mxu0 0.0
    %1136 = vmatpush1.xpose.msra.mxu0 0.0
    %1137 = vmatprep.subr.mxu0 0.0
    %1138 = vmatpush1.xpose.msra.mxu0 0.0
    %1139 = vmatprep.subr.mxu0 0.0
    %1140 = vmatpush1.xpose.msra.mxu0 0.0
    %1141 = vmatprep.subr.mxu0 0.0
    %1142 = vmatpush1.xpose.msra.mxu0 0.0
    %1143 = vmatprep.subr.mxu0 0.0
    %1144 = vmatpush1.xpose.msra.mxu0 0.0
    %1145 = vmatprep.subr.mxu0 0.0
    %1146 = vmatpush1.xpose.msra.mxu0 0.0
    %1147 = vmatprep.subr.mxu0 0.0
    %1148 = vmatpush1.xpose.msra.mxu0 0.0
    %1149 = vmatprep.subr.mxu0 0.0
    %1150 = vmatpush1.xpose.msra.mxu0 0.0
    %1151 = vmatprep.subr.mxu0 0.0
    %1152 = vmatpush1.xpose.msra.mxu0 0.0
    %1153 = vmatprep.subr.mxu0 0.0
    %1154 = vmatpush1.xpose.msra.mxu0 0.0
    %1155 = vmatprep.subr.mxu0 0.0
    %1156 = vmatpush1.xpose.msra.mxu0 0.0
    %1157 = vmatprep.subr.mxu0 0.0
    %1158 = vmatpush1.xpose.msra.mxu0 0.0
    %1159 = vmatprep.subr.mxu0 0.0
    %1160 = vmatpush1.xpose.msra.mxu0 0.0
    %1161 = vmatprep.subr.mxu0 0.0
    %1162 = vmatpush1.xpose.msra.mxu0 0.0
    %1163 = vmatprep.subr.mxu0 0.0
    %1164 = vmatpush1.xpose.msra.mxu0 0.0
    %1165 = vmatprep.subr.mxu0 0.0
    %1166 = vmatpush1.xpose.msra.mxu0 0.0
    %1167 = vmatprep.subr.mxu0 0.0
    %1168 = vmatpush1.xpose.msra.mxu0 0.0
    %1169 = vmatprep.subr.mxu0 0.0
    %1170 = vmatpush1.xpose.msra.mxu0 0.0
    %1171 = vmatprep.subr.mxu0 0.0
    %1172 = vmatpush1.xpose.msra.mxu0 0.0
    %1173 = vmatprep.subr.mxu0 0.0
    %1174 = vmatpush1.xpose.msra.mxu0 0.0
    %1175 = vmatprep.subr.mxu0 0.0
    %1176 = vmatpush1.xpose.msra.mxu0 0.0
    %1177 = vmatprep.subr.mxu0 0.0
    %1178 = vmatpush1.xpose.msra.mxu0 0.0
    %1179 = vmatprep.subr.mxu0 0.0
    %1180 = vmatpush1.xpose.msra.mxu0 0.0
    %1181 = vmatprep.subr.mxu0 0.0
    %1182 = vmatpush1.xpose.msra.mxu0 0.0
    %1183 = vmatprep.subr.mxu0 0.0
    %1184 = vmatpush1.xpose.msra.mxu0 0.0
    %1185 = vmatprep.subr.mxu0 0.0
    %1186 = vmatpush1.xpose.msra.mxu0 0.0
    %1187 = vmatprep.subr.mxu0 0.0
    %1188 = vmatpush1.xpose.msra.mxu0 0.0
    %1189 = vmatprep.subr.mxu0 0.0
    %1190 = vmatpush1.xpose.msra.mxu0 0.0
    %1191 = vmatprep.subr.mxu0 0.0
    %1192 = vmatpush1.xpose.msra.mxu0 0.0
    %1193 = vmatprep.subr.mxu0 0.0
    %1194 = vmatpush1.xpose.msra.mxu0 0.0
    %1195 = vmatprep.mubr.f32.mxu0 0.0
    %1196 = vmatmul.mubr.f32.gmra.mrb[0].mxu0 %v1123
    %v1197 = vpop.f32.mrb[0].mxu0
    %v1198 = vadd.f32 0.0, %v1197
    %v1199 = vpop.f32.mrb[0].mxu0
    %1200 = vdwg.mxu0
    %1202 = vset.pattern.permute.xlu0 32
    %1203 = vperm.xlu0 %1202, %v40
    %v1204 = vpop.permute.xlu0 %1203
    %1207 = vset.pattern.permute.xlu0 32
    %1208 = vperm.xlu0 %1207, %v41
    %v1209 = vpop.permute.xlu0 %1208
    %1212 = vset.pattern.permute.xlu0 32
    %1213 = vperm.xlu0 %1212, %v42
    %v1214 = vpop.permute.xlu0 %1213
    %1217 = vset.pattern.permute.xlu0 32
    %1218 = vperm.xlu0 %1217, %v43
    %v1219 = vpop.permute.xlu0 %1218
    %v1221 = vsel %vm56, %v40, 0
    %v1223 = vsel %vm56, %v41, 0
    %v1225 = vsel %vm56, %v42, 0
    %v1227 = vsel %vm56, %v43, 0
    %1229 = vmatprep.subr.mxu0 0.0
    %1230 = vmatpush1.msra.mxu0 %v961
    %1231 = vmatprep.subr.mxu0 0.0
    %1232 = vmatpush1.msra.mxu0 %v1040
    %1233 = vmatprep.subr.mxu0 0.0
    %1234 = vmatpush1.msra.mxu0 %v1119
    %1235 = vmatprep.subr.mxu0 0.0
    %1236 = vmatpush1.msra.mxu0 %v1198
    %1237 = vmatprep.subr.mxu0 0.0
    %1238 = vmatpush1.msra.mxu0 0.0
    %1239 = vmatprep.subr.mxu0 0.0
    %1240 = vmatpush1.msra.mxu0 0.0
    %1241 = vmatprep.subr.mxu0 0.0
    %1242 = vmatpush1.msra.mxu0 0.0
    %1243 = vmatprep.subr.mxu0 0.0
    %1244 = vmatpush1.msra.mxu0 0.0
    %1245 = vmatprep.subr.mxu0 0.0
    %1246 = vmatpush1.msra.mxu0 0.0
    %1247 = vmatprep.subr.mxu0 0.0
    %1248 = vmatpush1.msra.mxu0 0.0
    %1249 = vmatprep.subr.mxu0 0.0
    %1250 = vmatpush1.msra.mxu0 0.0
    %1251 = vmatprep.subr.mxu0 0.0
    %1252 = vmatpush1.msra.mxu0 0.0
    %1253 = vmatprep.subr.mxu0 0.0
    %1254 = vmatpush1.msra.mxu0 0.0
    %1255 = vmatprep.subr.mxu0 0.0
    %1256 = vmatpush1.msra.mxu0 0.0
    %1257 = vmatprep.subr.mxu0 0.0
    %1258 = vmatpush1.msra.mxu0 0.0
    %1259 = vmatprep.subr.mxu0 0.0
    %1260 = vmatpush1.msra.mxu0 0.0
    %1261 = vmatprep.subr.mxu0 0.0
    %1262 = vmatpush1.msra.mxu0 0.0
    %1263 = vmatprep.subr.mxu0 0.0
    %1264 = vmatpush1.msra.mxu0 0.0
    %1265 = vmatprep.subr.mxu0 0.0
    %1266 = vmatpush1.msra.mxu0 0.0
    %1267 = vmatprep.subr.mxu0 0.0
    %1268 = vmatpush1.msra.mxu0 0.0
    %1269 = vmatprep.subr.mxu0 0.0
    %1270 = vmatpush1.msra.mxu0 0.0
    %1271 = vmatprep.subr.mxu0 0.0
    %1272 = vmatpush1.msra.mxu0 0.0
    %1273 = vmatprep.subr.mxu0 0.0
    %1274 = vmatpush1.msra.mxu0 0.0
    %1275 = vmatprep.subr.mxu0 0.0
    %1276 = vmatpush1.msra.mxu0 0.0
    %1277 = vmatprep.subr.mxu0 0.0
    %1278 = vmatpush1.msra.mxu0 0.0
    %1279 = vmatprep.subr.mxu0 0.0
    %1280 = vmatpush1.msra.mxu0 0.0
    %1281 = vmatprep.subr.mxu0 0.0
    %1282 = vmatpush1.msra.mxu0 0.0
    %1283 = vmatprep.subr.mxu0 0.0
    %1284 = vmatpush1.msra.mxu0 0.0
    %1285 = vmatprep.subr.mxu0 0.0
    %1286 = vmatpush1.msra.mxu0 0.0
    %1287 = vmatprep.subr.mxu0 0.0
    %1288 = vmatpush1.msra.mxu0 0.0
    %1289 = vmatprep.subr.mxu0 0.0
    %1290 = vmatpush1.msra.mxu0 0.0
    %1291 = vmatprep.subr.mxu0 0.0
    %1292 = vmatpush1.msra.mxu0 0.0
    %1293 = vmatprep.mubr.f32.mxu0 0.0
    %1294 = vmatmul.mubr.f32.gmra.mrb[0].mxu0 %v1221
    %v1295 = vpop.f32.mrb[0].mxu0
    %v1296 = vadd.f32 %v1204, %v1295
    %v1297 = vpop.f32.mrb[0].mxu0
    %1298 = vmatprep.mubr.f32.mxu0 0.0
    %1299 = vmatmul.mubr.f32.gmra.mrb[0].mxu0 %v1223
    %v1300 = vpop.f32.mrb[0].mxu0
    %v1301 = vadd.f32 %v1209, %v1300
    %v1302 = vpop.f32.mrb[0].mxu0
    %1303 = vmatprep.mubr.f32.mxu0 0.0
    %1304 = vmatmul.mubr.f32.gmra.mrb[0].mxu0 %v1225
    %v1305 = vpop.f32.mrb[0].mxu0
    %v1306 = vadd.f32 %v1214, %v1305
    %v1307 = vpop.f32.mrb[0].mxu0
    %1308 = vmatprep.mubr.f32.mxu0 0.0
    %1309 = vmatmul.mubr.f32.gmra.mrb[0].mxu0 %v1227
    %v1310 = vpop.f32.mrb[0].mxu0
    %v1311 = vadd.f32 %v1219, %v1310
    %v1312 = vpop.f32.mrb[0].mxu0
    %1313 = vdwg.mxu0
    %1314 = vxpose.xlu0.b32.start [1/16] %v1296, 128
    %1315 = vxpose.xlu0.b32.cont [2/16] %v1301, 128
    %1316 = vxpose.xlu0.b32.cont [3/16] %v1306, 128
    %1317 = vxpose.xlu0.b32.cont [4/16] %v1311, 128
    %1318 = vxpose.xlu0.b32.cont [5/16] 0.0, 128
    %1319 = vxpose.xlu0.b32.cont [6/16] 0.0, 128
    %1320 = vxpose.xlu0.b32.cont [7/16] 0.0, 128
    %1321 = vxpose.xlu0.b32.cont [8/16] 0.0, 128
    %1322 = vxpose.xlu0.b32.cont [9/16] 0.0, 128
    %1323 = vxpose.xlu0.b32.cont [10/16] 0.0, 128
    %1324 = vxpose.xlu0.b32.cont [11/16] 0.0, 128
    %1325 = vxpose.xlu0.b32.cont [12/16] 0.0, 128
    %1326 = vxpose.xlu0.b32.cont [13/16] 0.0, 128
    %1327 = vxpose.xlu0.b32.cont [14/16] 0.0, 128
    %1328 = vxpose.xlu0.b32.cont [15/16] 0.0, 128
    %1329 = vxpose.xlu0.b32.end [16/16] 0.0, 128
    %v1330 = vpop.trf.xlu0
    %v1331 = vpop.trf.xlu0
    %v1332 = vpop.trf.xlu0
    %v1333 = vpop.trf.xlu0
    %v1334 = vpop.trf.xlu0
    %v1335 = vpop.trf.xlu0
    %v1336 = vpop.trf.xlu0
    %v1337 = vpop.trf.xlu0
    %v1338 = vpop.trf.xlu0
    %v1339 = vpop.trf.xlu0
    %v1340 = vpop.trf.xlu0
    %v1341 = vpop.trf.xlu0
    %v1342 = vpop.trf.xlu0
    %v1343 = vpop.trf.xlu0
    %v1344 = vpop.trf.xlu0
    %v1345 = vpop.trf.xlu0
    %v1346 = vadd.f32 %v18, %v1330
    %v1347 = vadd.f32 %v19, %v1331
    %v1348 = vsel %vm56, %v1346, 0.0
    %1349 = vadd.xlane.f32.xlu0 %v1348
    %v1350 = vpop.xlane.xlu0 %1349
    %v1351 = vsel %vm56, %v1347, 0.0
    %1352 = vadd.xlane.f32.xlu0 %v1351
    %v1353 = vpop.xlane.xlu0 %1352
    %v1354 = vmul.f32 %v1350, %v63
    %v1355 = vmul.f32 %v1353, %v63
    %v1356 = vsub.f32 %v1346, %v1354
    %v1357 = vsub.f32 %v1347, %v1355
    %v1358 = vmul.f32 %v1356, %v1356
    %v1359 = vmul.f32 %v1357, %v1357
    %v1360 = vsel %vm56, %v1358, 0.0
    %1361 = vadd.xlane.f32.xlu0 %v1360
    %v1362 = vpop.xlane.xlu0 %1361
    %v1363 = vsel %vm56, %v1359, 0.0
    %1364 = vadd.xlane.f32.xlu0 %v1363
    %v1365 = vpop.xlane.xlu0 %1364
    %v1366 = vmul.f32 %v1362, 0.032258064
    %v1367 = vmul.f32 %v1365, 0.032258064
    %v1368 = vrsqrt.pop %v1366
    %v1369 = vmul.f32 %v1366, %v1368
    %vm1370 = vcmp.eq.f32.partialorder %v1366, inf
    %v1371 = vsel %vm1370, %v1366, %v1369
    %vm1372 = vcmp.eq.f32.partialorder %v1366, 0.0
    %v1373 = vand.u32 %v1366, 2147483648
    %v1374 = vsel %vm1372, %v1373, %v1371
    %v1375 = vrsqrt.pop %v1367
    %v1376 = vmul.f32 %v1367, %v1375
    %vm1377 = vcmp.eq.f32.partialorder %v1367, inf
    %v1378 = vsel %vm1377, %v1367, %v1376
    %vm1379 = vcmp.eq.f32.partialorder %v1367, 0.0
    %v1380 = vand.u32 %v1367, 2147483648
    %v1381 = vsel %vm1379, %v1380, %v1378
    %v1382 = vadd.f32 %v1374, 1e-06
    %v1383 = vadd.f32 %v1381, 1e-06
    %v1384 = vrcp.pop %v1382
    %v1385 = vrcp.pop %v1383
    %v1386 = vlaneseq
    %v1387 = vshrl.u32 %v1386, 7
    %v1388 = vsub.s32 0, %v1387
    %v1389 = vrot.slane %v24, %v1388
    %v1390 = vmul.f32 %v1389, %v1356
    %v1391 = vmul.f32 %v1389, %v1357
    %v1392 = vmul.f32 %v1390, %v1384
    %v1393 = vmul.f32 %v1391, %v1385
    %v1394 = vlaneseq
    %v1395 = vshrl.u32 %v1394, 7
    %v1396 = vsub.s32 0, %v1395
    %v1397 = vrot.slane %v25, %v1396
    %v1398 = vadd.f32 %v1392, %v1397
    %v1399 = vadd.f32 %v1393, %v1397
    %v1400 = vlaneseq
    %v1401 = vshrl.u32 %v1400, 7
    %v1402 = vsub.s32 0, %v1401
    %v1403 = vrot.slane %v26, %v1402
    %v1405 = vsel %vm56, %v1398, 0
    %v1408 = vsel %vm56, %v1399, 0
    %1410 = vmatprep.subr.mxu0 0.0
    %1411 = vmatpush1.msra.mxu0 %v44
    %1412 = vmatprep.subr.mxu0 0.0
    %1413 = vmatpush1.msra.mxu0 %v45
    %1414 = vmatprep.subr.mxu0 0.0
    %1415 = vmatpush1.msra.mxu0 %v46
    %1416 = vmatprep.subr.mxu0 0.0
    %1417 = vmatpush1.msra.mxu0 %v47
    %1418 = vmatprep.subr.mxu0 0.0
    %1419 = vmatpush1.msra.mxu0 0.0
    %1420 = vmatprep.subr.mxu0 0.0
    %1421 = vmatpush1.msra.mxu0 0.0
    %1422 = vmatprep.subr.mxu0 0.0
    %1423 = vmatpush1.msra.mxu0 0.0
    %1424 = vmatprep.subr.mxu0 0.0
    %1425 = vmatpush1.msra.mxu0 0.0
    %1426 = vmatprep.subr.mxu0 0.0
    %1427 = vmatpush1.msra.mxu0 0.0
    %1428 = vmatprep.subr.mxu0 0.0
    %1429 = vmatpush1.msra.mxu0 0.0
    %1430 = vmatprep.subr.mxu0 0.0
    %1431 = vmatpush1.msra.mxu0 0.0
    %1432 = vmatprep.subr.mxu0 0.0
    %1433 = vmatpush1.msra.mxu0 0.0
    %1434 = vmatprep.subr.mxu0 0.0
    %1435 = vmatpush1.msra.mxu0 0.0
    %1436 = vmatprep.subr.mxu0 0.0
    %1437 = vmatpush1.msra.mxu0 0.0
    %1438 = vmatprep.subr.mxu0 0.0
    %1439 = vmatpush1.msra.mxu0 0.0
    %1440 = vmatprep.subr.mxu0 0.0
    %1441 = vmatpush1.msra.mxu0 0.0
    %1442 = vmatprep.subr.mxu0 0.0
    %1443 = vmatpush1.msra.mxu0 0.0
    %1444 = vmatprep.subr.mxu0 0.0
    %1445 = vmatpush1.msra.mxu0 0.0
    %1446 = vmatprep.subr.mxu0 0.0
    %1447 = vmatpush1.msra.mxu0 0.0
    %1448 = vmatprep.subr.mxu0 0.0
    %1449 = vmatpush1.msra.mxu0 0.0
    %1450 = vmatprep.subr.mxu0 0.0
    %1451 = vmatpush1.msra.mxu0 0.0
    %1452 = vmatprep.subr.mxu0 0.0
    %1453 = vmatpush1.msra.mxu0 0.0
    %1454 = vmatprep.subr.mxu0 0.0
    %1455 = vmatpush1.msra.mxu0 0.0
    %1456 = vmatprep.subr.mxu0 0.0
    %1457 = vmatpush1.msra.mxu0 0.0
    %1458 = vmatprep.subr.mxu0 0.0
    %1459 = vmatpush1.msra.mxu0 0.0
    %1460 = vmatprep.subr.mxu0 0.0
    %1461 = vmatpush1.msra.mxu0 0.0
    %1462 = vmatprep.subr.mxu0 0.0
    %1463 = vmatpush1.msra.mxu0 0.0
    %1464 = vmatprep.subr.mxu0 0.0
    %1465 = vmatpush1.msra.mxu0 0.0
    %1466 = vmatprep.subr.mxu0 0.0
    %1467 = vmatpush1.msra.mxu0 0.0
    %1468 = vmatprep.subr.mxu0 0.0
    %1469 = vmatpush1.msra.mxu0 0.0
    %1470 = vmatprep.subr.mxu0 0.0
    %1471 = vmatpush1.msra.mxu0 0.0
    %1472 = vmatprep.subr.mxu0 0.0
    %1473 = vmatpush1.msra.mxu0 0.0
    %1474 = vmatprep.mubr.f32.mxu0 0.0
    %1475 = vmatmul.mubr.f32.gmra.mrb[0].mxu0 %v1405
    %v1476 = vpop.f32.mrb[0].mxu0
    %v1477 = vadd.f32 %v1403, %v1476
    %v1478 = vpop.f32.mrb[0].mxu0
    %1479 = vmatprep.mubr.f32.mxu0 0.0
    %1480 = vmatmul.mubr.f32.gmra.mrb[0].mxu0 %v1408
    %v1481 = vpop.f32.mrb[0].mxu0
    %v1482 = vadd.f32 %v1403, %v1481
    %v1483 = vpop.f32.mrb[0].mxu0
    %1484 = vdwg.mxu0
    %v1485 = vmax.f32 %v1477, 0.0
    %v1486 = vmax.f32 %v1482, 0.0
    %vm1487 = vcmask 523264
    %v1489 = vsel %vm1487, %v1485, 0
    %v1492 = vsel %vm1487, %v1486, 0
    %1494 = vmatprep.subr.mxu0 0.0
    %1495 = vmatpush1.msra.mxu0 %v48
    %1496 = vmatprep.subr.mxu0 0.0
    %1497 = vmatpush1.msra.mxu0 %v49
    %1498 = vmatprep.subr.mxu0 0.0
    %1499 = vmatpush1.msra.mxu0 %v50
    %1500 = vmatprep.subr.mxu0 0.0
    %1501 = vmatpush1.msra.mxu0 %v51
    %1502 = vmatprep.subr.mxu0 0.0
    %1503 = vmatpush1.msra.mxu0 %v52
    %1504 = vmatprep.subr.mxu0 0.0
    %1505 = vmatpush1.msra.mxu0 %v53
    %1506 = vmatprep.subr.mxu0 0.0
    %1507 = vmatpush1.msra.mxu0 %v54
    %1508 = vmatprep.subr.mxu0 0.0
    %1509 = vmatpush1.msra.mxu0 %v55
    %1510 = vmatprep.subr.mxu0 0.0
    %1511 = vmatpush1.msra.mxu0 0.0
    %1512 = vmatprep.subr.mxu0 0.0
    %1513 = vmatpush1.msra.mxu0 0.0
    %1514 = vmatprep.subr.mxu0 0.0
    %1515 = vmatpush1.msra.mxu0 0.0
    %1516 = vmatprep.subr.mxu0 0.0
    %1517 = vmatpush1.msra.mxu0 0.0
    %1518 = vmatprep.subr.mxu0 0.0
    %1519 = vmatpush1.msra.mxu0 0.0
    %1520 = vmatprep.subr.mxu0 0.0
    %1521 = vmatpush1.msra.mxu0 0.0
    %1522 = vmatprep.subr.mxu0 0.0
    %1523 = vmatpush1.msra.mxu0 0.0
    %1524 = vmatprep.subr.mxu0 0.0
    %1525 = vmatpush1.msra.mxu0 0.0
    %1526 = vmatprep.subr.mxu0 0.0
    %1527 = vmatpush1.msra.mxu0 0.0
    %1528 = vmatprep.subr.mxu0 0.0
    %1529 = vmatpush1.msra.mxu0 0.0
    %1530 = vmatprep.subr.mxu0 0.0
    %1531 = vmatpush1.msra.mxu0 0.0
    %1532 = vmatprep.subr.mxu0 0.0
    %1533 = vmatpush1.msra.mxu0 0.0
    %1534 = vmatprep.subr.mxu0 0.0
    %1535 = vmatpush1.msra.mxu0 0.0
    %1536 = vmatprep.subr.mxu0 0.0
    %1537 = vmatpush1.msra.mxu0 0.0
    %1538 = vmatprep.subr.mxu0 0.0
    %1539 = vmatpush1.msra.mxu0 0.0
    %1540 = vmatprep.subr.mxu0 0.0
    %1541 = vmatpush1.msra.mxu0 0.0
    %1542 = vmatprep.subr.mxu0 0.0
    %1543 = vmatpush1.msra.mxu0 0.0
    %1544 = vmatprep.subr.mxu0 0.0
    %1545 = vmatpush1.msra.mxu0 0.0
    %1546 = vmatprep.subr.mxu0 0.0
    %1547 = vmatpush1.msra.mxu0 0.0
    %1548 = vmatprep.subr.mxu0 0.0
    %1549 = vmatpush1.msra.mxu0 0.0
    %1550 = vmatprep.subr.mxu0 0.0
    %1551 = vmatpush1.msra.mxu0 0.0
    %1552 = vmatprep.subr.mxu0 0.0
    %1553 = vmatpush1.msra.mxu0 0.0
    %1554 = vmatprep.subr.mxu0 0.0
    %1555 = vmatpush1.msra.mxu0 0.0
    %1556 = vmatprep.subr.mxu0 0.0
    %1557 = vmatpush1.msra.mxu0 0.0
    %1558 = vmatprep.mubr.f32.mxu0 0.0
    %1559 = vmatmul.mubr.f32.gmra.mrb[0].mxu0 %v1489
    %v1560 = vpop.f32.mrb[0].mxu0
    %v1561 = vadd.f32 0.0, %v1560
    %v1562 = vpop.f32.mrb[0].mxu0
    %1563 = vmatprep.mubr.f32.mxu0 0.0
    %1564 = vmatmul.mubr.f32.gmra.mrb[0].mxu0 %v1492
    %v1565 = vpop.f32.mrb[0].mxu0
    %v1566 = vadd.f32 0.0, %v1565
    %v1567 = vpop.f32.mrb[0].mxu0
    %1568 = vdwg.mxu0
    %v1569 = vadd.f32 %v1346, %v1561
    %v1570 = vadd.f32 %v1347, %v1566
    %v1571 = vlaneseq
    %v1572 = vshrl.u32 %v1571, 7
    %v1573 = vsub.s32 0, %v1572
    %v1574 = vrot.slane %v27, %v1573
    %v1575 = vadd.f32 %v1569, %v1574
    %v1576 = vadd.f32 %v1570, %v1574
    %v1577 = vld [vmem:[%s3 + $0x6] sm:$0x1]
    %v1578 = vld [vmem:[%s3 + $0x7] sm:$0x1]
    %v1579 = vld [vmem:[%s3 + $0x8] sm:$0x1]
    %v1580 = vld [vmem:[%s3 + $0x9] sm:$0x1]
    %v1581 = vld [vmem:[%s3 + $0xa] sm:$0x1]
    %v1582 = vld [vmem:[%s3 + $0xb] sm:$0x1]
    %s1583 = scalar_lea.vmem %s2, 256
    %v1584 = vld [vmem:[%s1583] sm:$0xff]
    %v1585 = vld [vmem:[%s1583 + $0x10] sm:$0xff]
    %v1586 = vld [vmem:[%s1583 + $0x20] sm:$0xff]
    %v1587 = vld [vmem:[%s1583 + $0x30] sm:$0xff]
    %v1588 = vld [vmem:[%s1583 + $0x40] sm:$0xff]
    %v1589 = vld [vmem:[%s1583 + $0x50] sm:$0xff]
    %v1590 = vld [vmem:[%s1583 + $0x60] sm:$0xff]
    %v1591 = vld [vmem:[%s1583 + $0x70] sm:$0xff]
    %v1592 = vld [vmem:[%s1583 + $0x80] sm:$0xff]
    %v1593 = vld [vmem:[%s1583 + $0x90] sm:$0xff]
    %v1594 = vld [vmem:[%s1583 + $0xa0] sm:$0xff]
    %v1595 = vld [vmem:[%s1583 + $0xb0] sm:$0xff]
    %v1596 = vld [vmem:[%s1583 + $0xc0] sm:$0xff]
    %v1597 = vld [vmem:[%s1583 + $0xd0] sm:$0xff]
    %v1598 = vld [vmem:[%s1583 + $0xe0] sm:$0xff]
    %v1599 = vld [vmem:[%s1583 + $0xf0] sm:$0xff]
    %v1600 = vld [vmem:[%s1583 + $0x8] sm:$0xff]
    %v1601 = vld [vmem:[%s1583 + $0x18] sm:$0xff]
    %v1602 = vld [vmem:[%s1583 + $0x28] sm:$0xff]
    %v1603 = vld [vmem:[%s1583 + $0x38] sm:$0xff]
    %v1604 = vld [vmem:[%s1583 + $0x48] sm:$0xff]
    %v1605 = vld [vmem:[%s1583 + $0x58] sm:$0xff]
    %v1606 = vld [vmem:[%s1583 + $0x68] sm:$0xff]
    %v1607 = vld [vmem:[%s1583 + $0x78] sm:$0xff]
    %v1608 = vld [vmem:[%s1583 + $0x88] sm:$0xff]
    %v1609 = vld [vmem:[%s1583 + $0x98] sm:$0xff]
    %v1610 = vld [vmem:[%s1583 + $0xa8] sm:$0xff]
    %v1611 = vld [vmem:[%s1583 + $0xb8] sm:$0xff]
    %v1612 = vsel %vm56, %v1575, 0.0
    %1613 = vadd.xlane.f32.xlu0 %v1612
    %v1614 = vpop.xlane.xlu0 %1613
    %v1615 = vsel %vm56, %v1576, 0.0
    %1616 = vadd.xlane.f32.xlu0 %v1615
    %v1617 = vpop.xlane.xlu0 %1616
    %v1618 = vmul.f32 %v1614, %v63
    %v1619 = vmul.f32 %v1617, %v63
    %v1620 = vsub.f32 %v1575, %v1618
    %v1621 = vsub.f32 %v1576, %v1619
    %v1622 = vmul.f32 %v1620, %v1620
    %v1623 = vmul.f32 %v1621, %v1621
    %v1624 = vsel %vm56, %v1622, 0.0
    %1625 = vadd.xlane.f32.xlu0 %v1624
    %v1626 = vpop.xlane.xlu0 %1625
    %v1627 = vsel %vm56, %v1623, 0.0
    %1628 = vadd.xlane.f32.xlu0 %v1627
    %v1629 = vpop.xlane.xlu0 %1628
    %v1630 = vmul.f32 %v1626, 0.032258064
    %v1631 = vmul.f32 %v1629, 0.032258064
    %v1632 = vrsqrt.pop %v1630
    %v1633 = vmul.f32 %v1630, %v1632
    %vm1634 = vcmp.eq.f32.partialorder %v1630, inf
    %v1635 = vsel %vm1634, %v1630, %v1633
    %vm1636 = vcmp.eq.f32.partialorder %v1630, 0.0
    %v1637 = vand.u32 %v1630, 2147483648
    %v1638 = vsel %vm1636, %v1637, %v1635
    %v1639 = vrsqrt.pop %v1631
    %v1640 = vmul.f32 %v1631, %v1639
    %vm1641 = vcmp.eq.f32.partialorder %v1631, inf
    %v1642 = vsel %vm1641, %v1631, %v1640
    %vm1643 = vcmp.eq.f32.partialorder %v1631, 0.0
    %v1644 = vand.u32 %v1631, 2147483648
    %v1645 = vsel %vm1643, %v1644, %v1642
    %v1646 = vadd.f32 %v1638, 1e-06
    %v1647 = vadd.f32 %v1645, 1e-06
    %v1648 = vrcp.pop %v1646
    %v1649 = vrcp.pop %v1647
    %v1650 = vlaneseq
    %v1651 = vshrl.u32 %v1650, 7
    %v1652 = vsub.s32 0, %v1651
    %v1653 = vrot.slane %v1577, %v1652
    %v1654 = vmul.f32 %v1653, %v1620
    %v1655 = vmul.f32 %v1653, %v1621
    %v1656 = vmul.f32 %v1654, %v1648
    %v1657 = vmul.f32 %v1655, %v1649
    %v1658 = vlaneseq
    %v1659 = vshrl.u32 %v1658, 7
    %v1660 = vsub.s32 0, %v1659
    %v1661 = vrot.slane %v1578, %v1660
    %v1662 = vadd.f32 %v1656, %v1661
    %v1663 = vadd.f32 %v1657, %v1661
    %1665 = vset.pattern.permute.xlu0 32
    %1666 = vperm.xlu0 %1665, %v1584
    %v1667 = vpop.permute.xlu0 %1666
    %1670 = vset.pattern.permute.xlu0 32
    %1671 = vperm.xlu0 %1670, %v1585
    %v1672 = vpop.permute.xlu0 %1671
    %1675 = vset.pattern.permute.xlu0 32
    %1676 = vperm.xlu0 %1675, %v1586
    %v1677 = vpop.permute.xlu0 %1676
    %1680 = vset.pattern.permute.xlu0 32
    %1681 = vperm.xlu0 %1680, %v1587
    %v1682 = vpop.permute.xlu0 %1681
    %1685 = vset.pattern.permute.xlu0 32
    %1686 = vperm.xlu0 %1685, %v1588
    %v1687 = vpop.permute.xlu0 %1686
    %1690 = vset.pattern.permute.xlu0 32
    %1691 = vperm.xlu0 %1690, %v1589
    %v1692 = vpop.permute.xlu0 %1691
    %1695 = vset.pattern.permute.xlu0 32
    %1696 = vperm.xlu0 %1695, %v1590
    %v1697 = vpop.permute.xlu0 %1696
    %1700 = vset.pattern.permute.xlu0 32
    %1701 = vperm.xlu0 %1700, %v1591
    %v1702 = vpop.permute.xlu0 %1701
    %1705 = vset.pattern.permute.xlu0 32
    %1706 = vperm.xlu0 %1705, %v1592
    %v1707 = vpop.permute.xlu0 %1706
    %1710 = vset.pattern.permute.xlu0 32
    %1711 = vperm.xlu0 %1710, %v1593
    %v1712 = vpop.permute.xlu0 %1711
    %1715 = vset.pattern.permute.xlu0 32
    %1716 = vperm.xlu0 %1715, %v1594
    %v1717 = vpop.permute.xlu0 %1716
    %1720 = vset.pattern.permute.xlu0 32
    %1721 = vperm.xlu0 %1720, %v1595
    %v1722 = vpop.permute.xlu0 %1721
    %v1724 = vsel %vm56, %v1584, 0
    %v1726 = vsel %vm56, %v1585, 0
    %v1728 = vsel %vm56, %v1586, 0
    %v1730 = vsel %vm56, %v1587, 0
    %v1732 = vsel %vm56, %v1588, 0
    %v1734 = vsel %vm56, %v1589, 0
    %v1736 = vsel %vm56, %v1590, 0
    %v1738 = vsel %vm56, %v1591, 0
    %v1740 = vsel %vm56, %v1592, 0
    %v1742 = vsel %vm56, %v1593, 0
    %v1744 = vsel %vm56, %v1594, 0
    %v1746 = vsel %vm56, %v1595, 0
    %v1749 = vsel %vm56, %v1662, 0
    %v1752 = vsel %vm56, %v1663, 0
    %1754 = vmatprep.subr.mxu0 0.0
    %1755 = vmatpush1.xpose.msra.mxu0 %v1749
    %1756 = vmatprep.subr.mxu0 0.0
    %1757 = vmatpush1.xpose.msra.mxu0 %v1752
    %1758 = vmatprep.subr.mxu0 0.0
    %1759 = vmatpush1.xpose.msra.mxu0 0.0
    %1760 = vmatprep.subr.mxu0 0.0
    %1761 = vmatpush1.xpose.msra.mxu0 0.0
    %1762 = vmatprep.subr.mxu0 0.0
    %1763 = vmatpush1.xpose.msra.mxu0 0.0
    %1764 = vmatprep.subr.mxu0 0.0
    %1765 = vmatpush1.xpose.msra.mxu0 0.0
    %1766 = vmatprep.subr.mxu0 0.0
    %1767 = vmatpush1.xpose.msra.mxu0 0.0
    %1768 = vmatprep.subr.mxu0 0.0
    %1769 = vmatpush1.xpose.msra.mxu0 0.0
    %1770 = vmatprep.subr.mxu0 0.0
    %1771 = vmatpush1.xpose.msra.mxu0 0.0
    %1772 = vmatprep.subr.mxu0 0.0
    %1773 = vmatpush1.xpose.msra.mxu0 0.0
    %1774 = vmatprep.subr.mxu0 0.0
    %1775 = vmatpush1.xpose.msra.mxu0 0.0
    %1776 = vmatprep.subr.mxu0 0.0
    %1777 = vmatpush1.xpose.msra.mxu0 0.0
    %1778 = vmatprep.subr.mxu0 0.0
    %1779 = vmatpush1.xpose.msra.mxu0 0.0
    %1780 = vmatprep.subr.mxu0 0.0
    %1781 = vmatpush1.xpose.msra.mxu0 0.0
    %1782 = vmatprep.subr.mxu0 0.0
    %1783 = vmatpush1.xpose.msra.mxu0 0.0
    %1784 = vmatprep.subr.mxu0 0.0
    %1785 = vmatpush1.xpose.msra.mxu0 0.0
    %1786 = vmatprep.subr.mxu0 0.0
    %1787 = vmatpush1.xpose.msra.mxu0 0.0
    %1788 = vmatprep.subr.mxu0 0.0
    %1789 = vmatpush1.xpose.msra.mxu0 0.0
    %1790 = vmatprep.subr.mxu0 0.0
    %1791 = vmatpush1.xpose.msra.mxu0 0.0
    %1792 = vmatprep.subr.mxu0 0.0
    %1793 = vmatpush1.xpose.msra.mxu0 0.0
    %1794 = vmatprep.subr.mxu0 0.0
    %1795 = vmatpush1.xpose.msra.mxu0 0.0
    %1796 = vmatprep.subr.mxu0 0.0
    %1797 = vmatpush1.xpose.msra.mxu0 0.0
    %1798 = vmatprep.subr.mxu0 0.0
    %1799 = vmatpush1.xpose.msra.mxu0 0.0
    %1800 = vmatprep.subr.mxu0 0.0
    %1801 = vmatpush1.xpose.msra.mxu0 0.0
    %1802 = vmatprep.subr.mxu0 0.0
    %1803 = vmatpush1.xpose.msra.mxu0 0.0
    %1804 = vmatprep.subr.mxu0 0.0
    %1805 = vmatpush1.xpose.msra.mxu0 0.0
    %1806 = vmatprep.subr.mxu0 0.0
    %1807 = vmatpush1.xpose.msra.mxu0 0.0
    %1808 = vmatprep.subr.mxu0 0.0
    %1809 = vmatpush1.xpose.msra.mxu0 0.0
    %1810 = vmatprep.subr.mxu0 0.0
    %1811 = vmatpush1.xpose.msra.mxu0 0.0
    %1812 = vmatprep.subr.mxu0 0.0
    %1813 = vmatpush1.xpose.msra.mxu0 0.0
    %1814 = vmatprep.subr.mxu0 0.0
    %1815 = vmatpush1.xpose.msra.mxu0 0.0
    %1816 = vmatprep.subr.mxu0 0.0
    %1817 = vmatpush1.xpose.msra.mxu0 0.0
    %1818 = vmatprep.mubr.f32.mxu0 0.0
    %1819 = vmatmul.mubr.f32.gmra.mrb[0].mxu0 %v1724
    %v1820 = vpop.f32.mrb[0].mxu0
    %v1821 = vadd.f32 %v1667, %v1820
    %v1822 = vpop.f32.mrb[0].mxu0
    %1823 = vmatprep.mubr.f32.mxu0 0.0
    %1824 = vmatmul.mubr.f32.gmra.mrb[0].mxu0 %v1726
    %v1825 = vpop.f32.mrb[0].mxu0
    %v1826 = vadd.f32 %v1672, %v1825
    %v1827 = vpop.f32.mrb[0].mxu0
    %1828 = vmatprep.mubr.f32.mxu0 0.0
    %1829 = vmatmul.mubr.f32.gmra.mrb[0].mxu0 %v1728
    %v1830 = vpop.f32.mrb[0].mxu0
    %v1831 = vadd.f32 %v1677, %v1830
    %v1832 = vpop.f32.mrb[0].mxu0
    %1833 = vmatprep.mubr.f32.mxu0 0.0
    %1834 = vmatmul.mubr.f32.gmra.mrb[0].mxu0 %v1730
    %v1835 = vpop.f32.mrb[0].mxu0
    %v1836 = vadd.f32 %v1682, %v1835
    %v1837 = vpop.f32.mrb[0].mxu0
    %1838 = vmatprep.mubr.f32.mxu0 0.0
    %1839 = vmatmul.mubr.f32.gmra.mrb[0].mxu0 %v1732
    %v1840 = vpop.f32.mrb[0].mxu0
    %v1841 = vadd.f32 %v1687, %v1840
    %v1842 = vpop.f32.mrb[0].mxu0
    %1843 = vmatprep.mubr.f32.mxu0 0.0
    %1844 = vmatmul.mubr.f32.gmra.mrb[0].mxu0 %v1734
    %v1845 = vpop.f32.mrb[0].mxu0
    %v1846 = vadd.f32 %v1692, %v1845
    %v1847 = vpop.f32.mrb[0].mxu0
    %1848 = vmatprep.mubr.f32.mxu0 0.0
    %1849 = vmatmul.mubr.f32.gmra.mrb[0].mxu0 %v1736
    %v1850 = vpop.f32.mrb[0].mxu0
    %v1851 = vadd.f32 %v1697, %v1850
    %v1852 = vpop.f32.mrb[0].mxu0
    %1853 = vmatprep.mubr.f32.mxu0 0.0
    %1854 = vmatmul.mubr.f32.gmra.mrb[0].mxu0 %v1738
    %v1855 = vpop.f32.mrb[0].mxu0
    %v1856 = vadd.f32 %v1702, %v1855
    %v1857 = vpop.f32.mrb[0].mxu0
    %1858 = vmatprep.mubr.f32.mxu0 0.0
    %1859 = vmatmul.mubr.f32.gmra.mrb[0].mxu0 %v1740
    %v1860 = vpop.f32.mrb[0].mxu0
    %v1861 = vadd.f32 %v1707, %v1860
    %v1862 = vpop.f32.mrb[0].mxu0
    %1863 = vmatprep.mubr.f32.mxu0 0.0
    %1864 = vmatmul.mubr.f32.gmra.mrb[0].mxu0 %v1742
    %v1865 = vpop.f32.mrb[0].mxu0
    %v1866 = vadd.f32 %v1712, %v1865
    %v1867 = vpop.f32.mrb[0].mxu0
    %1868 = vmatprep.mubr.f32.mxu0 0.0
    %1869 = vmatmul.mubr.f32.gmra.mrb[0].mxu0 %v1744
    %v1870 = vpop.f32.mrb[0].mxu0
    %v1871 = vadd.f32 %v1717, %v1870
    %v1872 = vpop.f32.mrb[0].mxu0
    %1873 = vmatprep.mubr.f32.mxu0 0.0
    %1874 = vmatmul.mubr.f32.gmra.mrb[0].mxu0 %v1746
    %v1875 = vpop.f32.mrb[0].mxu0
    %v1876 = vadd.f32 %v1722, %v1875
    %v1877 = vpop.f32.mrb[0].mxu0
    %1878 = vdwg.mxu0
    %1879 = vxpose.xlu0.b32.start [1/16] %v1821, 128
    %1880 = vxpose.xlu0.b32.cont [2/16] 0.0, 128
    %1881 = vxpose.xlu0.b32.cont [3/16] 0.0, 128
    %1882 = vxpose.xlu0.b32.cont [4/16] 0.0, 128
    %1883 = vxpose.xlu0.b32.cont [5/16] 0.0, 128
    %1884 = vxpose.xlu0.b32.cont [6/16] 0.0, 128
    %1885 = vxpose.xlu0.b32.cont [7/16] 0.0, 128
    %1886 = vxpose.xlu0.b32.cont [8/16] 0.0, 128
    %1887 = vxpose.xlu0.b32.cont [9/16] 0.0, 128
    %1888 = vxpose.xlu0.b32.cont [10/16] 0.0, 128
    %1889 = vxpose.xlu0.b32.cont [11/16] 0.0, 128
    %1890 = vxpose.xlu0.b32.cont [12/16] 0.0, 128
    %1891 = vxpose.xlu0.b32.cont [13/16] 0.0, 128
    %1892 = vxpose.xlu0.b32.cont [14/16] 0.0, 128
    %1893 = vxpose.xlu0.b32.cont [15/16] 0.0, 128
    %1894 = vxpose.xlu0.b32.end [16/16] 0.0, 128
    %v1895 = vpop.trf.xlu0
    %v1896 = vpop.trf.xlu0
    %v1897 = vpop.trf.xlu0
    %v1898 = vpop.trf.xlu0
    %v1899 = vpop.trf.xlu0
    %v1900 = vpop.trf.xlu0
    %v1901 = vpop.trf.xlu0
    %v1902 = vpop.trf.xlu0
    %v1903 = vpop.trf.xlu0
    %v1904 = vpop.trf.xlu0
    %v1905 = vpop.trf.xlu0
    %v1906 = vpop.trf.xlu0
    %v1907 = vpop.trf.xlu0
    %v1908 = vpop.trf.xlu0
    %v1909 = vpop.trf.xlu0
    %v1910 = vpop.trf.xlu0
    %1911 = vxpose.xlu0.b32.start [1/16] %v1826, 128
    %1912 = vxpose.xlu0.b32.cont [2/16] 0.0, 128
    %1913 = vxpose.xlu0.b32.cont [3/16] 0.0, 128
    %1914 = vxpose.xlu0.b32.cont [4/16] 0.0, 128
    %1915 = vxpose.xlu0.b32.cont [5/16] 0.0, 128
    %1916 = vxpose.xlu0.b32.cont [6/16] 0.0, 128
    %1917 = vxpose.xlu0.b32.cont [7/16] 0.0, 128
    %1918 = vxpose.xlu0.b32.cont [8/16] 0.0, 128
    %1919 = vxpose.xlu0.b32.cont [9/16] 0.0, 128
    %1920 = vxpose.xlu0.b32.cont [10/16] 0.0, 128
    %1921 = vxpose.xlu0.b32.cont [11/16] 0.0, 128
    %1922 = vxpose.xlu0.b32.cont [12/16] 0.0, 128
    %1923 = vxpose.xlu0.b32.cont [13/16] 0.0, 128
    %1924 = vxpose.xlu0.b32.cont [14/16] 0.0, 128
    %1925 = vxpose.xlu0.b32.cont [15/16] 0.0, 128
    %1926 = vxpose.xlu0.b32.end [16/16] 0.0, 128
    %v1927 = vpop.trf.xlu0
    %v1928 = vpop.trf.xlu0
    %v1929 = vpop.trf.xlu0
    %v1930 = vpop.trf.xlu0
    %v1931 = vpop.trf.xlu0
    %v1932 = vpop.trf.xlu0
    %v1933 = vpop.trf.xlu0
    %v1934 = vpop.trf.xlu0
    %v1935 = vpop.trf.xlu0
    %v1936 = vpop.trf.xlu0
    %v1937 = vpop.trf.xlu0
    %v1938 = vpop.trf.xlu0
    %v1939 = vpop.trf.xlu0
    %v1940 = vpop.trf.xlu0
    %v1941 = vpop.trf.xlu0
    %v1942 = vpop.trf.xlu0
    %1943 = vxpose.xlu0.b32.start [1/16] %v1831, 128
    %1944 = vxpose.xlu0.b32.cont [2/16] 0.0, 128
    %1945 = vxpose.xlu0.b32.cont [3/16] 0.0, 128
    %1946 = vxpose.xlu0.b32.cont [4/16] 0.0, 128
    %1947 = vxpose.xlu0.b32.cont [5/16] 0.0, 128
    %1948 = vxpose.xlu0.b32.cont [6/16] 0.0, 128
    %1949 = vxpose.xlu0.b32.cont [7/16] 0.0, 128
    %1950 = vxpose.xlu0.b32.cont [8/16] 0.0, 128
    %1951 = vxpose.xlu0.b32.cont [9/16] 0.0, 128
    %1952 = vxpose.xlu0.b32.cont [10/16] 0.0, 128
    %1953 = vxpose.xlu0.b32.cont [11/16] 0.0, 128
    %1954 = vxpose.xlu0.b32.cont [12/16] 0.0, 128
    %1955 = vxpose.xlu0.b32.cont [13/16] 0.0, 128
    %1956 = vxpose.xlu0.b32.cont [14/16] 0.0, 128
    %1957 = vxpose.xlu0.b32.cont [15/16] 0.0, 128
    %1958 = vxpose.xlu0.b32.end [16/16] 0.0, 128
    %v1959 = vpop.trf.xlu0
    %v1960 = vpop.trf.xlu0
    %v1961 = vpop.trf.xlu0
    %v1962 = vpop.trf.xlu0
    %v1963 = vpop.trf.xlu0
    %v1964 = vpop.trf.xlu0
    %v1965 = vpop.trf.xlu0
    %v1966 = vpop.trf.xlu0
    %v1967 = vpop.trf.xlu0
    %v1968 = vpop.trf.xlu0
    %v1969 = vpop.trf.xlu0
    %v1970 = vpop.trf.xlu0
    %v1971 = vpop.trf.xlu0
    %v1972 = vpop.trf.xlu0
    %v1973 = vpop.trf.xlu0
    %v1974 = vpop.trf.xlu0
    %1975 = vxpose.xlu0.b32.start [1/16] %v1836, 128
    %1976 = vxpose.xlu0.b32.cont [2/16] 0.0, 128
    %1977 = vxpose.xlu0.b32.cont [3/16] 0.0, 128
    %1978 = vxpose.xlu0.b32.cont [4/16] 0.0, 128
    %1979 = vxpose.xlu0.b32.cont [5/16] 0.0, 128
    %1980 = vxpose.xlu0.b32.cont [6/16] 0.0, 128
    %1981 = vxpose.xlu0.b32.cont [7/16] 0.0, 128
    %1982 = vxpose.xlu0.b32.cont [8/16] 0.0, 128
    %1983 = vxpose.xlu0.b32.cont [9/16] 0.0, 128
    %1984 = vxpose.xlu0.b32.cont [10/16] 0.0, 128
    %1985 = vxpose.xlu0.b32.cont [11/16] 0.0, 128
    %1986 = vxpose.xlu0.b32.cont [12/16] 0.0, 128
    %1987 = vxpose.xlu0.b32.cont [13/16] 0.0, 128
    %1988 = vxpose.xlu0.b32.cont [14/16] 0.0, 128
    %1989 = vxpose.xlu0.b32.cont [15/16] 0.0, 128
    %1990 = vxpose.xlu0.b32.end [16/16] 0.0, 128
    %v1991 = vpop.trf.xlu0
    %v1992 = vpop.trf.xlu0
    %v1993 = vpop.trf.xlu0
    %v1994 = vpop.trf.xlu0
    %v1995 = vpop.trf.xlu0
    %v1996 = vpop.trf.xlu0
    %v1997 = vpop.trf.xlu0
    %v1998 = vpop.trf.xlu0
    %v1999 = vpop.trf.xlu0
    %v2000 = vpop.trf.xlu0
    %v2001 = vpop.trf.xlu0
    %v2002 = vpop.trf.xlu0
    %v2003 = vpop.trf.xlu0
    %v2004 = vpop.trf.xlu0
    %v2005 = vpop.trf.xlu0
    %v2006 = vpop.trf.xlu0
    %v2008 = vsel %vm453, %v1895, 0
    %v2011 = vsel %vm453, %v1896, 0
    %2013 = vmatprep.subr.mxu0 0.0
    %2014 = vmatpush1.msra.mxu0 %v1841
    %2015 = vmatprep.subr.mxu0 0.0
    %2016 = vmatpush1.msra.mxu0 0.0
    %2017 = vmatprep.subr.mxu0 0.0
    %2018 = vmatpush1.msra.mxu0 0.0
    %2019 = vmatprep.subr.mxu0 0.0
    %2020 = vmatpush1.msra.mxu0 0.0
    %2021 = vmatprep.subr.mxu0 0.0
    %2022 = vmatpush1.msra.mxu0 0.0
    %2023 = vmatprep.subr.mxu0 0.0
    %2024 = vmatpush1.msra.mxu0 0.0
    %2025 = vmatprep.subr.mxu0 0.0
    %2026 = vmatpush1.msra.mxu0 0.0
    %2027 = vmatprep.subr.mxu0 0.0
    %2028 = vmatpush1.msra.mxu0 0.0
    %2029 = vmatprep.subr.mxu0 0.0
    %2030 = vmatpush1.msra.mxu0 0.0
    %2031 = vmatprep.subr.mxu0 0.0
    %2032 = vmatpush1.msra.mxu0 0.0
    %2033 = vmatprep.subr.mxu0 0.0
    %2034 = vmatpush1.msra.mxu0 0.0
    %2035 = vmatprep.subr.mxu0 0.0
    %2036 = vmatpush1.msra.mxu0 0.0
    %2037 = vmatprep.subr.mxu0 0.0
    %2038 = vmatpush1.msra.mxu0 0.0
    %2039 = vmatprep.subr.mxu0 0.0
    %2040 = vmatpush1.msra.mxu0 0.0
    %2041 = vmatprep.subr.mxu0 0.0
    %2042 = vmatpush1.msra.mxu0 0.0
    %2043 = vmatprep.subr.mxu0 0.0
    %2044 = vmatpush1.msra.mxu0 0.0
    %2045 = vmatprep.subr.mxu0 0.0
    %2046 = vmatpush1.msra.mxu0 0.0
    %2047 = vmatprep.subr.mxu0 0.0
    %2048 = vmatpush1.msra.mxu0 0.0
    %2049 = vmatprep.subr.mxu0 0.0
    %2050 = vmatpush1.msra.mxu0 0.0
    %2051 = vmatprep.subr.mxu0 0.0
    %2052 = vmatpush1.msra.mxu0 0.0
    %2053 = vmatprep.subr.mxu0 0.0
    %2054 = vmatpush1.msra.mxu0 0.0
    %2055 = vmatprep.subr.mxu0 0.0
    %2056 = vmatpush1.msra.mxu0 0.0
    %2057 = vmatprep.subr.mxu0 0.0
    %2058 = vmatpush1.msra.mxu0 0.0
    %2059 = vmatprep.subr.mxu0 0.0
    %2060 = vmatpush1.msra.mxu0 0.0
    %2061 = vmatprep.subr.mxu0 0.0
    %2062 = vmatpush1.msra.mxu0 0.0
    %2063 = vmatprep.subr.mxu0 0.0
    %2064 = vmatpush1.msra.mxu0 0.0
    %2065 = vmatprep.subr.mxu0 0.0
    %2066 = vmatpush1.msra.mxu0 0.0
    %2067 = vmatprep.subr.mxu0 0.0
    %2068 = vmatpush1.msra.mxu0 0.0
    %2069 = vmatprep.subr.mxu0 0.0
    %2070 = vmatpush1.msra.mxu0 0.0
    %2071 = vmatprep.subr.mxu0 0.0
    %2072 = vmatpush1.msra.mxu0 0.0
    %2073 = vmatprep.subr.mxu0 0.0
    %2074 = vmatpush1.msra.mxu0 0.0
    %2075 = vmatprep.subr.mxu0 0.0
    %2076 = vmatpush1.msra.mxu0 0.0
    %2077 = vmatprep.mubr.f32.mxu0 0.0
    %2078 = vmatmul.mubr.f32.gmra.mrb[0].mxu0 %v2008
    %v2079 = vpop.f32.mrb[0].mxu0
    %v2080 = vadd.f32 0.0, %v2079
    %v2081 = vpop.f32.mrb[0].mxu0
    %2082 = vmatprep.mubr.f32.mxu0 0.0
    %2083 = vmatmul.mubr.f32.gmra.mrb[0].mxu0 %v2011
    %v2084 = vpop.f32.mrb[0].mxu0
    %v2085 = vadd.f32 0.0, %v2084
    %v2086 = vpop.f32.mrb[0].mxu0
    %2087 = vdwg.mxu0
    %v2089 = vsel %vm453, %v1927, 0
    %v2092 = vsel %vm453, %v1928, 0
    %2094 = vmatprep.subr.mxu0 0.0
    %2095 = vmatpush1.msra.mxu0 %v1846
    %2096 = vmatprep.subr.mxu0 0.0
    %2097 = vmatpush1.msra.mxu0 0.0
    %2098 = vmatprep.subr.mxu0 0.0
    %2099 = vmatpush1.msra.mxu0 0.0
    %2100 = vmatprep.subr.mxu0 0.0
    %2101 = vmatpush1.msra.mxu0 0.0
    %2102 = vmatprep.subr.mxu0 0.0
    %2103 = vmatpush1.msra.mxu0 0.0
    %2104 = vmatprep.subr.mxu0 0.0
    %2105 = vmatpush1.msra.mxu0 0.0
    %2106 = vmatprep.subr.mxu0 0.0
    %2107 = vmatpush1.msra.mxu0 0.0
    %2108 = vmatprep.subr.mxu0 0.0
    %2109 = vmatpush1.msra.mxu0 0.0
    %2110 = vmatprep.subr.mxu0 0.0
    %2111 = vmatpush1.msra.mxu0 0.0
    %2112 = vmatprep.subr.mxu0 0.0
    %2113 = vmatpush1.msra.mxu0 0.0
    %2114 = vmatprep.subr.mxu0 0.0
    %2115 = vmatpush1.msra.mxu0 0.0
    %2116 = vmatprep.subr.mxu0 0.0
    %2117 = vmatpush1.msra.mxu0 0.0
    %2118 = vmatprep.subr.mxu0 0.0
    %2119 = vmatpush1.msra.mxu0 0.0
    %2120 = vmatprep.subr.mxu0 0.0
    %2121 = vmatpush1.msra.mxu0 0.0
    %2122 = vmatprep.subr.mxu0 0.0
    %2123 = vmatpush1.msra.mxu0 0.0
    %2124 = vmatprep.subr.mxu0 0.0
    %2125 = vmatpush1.msra.mxu0 0.0
    %2126 = vmatprep.subr.mxu0 0.0
    %2127 = vmatpush1.msra.mxu0 0.0
    %2128 = vmatprep.subr.mxu0 0.0
    %2129 = vmatpush1.msra.mxu0 0.0
    %2130 = vmatprep.subr.mxu0 0.0
    %2131 = vmatpush1.msra.mxu0 0.0
    %2132 = vmatprep.subr.mxu0 0.0
    %2133 = vmatpush1.msra.mxu0 0.0
    %2134 = vmatprep.subr.mxu0 0.0
    %2135 = vmatpush1.msra.mxu0 0.0
    %2136 = vmatprep.subr.mxu0 0.0
    %2137 = vmatpush1.msra.mxu0 0.0
    %2138 = vmatprep.subr.mxu0 0.0
    %2139 = vmatpush1.msra.mxu0 0.0
    %2140 = vmatprep.subr.mxu0 0.0
    %2141 = vmatpush1.msra.mxu0 0.0
    %2142 = vmatprep.subr.mxu0 0.0
    %2143 = vmatpush1.msra.mxu0 0.0
    %2144 = vmatprep.subr.mxu0 0.0
    %2145 = vmatpush1.msra.mxu0 0.0
    %2146 = vmatprep.subr.mxu0 0.0
    %2147 = vmatpush1.msra.mxu0 0.0
    %2148 = vmatprep.subr.mxu0 0.0
    %2149 = vmatpush1.msra.mxu0 0.0
    %2150 = vmatprep.subr.mxu0 0.0
    %2151 = vmatpush1.msra.mxu0 0.0
    %2152 = vmatprep.subr.mxu0 0.0
    %2153 = vmatpush1.msra.mxu0 0.0
    %2154 = vmatprep.subr.mxu0 0.0
    %2155 = vmatpush1.msra.mxu0 0.0
    %2156 = vmatprep.subr.mxu0 0.0
    %2157 = vmatpush1.msra.mxu0 0.0
    %2158 = vmatprep.mubr.f32.mxu0 0.0
    %2159 = vmatmul.mubr.f32.gmra.mrb[0].mxu0 %v2089
    %v2160 = vpop.f32.mrb[0].mxu0
    %v2161 = vadd.f32 0.0, %v2160
    %v2162 = vpop.f32.mrb[0].mxu0
    %2163 = vmatprep.mubr.f32.mxu0 0.0
    %2164 = vmatmul.mubr.f32.gmra.mrb[0].mxu0 %v2092
    %v2165 = vpop.f32.mrb[0].mxu0
    %v2166 = vadd.f32 0.0, %v2165
    %v2167 = vpop.f32.mrb[0].mxu0
    %2168 = vdwg.mxu0
    %v2170 = vsel %vm453, %v1959, 0
    %v2173 = vsel %vm453, %v1960, 0
    %2175 = vmatprep.subr.mxu0 0.0
    %2176 = vmatpush1.msra.mxu0 %v1851
    %2177 = vmatprep.subr.mxu0 0.0
    %2178 = vmatpush1.msra.mxu0 0.0
    %2179 = vmatprep.subr.mxu0 0.0
    %2180 = vmatpush1.msra.mxu0 0.0
    %2181 = vmatprep.subr.mxu0 0.0
    %2182 = vmatpush1.msra.mxu0 0.0
    %2183 = vmatprep.subr.mxu0 0.0
    %2184 = vmatpush1.msra.mxu0 0.0
    %2185 = vmatprep.subr.mxu0 0.0
    %2186 = vmatpush1.msra.mxu0 0.0
    %2187 = vmatprep.subr.mxu0 0.0
    %2188 = vmatpush1.msra.mxu0 0.0
    %2189 = vmatprep.subr.mxu0 0.0
    %2190 = vmatpush1.msra.mxu0 0.0
    %2191 = vmatprep.subr.mxu0 0.0
    %2192 = vmatpush1.msra.mxu0 0.0
    %2193 = vmatprep.subr.mxu0 0.0
    %2194 = vmatpush1.msra.mxu0 0.0
    %2195 = vmatprep.subr.mxu0 0.0
    %2196 = vmatpush1.msra.mxu0 0.0
    %2197 = vmatprep.subr.mxu0 0.0
    %2198 = vmatpush1.msra.mxu0 0.0
    %2199 = vmatprep.subr.mxu0 0.0
    %2200 = vmatpush1.msra.mxu0 0.0
    %2201 = vmatprep.subr.mxu0 0.0
    %2202 = vmatpush1.msra.mxu0 0.0
    %2203 = vmatprep.subr.mxu0 0.0
    %2204 = vmatpush1.msra.mxu0 0.0
    %2205 = vmatprep.subr.mxu0 0.0
    %2206 = vmatpush1.msra.mxu0 0.0
    %2207 = vmatprep.subr.mxu0 0.0
    %2208 = vmatpush1.msra.mxu0 0.0
    %2209 = vmatprep.subr.mxu0 0.0
    %2210 = vmatpush1.msra.mxu0 0.0
    %2211 = vmatprep.subr.mxu0 0.0
    %2212 = vmatpush1.msra.mxu0 0.0
    %2213 = vmatprep.subr.mxu0 0.0
    %2214 = vmatpush1.msra.mxu0 0.0
    %2215 = vmatprep.subr.mxu0 0.0
    %2216 = vmatpush1.msra.mxu0 0.0
    %2217 = vmatprep.subr.mxu0 0.0
    %2218 = vmatpush1.msra.mxu0 0.0
    %2219 = vmatprep.subr.mxu0 0.0
    %2220 = vmatpush1.msra.mxu0 0.0
    %2221 = vmatprep.subr.mxu0 0.0
    %2222 = vmatpush1.msra.mxu0 0.0
    %2223 = vmatprep.subr.mxu0 0.0
    %2224 = vmatpush1.msra.mxu0 0.0
    %2225 = vmatprep.subr.mxu0 0.0
    %2226 = vmatpush1.msra.mxu0 0.0
    %2227 = vmatprep.subr.mxu0 0.0
    %2228 = vmatpush1.msra.mxu0 0.0
    %2229 = vmatprep.subr.mxu0 0.0
    %2230 = vmatpush1.msra.mxu0 0.0
    %2231 = vmatprep.subr.mxu0 0.0
    %2232 = vmatpush1.msra.mxu0 0.0
    %2233 = vmatprep.subr.mxu0 0.0
    %2234 = vmatpush1.msra.mxu0 0.0
    %2235 = vmatprep.subr.mxu0 0.0
    %2236 = vmatpush1.msra.mxu0 0.0
    %2237 = vmatprep.subr.mxu0 0.0
    %2238 = vmatpush1.msra.mxu0 0.0
    %2239 = vmatprep.mubr.f32.mxu0 0.0
    %2240 = vmatmul.mubr.f32.gmra.mrb[0].mxu0 %v2170
    %v2241 = vpop.f32.mrb[0].mxu0
    %v2242 = vadd.f32 0.0, %v2241
    %v2243 = vpop.f32.mrb[0].mxu0
    %2244 = vmatprep.mubr.f32.mxu0 0.0
    %2245 = vmatmul.mubr.f32.gmra.mrb[0].mxu0 %v2173
    %v2246 = vpop.f32.mrb[0].mxu0
    %v2247 = vadd.f32 0.0, %v2246
    %v2248 = vpop.f32.mrb[0].mxu0
    %2249 = vdwg.mxu0
    %v2251 = vsel %vm453, %v1991, 0
    %v2254 = vsel %vm453, %v1992, 0
    %2256 = vmatprep.subr.mxu0 0.0
    %2257 = vmatpush1.msra.mxu0 %v1856
    %2258 = vmatprep.subr.mxu0 0.0
    %2259 = vmatpush1.msra.mxu0 0.0
    %2260 = vmatprep.subr.mxu0 0.0
    %2261 = vmatpush1.msra.mxu0 0.0
    %2262 = vmatprep.subr.mxu0 0.0
    %2263 = vmatpush1.msra.mxu0 0.0
    %2264 = vmatprep.subr.mxu0 0.0
    %2265 = vmatpush1.msra.mxu0 0.0
    %2266 = vmatprep.subr.mxu0 0.0
    %2267 = vmatpush1.msra.mxu0 0.0
    %2268 = vmatprep.subr.mxu0 0.0
    %2269 = vmatpush1.msra.mxu0 0.0
    %2270 = vmatprep.subr.mxu0 0.0
    %2271 = vmatpush1.msra.mxu0 0.0
    %2272 = vmatprep.subr.mxu0 0.0
    %2273 = vmatpush1.msra.mxu0 0.0
    %2274 = vmatprep.subr.mxu0 0.0
    %2275 = vmatpush1.msra.mxu0 0.0
    %2276 = vmatprep.subr.mxu0 0.0
    %2277 = vmatpush1.msra.mxu0 0.0
    %2278 = vmatprep.subr.mxu0 0.0
    %2279 = vmatpush1.msra.mxu0 0.0
    %2280 = vmatprep.subr.mxu0 0.0
    %2281 = vmatpush1.msra.mxu0 0.0
    %2282 = vmatprep.subr.mxu0 0.0
    %2283 = vmatpush1.msra.mxu0 0.0
    %2284 = vmatprep.subr.mxu0 0.0
    %2285 = vmatpush1.msra.mxu0 0.0
    %2286 = vmatprep.subr.mxu0 0.0
    %2287 = vmatpush1.msra.mxu0 0.0
    %2288 = vmatprep.subr.mxu0 0.0
    %2289 = vmatpush1.msra.mxu0 0.0
    %2290 = vmatprep.subr.mxu0 0.0
    %2291 = vmatpush1.msra.mxu0 0.0
    %2292 = vmatprep.subr.mxu0 0.0
    %2293 = vmatpush1.msra.mxu0 0.0
    %2294 = vmatprep.subr.mxu0 0.0
    %2295 = vmatpush1.msra.mxu0 0.0
    %2296 = vmatprep.subr.mxu0 0.0
    %2297 = vmatpush1.msra.mxu0 0.0
    %2298 = vmatprep.subr.mxu0 0.0
    %2299 = vmatpush1.msra.mxu0 0.0
    %2300 = vmatprep.subr.mxu0 0.0
    %2301 = vmatpush1.msra.mxu0 0.0
    %2302 = vmatprep.subr.mxu0 0.0
    %2303 = vmatpush1.msra.mxu0 0.0
    %2304 = vmatprep.subr.mxu0 0.0
    %2305 = vmatpush1.msra.mxu0 0.0
    %2306 = vmatprep.subr.mxu0 0.0
    %2307 = vmatpush1.msra.mxu0 0.0
    %2308 = vmatprep.subr.mxu0 0.0
    %2309 = vmatpush1.msra.mxu0 0.0
    %2310 = vmatprep.subr.mxu0 0.0
    %2311 = vmatpush1.msra.mxu0 0.0
    %2312 = vmatprep.subr.mxu0 0.0
    %2313 = vmatpush1.msra.mxu0 0.0
    %2314 = vmatprep.subr.mxu0 0.0
    %2315 = vmatpush1.msra.mxu0 0.0
    %2316 = vmatprep.subr.mxu0 0.0
    %2317 = vmatpush1.msra.mxu0 0.0
    %2318 = vmatprep.subr.mxu0 0.0
    %2319 = vmatpush1.msra.mxu0 0.0
    %2320 = vmatprep.mubr.f32.mxu0 0.0
    %2321 = vmatmul.mubr.f32.gmra.mrb[0].mxu0 %v2251
    %v2322 = vpop.f32.mrb[0].mxu0
    %v2323 = vadd.f32 0.0, %v2322
    %v2324 = vpop.f32.mrb[0].mxu0
    %2325 = vmatprep.mubr.f32.mxu0 0.0
    %2326 = vmatmul.mubr.f32.gmra.mrb[0].mxu0 %v2254
    %v2327 = vpop.f32.mrb[0].mxu0
    %v2328 = vadd.f32 0.0, %v2327
    %v2329 = vpop.f32.mrb[0].mxu0
    %2330 = vdwg.mxu0
    %v2331 = vmul.f32 %v2080, 0.35355338
    %v2332 = vmul.f32 %v2085, 0.35355338
    %v2333 = vmul.f32 %v2161, 0.35355338
    %v2334 = vmul.f32 %v2166, 0.35355338
    %v2335 = vmul.f32 %v2242, 0.35355338
    %v2336 = vmul.f32 %v2247, 0.35355338
    %v2337 = vmul.f32 %v2323, 0.35355338
    %v2338 = vmul.f32 %v2328, 0.35355338
    %v2339 = vsel %vm786, -1e+09, %v2331
    %v2340 = vsel %vm787, -1e+09, %v2332
    %v2341 = vsel %vm786, -1e+09, %v2333
    %v2342 = vsel %vm787, -1e+09, %v2334
    %v2343 = vsel %vm786, -1e+09, %v2335
    %v2344 = vsel %vm787, -1e+09, %v2336
    %v2345 = vsel %vm786, -1e+09, %v2337
    %v2346 = vsel %vm787, -1e+09, %v2338
    %v2347 = vsel %vm796, %v2339, -inf
    %2348 = vmax.xlane.f32.xlu0 %v2347
    %v2349 = vpop.xlane.xlu0 %2348
    %v2350 = vsel %vm796, %v2340, -inf
    %2351 = vmax.xlane.f32.xlu0 %v2350
    %v2352 = vpop.xlane.xlu0 %2351
    %v2353 = vsel %vm796, %v2341, -inf
    %2354 = vmax.xlane.f32.xlu0 %v2353
    %v2355 = vpop.xlane.xlu0 %2354
    %v2356 = vsel %vm796, %v2342, -inf
    %2357 = vmax.xlane.f32.xlu0 %v2356
    %v2358 = vpop.xlane.xlu0 %2357
    %v2359 = vsel %vm796, %v2343, -inf
    %2360 = vmax.xlane.f32.xlu0 %v2359
    %v2361 = vpop.xlane.xlu0 %2360
    %v2362 = vsel %vm796, %v2344, -inf
    %2363 = vmax.xlane.f32.xlu0 %v2362
    %v2364 = vpop.xlane.xlu0 %2363
    %v2365 = vsel %vm796, %v2345, -inf
    %2366 = vmax.xlane.f32.xlu0 %v2365
    %v2367 = vpop.xlane.xlu0 %2366
    %v2368 = vsel %vm796, %v2346, -inf
    %2369 = vmax.xlane.f32.xlu0 %v2368
    %v2370 = vpop.xlane.xlu0 %2369
    %v2371 = vsub.f32 %v2339, %v2349
    %v2372 = vsub.f32 %v2340, %v2352
    %v2373 = vsub.f32 %v2341, %v2355
    %v2374 = vsub.f32 %v2342, %v2358
    %v2375 = vsub.f32 %v2343, %v2361
    %v2376 = vsub.f32 %v2344, %v2364
    %v2377 = vsub.f32 %v2345, %v2367
    %v2378 = vsub.f32 %v2346, %v2370
    %v2379 = vmul.f32 %v2371, 1.442695
    %v2380 = vpow.pop %v2379
    %v2381 = vmul.f32 %v2372, 1.442695
    %v2382 = vpow.pop %v2381
    %v2383 = vmul.f32 %v2373, 1.442695
    %v2384 = vpow.pop %v2383
    %v2385 = vmul.f32 %v2374, 1.442695
    %v2386 = vpow.pop %v2385
    %v2387 = vmul.f32 %v2375, 1.442695
    %v2388 = vpow.pop %v2387
    %v2389 = vmul.f32 %v2376, 1.442695
    %v2390 = vpow.pop %v2389
    %v2391 = vmul.f32 %v2377, 1.442695
    %v2392 = vpow.pop %v2391
    %v2393 = vmul.f32 %v2378, 1.442695
    %v2394 = vpow.pop %v2393
    %v2395 = vsel %vm796, %v2380, 0.0
    %2396 = vadd.xlane.f32.xlu0 %v2395
    %v2397 = vpop.xlane.xlu0 %2396
    %v2398 = vsel %vm796, %v2382, 0.0
    %2399 = vadd.xlane.f32.xlu0 %v2398
    %v2400 = vpop.xlane.xlu0 %2399
    %v2401 = vsel %vm796, %v2384, 0.0
    %2402 = vadd.xlane.f32.xlu0 %v2401
    %v2403 = vpop.xlane.xlu0 %2402
    %v2404 = vsel %vm796, %v2386, 0.0
    %2405 = vadd.xlane.f32.xlu0 %v2404
    %v2406 = vpop.xlane.xlu0 %2405
    %v2407 = vsel %vm796, %v2388, 0.0
    %2408 = vadd.xlane.f32.xlu0 %v2407
    %v2409 = vpop.xlane.xlu0 %2408
    %v2410 = vsel %vm796, %v2390, 0.0
    %2411 = vadd.xlane.f32.xlu0 %v2410
    %v2412 = vpop.xlane.xlu0 %2411
    %v2413 = vsel %vm796, %v2392, 0.0
    %2414 = vadd.xlane.f32.xlu0 %v2413
    %v2415 = vpop.xlane.xlu0 %2414
    %v2416 = vsel %vm796, %v2394, 0.0
    %2417 = vadd.xlane.f32.xlu0 %v2416
    %v2418 = vpop.xlane.xlu0 %2417
    %v2419 = vrcp.pop %v2397
    %v2420 = vrcp.pop %v2400
    %v2421 = vrcp.pop %v2403
    %v2422 = vrcp.pop %v2406
    %v2423 = vrcp.pop %v2409
    %v2424 = vrcp.pop %v2412
    %v2425 = vrcp.pop %v2415
    %v2426 = vrcp.pop %v2418
    %v2427 = vmul.f32 %v2380, %v2419
    %v2428 = vmul.f32 %v2382, %v2420
    %v2429 = vmul.f32 %v2384, %v2421
    %v2430 = vmul.f32 %v2386, %v2422
    %v2431 = vmul.f32 %v2388, %v2423
    %v2432 = vmul.f32 %v2390, %v2424
    %v2433 = vmul.f32 %v2392, %v2425
    %v2434 = vmul.f32 %v2394, %v2426
    %v2436 = vsel %vm796, %v1861, 0
    %v2439 = vsel %vm796, %v2427, 0
    %v2442 = vsel %vm796, %v2428, 0
    %2444 = vmatprep.subr.mxu0 0.0
    %2445 = vmatpush1.xpose.msra.mxu0 %v2439
    %2446 = vmatprep.subr.mxu0 0.0
    %2447 = vmatpush1.xpose.msra.mxu0 %v2442
    %2448 = vmatprep.subr.mxu0 0.0
    %2449 = vmatpush1.xpose.msra.mxu0 0.0
    %2450 = vmatprep.subr.mxu0 0.0
    %2451 = vmatpush1.xpose.msra.mxu0 0.0
    %2452 = vmatprep.subr.mxu0 0.0
    %2453 = vmatpush1.xpose.msra.mxu0 0.0
    %2454 = vmatprep.subr.mxu0 0.0
    %2455 = vmatpush1.xpose.msra.mxu0 0.0
    %2456 = vmatprep.subr.mxu0 0.0
    %2457 = vmatpush1.xpose.msra.mxu0 0.0
    %2458 = vmatprep.subr.mxu0 0.0
    %2459 = vmatpush1.xpose.msra.mxu0 0.0
    %2460 = vmatprep.subr.mxu0 0.0
    %2461 = vmatpush1.xpose.msra.mxu0 0.0
    %2462 = vmatprep.subr.mxu0 0.0
    %2463 = vmatpush1.xpose.msra.mxu0 0.0
    %2464 = vmatprep.subr.mxu0 0.0
    %2465 = vmatpush1.xpose.msra.mxu0 0.0
    %2466 = vmatprep.subr.mxu0 0.0
    %2467 = vmatpush1.xpose.msra.mxu0 0.0
    %2468 = vmatprep.subr.mxu0 0.0
    %2469 = vmatpush1.xpose.msra.mxu0 0.0
    %2470 = vmatprep.subr.mxu0 0.0
    %2471 = vmatpush1.xpose.msra.mxu0 0.0
    %2472 = vmatprep.subr.mxu0 0.0
    %2473 = vmatpush1.xpose.msra.mxu0 0.0
    %2474 = vmatprep.subr.mxu0 0.0
    %2475 = vmatpush1.xpose.msra.mxu0 0.0
    %2476 = vmatprep.subr.mxu0 0.0
    %2477 = vmatpush1.xpose.msra.mxu0 0.0
    %2478 = vmatprep.subr.mxu0 0.0
    %2479 = vmatpush1.xpose.msra.mxu0 0.0
    %2480 = vmatprep.subr.mxu0 0.0
    %2481 = vmatpush1.xpose.msra.mxu0 0.0
    %2482 = vmatprep.subr.mxu0 0.0
    %2483 = vmatpush1.xpose.msra.mxu0 0.0
    %2484 = vmatprep.subr.mxu0 0.0
    %2485 = vmatpush1.xpose.msra.mxu0 0.0
    %2486 = vmatprep.subr.mxu0 0.0
    %2487 = vmatpush1.xpose.msra.mxu0 0.0
    %2488 = vmatprep.subr.mxu0 0.0
    %2489 = vmatpush1.xpose.msra.mxu0 0.0
    %2490 = vmatprep.subr.mxu0 0.0
    %2491 = vmatpush1.xpose.msra.mxu0 0.0
    %2492 = vmatprep.subr.mxu0 0.0
    %2493 = vmatpush1.xpose.msra.mxu0 0.0
    %2494 = vmatprep.subr.mxu0 0.0
    %2495 = vmatpush1.xpose.msra.mxu0 0.0
    %2496 = vmatprep.subr.mxu0 0.0
    %2497 = vmatpush1.xpose.msra.mxu0 0.0
    %2498 = vmatprep.subr.mxu0 0.0
    %2499 = vmatpush1.xpose.msra.mxu0 0.0
    %2500 = vmatprep.subr.mxu0 0.0
    %2501 = vmatpush1.xpose.msra.mxu0 0.0
    %2502 = vmatprep.subr.mxu0 0.0
    %2503 = vmatpush1.xpose.msra.mxu0 0.0
    %2504 = vmatprep.subr.mxu0 0.0
    %2505 = vmatpush1.xpose.msra.mxu0 0.0
    %2506 = vmatprep.subr.mxu0 0.0
    %2507 = vmatpush1.xpose.msra.mxu0 0.0
    %2508 = vmatprep.mubr.f32.mxu0 0.0
    %2509 = vmatmul.mubr.f32.gmra.mrb[0].mxu0 %v2436
    %v2510 = vpop.f32.mrb[0].mxu0
    %v2511 = vadd.f32 0.0, %v2510
    %v2512 = vpop.f32.mrb[0].mxu0
    %2513 = vdwg.mxu0
    %v2515 = vsel %vm796, %v1866, 0
    %v2518 = vsel %vm796, %v2429, 0
    %v2521 = vsel %vm796, %v2430, 0
    %2523 = vmatprep.subr.mxu0 0.0
    %2524 = vmatpush1.xpose.msra.mxu0 %v2518
    %2525 = vmatprep.subr.mxu0 0.0
    %2526 = vmatpush1.xpose.msra.mxu0 %v2521
    %2527 = vmatprep.subr.mxu0 0.0
    %2528 = vmatpush1.xpose.msra.mxu0 0.0
    %2529 = vmatprep.subr.mxu0 0.0
    %2530 = vmatpush1.xpose.msra.mxu0 0.0
    %2531 = vmatprep.subr.mxu0 0.0
    %2532 = vmatpush1.xpose.msra.mxu0 0.0
    %2533 = vmatprep.subr.mxu0 0.0
    %2534 = vmatpush1.xpose.msra.mxu0 0.0
    %2535 = vmatprep.subr.mxu0 0.0
    %2536 = vmatpush1.xpose.msra.mxu0 0.0
    %2537 = vmatprep.subr.mxu0 0.0
    %2538 = vmatpush1.xpose.msra.mxu0 0.0
    %2539 = vmatprep.subr.mxu0 0.0
    %2540 = vmatpush1.xpose.msra.mxu0 0.0
    %2541 = vmatprep.subr.mxu0 0.0
    %2542 = vmatpush1.xpose.msra.mxu0 0.0
    %2543 = vmatprep.subr.mxu0 0.0
    %2544 = vmatpush1.xpose.msra.mxu0 0.0
    %2545 = vmatprep.subr.mxu0 0.0
    %2546 = vmatpush1.xpose.msra.mxu0 0.0
    %2547 = vmatprep.subr.mxu0 0.0
    %2548 = vmatpush1.xpose.msra.mxu0 0.0
    %2549 = vmatprep.subr.mxu0 0.0
    %2550 = vmatpush1.xpose.msra.mxu0 0.0
    %2551 = vmatprep.subr.mxu0 0.0
    %2552 = vmatpush1.xpose.msra.mxu0 0.0
    %2553 = vmatprep.subr.mxu0 0.0
    %2554 = vmatpush1.xpose.msra.mxu0 0.0
    %2555 = vmatprep.subr.mxu0 0.0
    %2556 = vmatpush1.xpose.msra.mxu0 0.0
    %2557 = vmatprep.subr.mxu0 0.0
    %2558 = vmatpush1.xpose.msra.mxu0 0.0
    %2559 = vmatprep.subr.mxu0 0.0
    %2560 = vmatpush1.xpose.msra.mxu0 0.0
    %2561 = vmatprep.subr.mxu0 0.0
    %2562 = vmatpush1.xpose.msra.mxu0 0.0
    %2563 = vmatprep.subr.mxu0 0.0
    %2564 = vmatpush1.xpose.msra.mxu0 0.0
    %2565 = vmatprep.subr.mxu0 0.0
    %2566 = vmatpush1.xpose.msra.mxu0 0.0
    %2567 = vmatprep.subr.mxu0 0.0
    %2568 = vmatpush1.xpose.msra.mxu0 0.0
    %2569 = vmatprep.subr.mxu0 0.0
    %2570 = vmatpush1.xpose.msra.mxu0 0.0
    %2571 = vmatprep.subr.mxu0 0.0
    %2572 = vmatpush1.xpose.msra.mxu0 0.0
    %2573 = vmatprep.subr.mxu0 0.0
    %2574 = vmatpush1.xpose.msra.mxu0 0.0
    %2575 = vmatprep.subr.mxu0 0.0
    %2576 = vmatpush1.xpose.msra.mxu0 0.0
    %2577 = vmatprep.subr.mxu0 0.0
    %2578 = vmatpush1.xpose.msra.mxu0 0.0
    %2579 = vmatprep.subr.mxu0 0.0
    %2580 = vmatpush1.xpose.msra.mxu0 0.0
    %2581 = vmatprep.subr.mxu0 0.0
    %2582 = vmatpush1.xpose.msra.mxu0 0.0
    %2583 = vmatprep.subr.mxu0 0.0
    %2584 = vmatpush1.xpose.msra.mxu0 0.0
    %2585 = vmatprep.subr.mxu0 0.0
    %2586 = vmatpush1.xpose.msra.mxu0 0.0
    %2587 = vmatprep.mubr.f32.mxu0 0.0
    %2588 = vmatmul.mubr.f32.gmra.mrb[0].mxu0 %v2515
    %v2589 = vpop.f32.mrb[0].mxu0
    %v2590 = vadd.f32 0.0, %v2589
    %v2591 = vpop.f32.mrb[0].mxu0
    %2592 = vdwg.mxu0
    %v2594 = vsel %vm796, %v1871, 0
    %v2597 = vsel %vm796, %v2431, 0
    %v2600 = vsel %vm796, %v2432, 0
    %2602 = vmatprep.subr.mxu0 0.0
    %2603 = vmatpush1.xpose.msra.mxu0 %v2597
    %2604 = vmatprep.subr.mxu0 0.0
    %2605 = vmatpush1.xpose.msra.mxu0 %v2600
    %2606 = vmatprep.subr.mxu0 0.0
    %2607 = vmatpush1.xpose.msra.mxu0 0.0
    %2608 = vmatprep.subr.mxu0 0.0
    %2609 = vmatpush1.xpose.msra.mxu0 0.0
    %2610 = vmatprep.subr.mxu0 0.0
    %2611 = vmatpush1.xpose.msra.mxu0 0.0
    %2612 = vmatprep.subr.mxu0 0.0
    %2613 = vmatpush1.xpose.msra.mxu0 0.0
    %2614 = vmatprep.subr.mxu0 0.0
    %2615 = vmatpush1.xpose.msra.mxu0 0.0
    %2616 = vmatprep.subr.mxu0 0.0
    %2617 = vmatpush1.xpose.msra.mxu0 0.0
    %2618 = vmatprep.subr.mxu0 0.0
    %2619 = vmatpush1.xpose.msra.mxu0 0.0
    %2620 = vmatprep.subr.mxu0 0.0
    %2621 = vmatpush1.xpose.msra.mxu0 0.0
    %2622 = vmatprep.subr.mxu0 0.0
    %2623 = vmatpush1.xpose.msra.mxu0 0.0
    %2624 = vmatprep.subr.mxu0 0.0
    %2625 = vmatpush1.xpose.msra.mxu0 0.0
    %2626 = vmatprep.subr.mxu0 0.0
    %2627 = vmatpush1.xpose.msra.mxu0 0.0
    %2628 = vmatprep.subr.mxu0 0.0
    %2629 = vmatpush1.xpose.msra.mxu0 0.0
    %2630 = vmatprep.subr.mxu0 0.0
    %2631 = vmatpush1.xpose.msra.mxu0 0.0
    %2632 = vmatprep.subr.mxu0 0.0
    %2633 = vmatpush1.xpose.msra.mxu0 0.0
    %2634 = vmatprep.subr.mxu0 0.0
    %2635 = vmatpush1.xpose.msra.mxu0 0.0
    %2636 = vmatprep.subr.mxu0 0.0
    %2637 = vmatpush1.xpose.msra.mxu0 0.0
    %2638 = vmatprep.subr.mxu0 0.0
    %2639 = vmatpush1.xpose.msra.mxu0 0.0
    %2640 = vmatprep.subr.mxu0 0.0
    %2641 = vmatpush1.xpose.msra.mxu0 0.0
    %2642 = vmatprep.subr.mxu0 0.0
    %2643 = vmatpush1.xpose.msra.mxu0 0.0
    %2644 = vmatprep.subr.mxu0 0.0
    %2645 = vmatpush1.xpose.msra.mxu0 0.0
    %2646 = vmatprep.subr.mxu0 0.0
    %2647 = vmatpush1.xpose.msra.mxu0 0.0
    %2648 = vmatprep.subr.mxu0 0.0
    %2649 = vmatpush1.xpose.msra.mxu0 0.0
    %2650 = vmatprep.subr.mxu0 0.0
    %2651 = vmatpush1.xpose.msra.mxu0 0.0
    %2652 = vmatprep.subr.mxu0 0.0
    %2653 = vmatpush1.xpose.msra.mxu0 0.0
    %2654 = vmatprep.subr.mxu0 0.0
    %2655 = vmatpush1.xpose.msra.mxu0 0.0
    %2656 = vmatprep.subr.mxu0 0.0
    %2657 = vmatpush1.xpose.msra.mxu0 0.0
    %2658 = vmatprep.subr.mxu0 0.0
    %2659 = vmatpush1.xpose.msra.mxu0 0.0
    %2660 = vmatprep.subr.mxu0 0.0
    %2661 = vmatpush1.xpose.msra.mxu0 0.0
    %2662 = vmatprep.subr.mxu0 0.0
    %2663 = vmatpush1.xpose.msra.mxu0 0.0
    %2664 = vmatprep.subr.mxu0 0.0
    %2665 = vmatpush1.xpose.msra.mxu0 0.0
    %2666 = vmatprep.mubr.f32.mxu0 0.0
    %2667 = vmatmul.mubr.f32.gmra.mrb[0].mxu0 %v2594
    %v2668 = vpop.f32.mrb[0].mxu0
    %v2669 = vadd.f32 0.0, %v2668
    %v2670 = vpop.f32.mrb[0].mxu0
    %2671 = vdwg.mxu0
    %v2673 = vsel %vm796, %v1876, 0
    %v2676 = vsel %vm796, %v2433, 0
    %v2679 = vsel %vm796, %v2434, 0
    %2681 = vmatprep.subr.mxu0 0.0
    %2682 = vmatpush1.xpose.msra.mxu0 %v2676
    %2683 = vmatprep.subr.mxu0 0.0
    %2684 = vmatpush1.xpose.msra.mxu0 %v2679
    %2685 = vmatprep.subr.mxu0 0.0
    %2686 = vmatpush1.xpose.msra.mxu0 0.0
    %2687 = vmatprep.subr.mxu0 0.0
    %2688 = vmatpush1.xpose.msra.mxu0 0.0
    %2689 = vmatprep.subr.mxu0 0.0
    %2690 = vmatpush1.xpose.msra.mxu0 0.0
    %2691 = vmatprep.subr.mxu0 0.0
    %2692 = vmatpush1.xpose.msra.mxu0 0.0
    %2693 = vmatprep.subr.mxu0 0.0
    %2694 = vmatpush1.xpose.msra.mxu0 0.0
    %2695 = vmatprep.subr.mxu0 0.0
    %2696 = vmatpush1.xpose.msra.mxu0 0.0
    %2697 = vmatprep.subr.mxu0 0.0
    %2698 = vmatpush1.xpose.msra.mxu0 0.0
    %2699 = vmatprep.subr.mxu0 0.0
    %2700 = vmatpush1.xpose.msra.mxu0 0.0
    %2701 = vmatprep.subr.mxu0 0.0
    %2702 = vmatpush1.xpose.msra.mxu0 0.0
    %2703 = vmatprep.subr.mxu0 0.0
    %2704 = vmatpush1.xpose.msra.mxu0 0.0
    %2705 = vmatprep.subr.mxu0 0.0
    %2706 = vmatpush1.xpose.msra.mxu0 0.0
    %2707 = vmatprep.subr.mxu0 0.0
    %2708 = vmatpush1.xpose.msra.mxu0 0.0
    %2709 = vmatprep.subr.mxu0 0.0
    %2710 = vmatpush1.xpose.msra.mxu0 0.0
    %2711 = vmatprep.subr.mxu0 0.0
    %2712 = vmatpush1.xpose.msra.mxu0 0.0
    %2713 = vmatprep.subr.mxu0 0.0
    %2714 = vmatpush1.xpose.msra.mxu0 0.0
    %2715 = vmatprep.subr.mxu0 0.0
    %2716 = vmatpush1.xpose.msra.mxu0 0.0
    %2717 = vmatprep.subr.mxu0 0.0
    %2718 = vmatpush1.xpose.msra.mxu0 0.0
    %2719 = vmatprep.subr.mxu0 0.0
    %2720 = vmatpush1.xpose.msra.mxu0 0.0
    %2721 = vmatprep.subr.mxu0 0.0
    %2722 = vmatpush1.xpose.msra.mxu0 0.0
    %2723 = vmatprep.subr.mxu0 0.0
    %2724 = vmatpush1.xpose.msra.mxu0 0.0
    %2725 = vmatprep.subr.mxu0 0.0
    %2726 = vmatpush1.xpose.msra.mxu0 0.0
    %2727 = vmatprep.subr.mxu0 0.0
    %2728 = vmatpush1.xpose.msra.mxu0 0.0
    %2729 = vmatprep.subr.mxu0 0.0
    %2730 = vmatpush1.xpose.msra.mxu0 0.0
    %2731 = vmatprep.subr.mxu0 0.0
    %2732 = vmatpush1.xpose.msra.mxu0 0.0
    %2733 = vmatprep.subr.mxu0 0.0
    %2734 = vmatpush1.xpose.msra.mxu0 0.0
    %2735 = vmatprep.subr.mxu0 0.0
    %2736 = vmatpush1.xpose.msra.mxu0 0.0
    %2737 = vmatprep.subr.mxu0 0.0
    %2738 = vmatpush1.xpose.msra.mxu0 0.0
    %2739 = vmatprep.subr.mxu0 0.0
    %2740 = vmatpush1.xpose.msra.mxu0 0.0
    %2741 = vmatprep.subr.mxu0 0.0
    %2742 = vmatpush1.xpose.msra.mxu0 0.0
    %2743 = vmatprep.subr.mxu0 0.0
    %2744 = vmatpush1.xpose.msra.mxu0 0.0
    %2745 = vmatprep.mubr.f32.mxu0 0.0
    %2746 = vmatmul.mubr.f32.gmra.mrb[0].mxu0 %v2673
    %v2747 = vpop.f32.mrb[0].mxu0
    %v2748 = vadd.f32 0.0, %v2747
    %v2749 = vpop.f32.mrb[0].mxu0
    %2750 = vdwg.mxu0
    %2752 = vset.pattern.permute.xlu0 32
    %2753 = vperm.xlu0 %2752, %v1596
    %v2754 = vpop.permute.xlu0 %2753
    %2757 = vset.pattern.permute.xlu0 32
    %2758 = vperm.xlu0 %2757, %v1597
    %v2759 = vpop.permute.xlu0 %2758
    %2762 = vset.pattern.permute.xlu0 32
    %2763 = vperm.xlu0 %2762, %v1598
    %v2764 = vpop.permute.xlu0 %2763
    %2767 = vset.pattern.permute.xlu0 32
    %2768 = vperm.xlu0 %2767, %v1599
    %v2769 = vpop.permute.xlu0 %2768
    %v2771 = vsel %vm56, %v1596, 0
    %v2773 = vsel %vm56, %v1597, 0
    %v2775 = vsel %vm56, %v1598, 0
    %v2777 = vsel %vm56, %v1599, 0
    %2779 = vmatprep.subr.mxu0 0.0
    %2780 = vmatpush1.msra.mxu0 %v2511
    %2781 = vmatprep.subr.mxu0 0.0
    %2782 = vmatpush1.msra.mxu0 %v2590
    %2783 = vmatprep.subr.mxu0 0.0
    %2784 = vmatpush1.msra.mxu0 %v2669
    %2785 = vmatprep.subr.mxu0 0.0
    %2786 = vmatpush1.msra.mxu0 %v2748
    %2787 = vmatprep.subr.mxu0 0.0
    %2788 = vmatpush1.msra.mxu0 0.0
    %2789 = vmatprep.subr.mxu0 0.0
    %2790 = vmatpush1.msra.mxu0 0.0
    %2791 = vmatprep.subr.mxu0 0.0
    %2792 = vmatpush1.msra.mxu0 0.0
    %2793 = vmatprep.subr.mxu0 0.0
    %2794 = vmatpush1.msra.mxu0 0.0
    %2795 = vmatprep.subr.mxu0 0.0
    %2796 = vmatpush1.msra.mxu0 0.0
    %2797 = vmatprep.subr.mxu0 0.0
    %2798 = vmatpush1.msra.mxu0 0.0
    %2799 = vmatprep.subr.mxu0 0.0
    %2800 = vmatpush1.msra.mxu0 0.0
    %2801 = vmatprep.subr.mxu0 0.0
    %2802 = vmatpush1.msra.mxu0 0.0
    %2803 = vmatprep.subr.mxu0 0.0
    %2804 = vmatpush1.msra.mxu0 0.0
    %2805 = vmatprep.subr.mxu0 0.0
    %2806 = vmatpush1.msra.mxu0 0.0
    %2807 = vmatprep.subr.mxu0 0.0
    %2808 = vmatpush1.msra.mxu0 0.0
    %2809 = vmatprep.subr.mxu0 0.0
    %2810 = vmatpush1.msra.mxu0 0.0
    %2811 = vmatprep.subr.mxu0 0.0
    %2812 = vmatpush1.msra.mxu0 0.0
    %2813 = vmatprep.subr.mxu0 0.0
    %2814 = vmatpush1.msra.mxu0 0.0
    %2815 = vmatprep.subr.mxu0 0.0
    %2816 = vmatpush1.msra.mxu0 0.0
    %2817 = vmatprep.subr.mxu0 0.0
    %2818 = vmatpush1.msra.mxu0 0.0
    %2819 = vmatprep.subr.mxu0 0.0
    %2820 = vmatpush1.msra.mxu0 0.0
    %2821 = vmatprep.subr.mxu0 0.0
    %2822 = vmatpush1.msra.mxu0 0.0
    %2823 = vmatprep.subr.mxu0 0.0
    %2824 = vmatpush1.msra.mxu0 0.0
    %2825 = vmatprep.subr.mxu0 0.0
    %2826 = vmatpush1.msra.mxu0 0.0
    %2827 = vmatprep.subr.mxu0 0.0
    %2828 = vmatpush1.msra.mxu0 0.0
    %2829 = vmatprep.subr.mxu0 0.0
    %2830 = vmatpush1.msra.mxu0 0.0
    %2831 = vmatprep.subr.mxu0 0.0
    %2832 = vmatpush1.msra.mxu0 0.0
    %2833 = vmatprep.subr.mxu0 0.0
    %2834 = vmatpush1.msra.mxu0 0.0
    %2835 = vmatprep.subr.mxu0 0.0
    %2836 = vmatpush1.msra.mxu0 0.0
    %2837 = vmatprep.subr.mxu0 0.0
    %2838 = vmatpush1.msra.mxu0 0.0
    %2839 = vmatprep.subr.mxu0 0.0
    %2840 = vmatpush1.msra.mxu0 0.0
    %2841 = vmatprep.subr.mxu0 0.0
    %2842 = vmatpush1.msra.mxu0 0.0
    %2843 = vmatprep.mubr.f32.mxu0 0.0
    %2844 = vmatmul.mubr.f32.gmra.mrb[0].mxu0 %v2771
    %v2845 = vpop.f32.mrb[0].mxu0
    %v2846 = vadd.f32 %v2754, %v2845
    %v2847 = vpop.f32.mrb[0].mxu0
    %2848 = vmatprep.mubr.f32.mxu0 0.0
    %2849 = vmatmul.mubr.f32.gmra.mrb[0].mxu0 %v2773
    %v2850 = vpop.f32.mrb[0].mxu0
    %v2851 = vadd.f32 %v2759, %v2850
    %v2852 = vpop.f32.mrb[0].mxu0
    %2853 = vmatprep.mubr.f32.mxu0 0.0
    %2854 = vmatmul.mubr.f32.gmra.mrb[0].mxu0 %v2775
    %v2855 = vpop.f32.mrb[0].mxu0
    %v2856 = vadd.f32 %v2764, %v2855
    %v2857 = vpop.f32.mrb[0].mxu0
    %2858 = vmatprep.mubr.f32.mxu0 0.0
    %2859 = vmatmul.mubr.f32.gmra.mrb[0].mxu0 %v2777
    %v2860 = vpop.f32.mrb[0].mxu0
    %v2861 = vadd.f32 %v2769, %v2860
    %v2862 = vpop.f32.mrb[0].mxu0
    %2863 = vdwg.mxu0
    %2864 = vxpose.xlu0.b32.start [1/16] %v2846, 128
    %2865 = vxpose.xlu0.b32.cont [2/16] %v2851, 128
    %2866 = vxpose.xlu0.b32.cont [3/16] %v2856, 128
    %2867 = vxpose.xlu0.b32.cont [4/16] %v2861, 128
    %2868 = vxpose.xlu0.b32.cont [5/16] 0.0, 128
    %2869 = vxpose.xlu0.b32.cont [6/16] 0.0, 128
    %2870 = vxpose.xlu0.b32.cont [7/16] 0.0, 128
    %2871 = vxpose.xlu0.b32.cont [8/16] 0.0, 128
    %2872 = vxpose.xlu0.b32.cont [9/16] 0.0, 128
    %2873 = vxpose.xlu0.b32.cont [10/16] 0.0, 128
    %2874 = vxpose.xlu0.b32.cont [11/16] 0.0, 128
    %2875 = vxpose.xlu0.b32.cont [12/16] 0.0, 128
    %2876 = vxpose.xlu0.b32.cont [13/16] 0.0, 128
    %2877 = vxpose.xlu0.b32.cont [14/16] 0.0, 128
    %2878 = vxpose.xlu0.b32.cont [15/16] 0.0, 128
    %2879 = vxpose.xlu0.b32.end [16/16] 0.0, 128
    %v2880 = vpop.trf.xlu0
    %v2881 = vpop.trf.xlu0
    %v2882 = vpop.trf.xlu0
    %v2883 = vpop.trf.xlu0
    %v2884 = vpop.trf.xlu0
    %v2885 = vpop.trf.xlu0
    %v2886 = vpop.trf.xlu0
    %v2887 = vpop.trf.xlu0
    %v2888 = vpop.trf.xlu0
    %v2889 = vpop.trf.xlu0
    %v2890 = vpop.trf.xlu0
    %v2891 = vpop.trf.xlu0
    %v2892 = vpop.trf.xlu0
    %v2893 = vpop.trf.xlu0
    %v2894 = vpop.trf.xlu0
    %v2895 = vpop.trf.xlu0
    %v2896 = vadd.f32 %v1575, %v2880
    %v2897 = vadd.f32 %v1576, %v2881
    %v2898 = vsel %vm56, %v2896, 0.0
    %2899 = vadd.xlane.f32.xlu0 %v2898
    %v2900 = vpop.xlane.xlu0 %2899
    %v2901 = vsel %vm56, %v2897, 0.0
    %2902 = vadd.xlane.f32.xlu0 %v2901
    %v2903 = vpop.xlane.xlu0 %2902
    %v2904 = vmul.f32 %v2900, %v63
    %v2905 = vmul.f32 %v2903, %v63
    %v2906 = vsub.f32 %v2896, %v2904
    %v2907 = vsub.f32 %v2897, %v2905
    %v2908 = vmul.f32 %v2906, %v2906
    %v2909 = vmul.f32 %v2907, %v2907
    %v2910 = vsel %vm56, %v2908, 0.0
    %2911 = vadd.xlane.f32.xlu0 %v2910
    %v2912 = vpop.xlane.xlu0 %2911
    %v2913 = vsel %vm56, %v2909, 0.0
    %2914 = vadd.xlane.f32.xlu0 %v2913
    %v2915 = vpop.xlane.xlu0 %2914
    %v2916 = vmul.f32 %v2912, 0.032258064
    %v2917 = vmul.f32 %v2915, 0.032258064
    %v2918 = vrsqrt.pop %v2916
    %v2919 = vmul.f32 %v2916, %v2918
    %vm2920 = vcmp.eq.f32.partialorder %v2916, inf
    %v2921 = vsel %vm2920, %v2916, %v2919
    %vm2922 = vcmp.eq.f32.partialorder %v2916, 0.0
    %v2923 = vand.u32 %v2916, 2147483648
    %v2924 = vsel %vm2922, %v2923, %v2921
    %v2925 = vrsqrt.pop %v2917
    %v2926 = vmul.f32 %v2917, %v2925
    %vm2927 = vcmp.eq.f32.partialorder %v2917, inf
    %v2928 = vsel %vm2927, %v2917, %v2926
    %vm2929 = vcmp.eq.f32.partialorder %v2917, 0.0
    %v2930 = vand.u32 %v2917, 2147483648
    %v2931 = vsel %vm2929, %v2930, %v2928
    %v2932 = vadd.f32 %v2924, 1e-06
    %v2933 = vadd.f32 %v2931, 1e-06
    %v2934 = vrcp.pop %v2932
    %v2935 = vrcp.pop %v2933
    %v2936 = vlaneseq
    %v2937 = vshrl.u32 %v2936, 7
    %v2938 = vsub.s32 0, %v2937
    %v2939 = vrot.slane %v1579, %v2938
    %v2940 = vmul.f32 %v2939, %v2906
    %v2941 = vmul.f32 %v2939, %v2907
    %v2942 = vmul.f32 %v2940, %v2934
    %v2943 = vmul.f32 %v2941, %v2935
    %v2944 = vlaneseq
    %v2945 = vshrl.u32 %v2944, 7
    %v2946 = vsub.s32 0, %v2945
    %v2947 = vrot.slane %v1580, %v2946
    %v2948 = vadd.f32 %v2942, %v2947
    %v2949 = vadd.f32 %v2943, %v2947
    %v2950 = vlaneseq
    %v2951 = vshrl.u32 %v2950, 7
    %v2952 = vsub.s32 0, %v2951
    %v2953 = vrot.slane %v1581, %v2952
    %v2955 = vsel %vm56, %v2948, 0
    %v2958 = vsel %vm56, %v2949, 0
    %2960 = vmatprep.subr.mxu0 0.0
    %2961 = vmatpush1.msra.mxu0 %v1600
    %2962 = vmatprep.subr.mxu0 0.0
    %2963 = vmatpush1.msra.mxu0 %v1601
    %2964 = vmatprep.subr.mxu0 0.0
    %2965 = vmatpush1.msra.mxu0 %v1602
    %2966 = vmatprep.subr.mxu0 0.0
    %2967 = vmatpush1.msra.mxu0 %v1603
    %2968 = vmatprep.subr.mxu0 0.0
    %2969 = vmatpush1.msra.mxu0 0.0
    %2970 = vmatprep.subr.mxu0 0.0
    %2971 = vmatpush1.msra.mxu0 0.0
    %2972 = vmatprep.subr.mxu0 0.0
    %2973 = vmatpush1.msra.mxu0 0.0
    %2974 = vmatprep.subr.mxu0 0.0
    %2975 = vmatpush1.msra.mxu0 0.0
    %2976 = vmatprep.subr.mxu0 0.0
    %2977 = vmatpush1.msra.mxu0 0.0
    %2978 = vmatprep.subr.mxu0 0.0
    %2979 = vmatpush1.msra.mxu0 0.0
    %2980 = vmatprep.subr.mxu0 0.0
    %2981 = vmatpush1.msra.mxu0 0.0
    %2982 = vmatprep.subr.mxu0 0.0
    %2983 = vmatpush1.msra.mxu0 0.0
    %2984 = vmatprep.subr.mxu0 0.0
    %2985 = vmatpush1.msra.mxu0 0.0
    %2986 = vmatprep.subr.mxu0 0.0
    %2987 = vmatpush1.msra.mxu0 0.0
    %2988 = vmatprep.subr.mxu0 0.0
    %2989 = vmatpush1.msra.mxu0 0.0
    %2990 = vmatprep.subr.mxu0 0.0
    %2991 = vmatpush1.msra.mxu0 0.0
    %2992 = vmatprep.subr.mxu0 0.0
    %2993 = vmatpush1.msra.mxu0 0.0
    %2994 = vmatprep.subr.mxu0 0.0
    %2995 = vmatpush1.msra.mxu0 0.0
    %2996 = vmatprep.subr.mxu0 0.0
    %2997 = vmatpush1.msra.mxu0 0.0
    %2998 = vmatprep.subr.mxu0 0.0
    %2999 = vmatpush1.msra.mxu0 0.0
    %3000 = vmatprep.subr.mxu0 0.0
    %3001 = vmatpush1.msra.mxu0 0.0
    %3002 = vmatprep.subr.mxu0 0.0
    %3003 = vmatpush1.msra.mxu0 0.0
    %3004 = vmatprep.subr.mxu0 0.0
    %3005 = vmatpush1.msra.mxu0 0.0
    %3006 = vmatprep.subr.mxu0 0.0
    %3007 = vmatpush1.msra.mxu0 0.0
    %3008 = vmatprep.subr.mxu0 0.0
    %3009 = vmatpush1.msra.mxu0 0.0
    %3010 = vmatprep.subr.mxu0 0.0
    %3011 = vmatpush1.msra.mxu0 0.0
    %3012 = vmatprep.subr.mxu0 0.0
    %3013 = vmatpush1.msra.mxu0 0.0
    %3014 = vmatprep.subr.mxu0 0.0
    %3015 = vmatpush1.msra.mxu0 0.0
    %3016 = vmatprep.subr.mxu0 0.0
    %3017 = vmatpush1.msra.mxu0 0.0
    %3018 = vmatprep.subr.mxu0 0.0
    %3019 = vmatpush1.msra.mxu0 0.0
    %3020 = vmatprep.subr.mxu0 0.0
    %3021 = vmatpush1.msra.mxu0 0.0
    %3022 = vmatprep.subr.mxu0 0.0
    %3023 = vmatpush1.msra.mxu0 0.0
    %3024 = vmatprep.mubr.f32.mxu0 0.0
    %3025 = vmatmul.mubr.f32.gmra.mrb[0].mxu0 %v2955
    %v3026 = vpop.f32.mrb[0].mxu0
    %v3027 = vadd.f32 %v2953, %v3026
    %v3028 = vpop.f32.mrb[0].mxu0
    %3029 = vmatprep.mubr.f32.mxu0 0.0
    %3030 = vmatmul.mubr.f32.gmra.mrb[0].mxu0 %v2958
    %v3031 = vpop.f32.mrb[0].mxu0
    %v3032 = vadd.f32 %v2953, %v3031
    %v3033 = vpop.f32.mrb[0].mxu0
    %3034 = vdwg.mxu0
    %v3035 = vmax.f32 %v3027, 0.0
    %v3036 = vmax.f32 %v3032, 0.0
    %v3038 = vsel %vm1487, %v3035, 0
    %v3041 = vsel %vm1487, %v3036, 0
    %3043 = vmatprep.subr.mxu0 0.0
    %3044 = vmatpush1.msra.mxu0 %v1604
    %3045 = vmatprep.subr.mxu0 0.0
    %3046 = vmatpush1.msra.mxu0 %v1605
    %3047 = vmatprep.subr.mxu0 0.0
    %3048 = vmatpush1.msra.mxu0 %v1606
    %3049 = vmatprep.subr.mxu0 0.0
    %3050 = vmatpush1.msra.mxu0 %v1607
    %3051 = vmatprep.subr.mxu0 0.0
    %3052 = vmatpush1.msra.mxu0 %v1608
    %3053 = vmatprep.subr.mxu0 0.0
    %3054 = vmatpush1.msra.mxu0 %v1609
    %3055 = vmatprep.subr.mxu0 0.0
    %3056 = vmatpush1.msra.mxu0 %v1610
    %3057 = vmatprep.subr.mxu0 0.0
    %3058 = vmatpush1.msra.mxu0 %v1611
    %3059 = vmatprep.subr.mxu0 0.0
    %3060 = vmatpush1.msra.mxu0 0.0
    %3061 = vmatprep.subr.mxu0 0.0
    %3062 = vmatpush1.msra.mxu0 0.0
    %3063 = vmatprep.subr.mxu0 0.0
    %3064 = vmatpush1.msra.mxu0 0.0
    %3065 = vmatprep.subr.mxu0 0.0
    %3066 = vmatpush1.msra.mxu0 0.0
    %3067 = vmatprep.subr.mxu0 0.0
    %3068 = vmatpush1.msra.mxu0 0.0
    %3069 = vmatprep.subr.mxu0 0.0
    %3070 = vmatpush1.msra.mxu0 0.0
    %3071 = vmatprep.subr.mxu0 0.0
    %3072 = vmatpush1.msra.mxu0 0.0
    %3073 = vmatprep.subr.mxu0 0.0
    %3074 = vmatpush1.msra.mxu0 0.0
    %3075 = vmatprep.subr.mxu0 0.0
    %3076 = vmatpush1.msra.mxu0 0.0
    %3077 = vmatprep.subr.mxu0 0.0
    %3078 = vmatpush1.msra.mxu0 0.0
    %3079 = vmatprep.subr.mxu0 0.0
    %3080 = vmatpush1.msra.mxu0 0.0
    %3081 = vmatprep.subr.mxu0 0.0
    %3082 = vmatpush1.msra.mxu0 0.0
    %3083 = vmatprep.subr.mxu0 0.0
    %3084 = vmatpush1.msra.mxu0 0.0
    %3085 = vmatprep.subr.mxu0 0.0
    %3086 = vmatpush1.msra.mxu0 0.0
    %3087 = vmatprep.subr.mxu0 0.0
    %3088 = vmatpush1.msra.mxu0 0.0
    %3089 = vmatprep.subr.mxu0 0.0
    %3090 = vmatpush1.msra.mxu0 0.0
    %3091 = vmatprep.subr.mxu0 0.0
    %3092 = vmatpush1.msra.mxu0 0.0
    %3093 = vmatprep.subr.mxu0 0.0
    %3094 = vmatpush1.msra.mxu0 0.0
    %3095 = vmatprep.subr.mxu0 0.0
    %3096 = vmatpush1.msra.mxu0 0.0
    %3097 = vmatprep.subr.mxu0 0.0
    %3098 = vmatpush1.msra.mxu0 0.0
    %3099 = vmatprep.subr.mxu0 0.0
    %3100 = vmatpush1.msra.mxu0 0.0
    %3101 = vmatprep.subr.mxu0 0.0
    %3102 = vmatpush1.msra.mxu0 0.0
    %3103 = vmatprep.subr.mxu0 0.0
    %3104 = vmatpush1.msra.mxu0 0.0
    %3105 = vmatprep.subr.mxu0 0.0
    %3106 = vmatpush1.msra.mxu0 0.0
    %3107 = vmatprep.mubr.f32.mxu0 0.0
    %3108 = vmatmul.mubr.f32.gmra.mrb[0].mxu0 %v3038
    %v3109 = vpop.f32.mrb[0].mxu0
    %v3110 = vadd.f32 0.0, %v3109
    %v3111 = vpop.f32.mrb[0].mxu0
    %3112 = vmatprep.mubr.f32.mxu0 0.0
    %3113 = vmatmul.mubr.f32.gmra.mrb[0].mxu0 %v3041
    %v3114 = vpop.f32.mrb[0].mxu0
    %v3115 = vadd.f32 0.0, %v3114
    %v3116 = vpop.f32.mrb[0].mxu0
    %3117 = vdwg.mxu0
    %v3118 = vadd.f32 %v2896, %v3110
    %v3119 = vadd.f32 %v2897, %v3115
    %v3120 = vlaneseq
    %v3121 = vshrl.u32 %v3120, 7
    %v3122 = vsub.s32 0, %v3121
    %v3123 = vrot.slane %v1582, %v3122
    %v3124 = vadd.f32 %v3118, %v3123
    %v3125 = vadd.f32 %v3119, %v3123
    %v3126 = vld [vmem:[%s3 + $0xc] sm:$0x1]
    %v3127 = vld [vmem:[%s3 + $0xd] sm:$0x1]
    %v3128 = vsel %vm56, %v3124, 0.0
    %3129 = vadd.xlane.f32.xlu0 %v3128
    %v3130 = vpop.xlane.xlu0 %3129
    %v3131 = vsel %vm56, %v3125, 0.0
    %3132 = vadd.xlane.f32.xlu0 %v3131
    %v3133 = vpop.xlane.xlu0 %3132
    %v3134 = vmul.f32 %v3130, %v63
    %v3135 = vmul.f32 %v3133, %v63
    %v3136 = vsub.f32 %v3124, %v3134
    %v3137 = vsub.f32 %v3125, %v3135
    %v3138 = vmul.f32 %v3136, %v3136
    %v3139 = vmul.f32 %v3137, %v3137
    %v3140 = vsel %vm56, %v3138, 0.0
    %3141 = vadd.xlane.f32.xlu0 %v3140
    %v3142 = vpop.xlane.xlu0 %3141
    %v3143 = vsel %vm56, %v3139, 0.0
    %3144 = vadd.xlane.f32.xlu0 %v3143
    %v3145 = vpop.xlane.xlu0 %3144
    %v3146 = vmul.f32 %v3142, 0.032258064
    %v3147 = vmul.f32 %v3145, 0.032258064
    %v3148 = vrsqrt.pop %v3146
    %v3149 = vmul.f32 %v3146, %v3148
    %vm3150 = vcmp.eq.f32.partialorder %v3146, inf
    %v3151 = vsel %vm3150, %v3146, %v3149
    %vm3152 = vcmp.eq.f32.partialorder %v3146, 0.0
    %v3153 = vand.u32 %v3146, 2147483648
    %v3154 = vsel %vm3152, %v3153, %v3151
    %v3155 = vrsqrt.pop %v3147
    %v3156 = vmul.f32 %v3147, %v3155
    %vm3157 = vcmp.eq.f32.partialorder %v3147, inf
    %v3158 = vsel %vm3157, %v3147, %v3156
    %vm3159 = vcmp.eq.f32.partialorder %v3147, 0.0
    %v3160 = vand.u32 %v3147, 2147483648
    %v3161 = vsel %vm3159, %v3160, %v3158
    %v3162 = vadd.f32 %v3154, 1e-06
    %v3163 = vadd.f32 %v3161, 1e-06
    %v3164 = vrcp.pop %v3162
    %v3165 = vrcp.pop %v3163
    %v3166 = vlaneseq
    %v3167 = vshrl.u32 %v3166, 7
    %v3168 = vsub.s32 0, %v3167
    %v3169 = vrot.slane %v3126, %v3168
    %v3170 = vmul.f32 %v3169, %v3136
    %v3171 = vmul.f32 %v3169, %v3137
    %v3172 = vmul.f32 %v3170, %v3164
    %v3173 = vmul.f32 %v3171, %v3165
    %v3174 = vlaneseq
    %v3175 = vshrl.u32 %v3174, 7
    %v3176 = vsub.s32 0, %v3175
    %v3177 = vrot.slane %v3127, %v3176
    %v3178 = vadd.f32 %v3172, %v3177
    %v3179 = vadd.f32 %v3173, %v3177
    %3180 = vst.msk [vmem:[#allocation2] sm:$0xff] %vm56, %v3178
    %3181 = vst.msk [vmem:[#allocation2 + $0x8] sm:$0xff] %vm56, %v3179
    // Predicated region
    $region18: #{tpu_custom_call.1} parent=1 // pred_check
      _
    $region19: #{tpu_custom_call.1} parent=1 // pred_check_branch
      %3183 = sbr.rel (0) target = $region21
    $region20: #{tpu_custom_call.1} parent=1 // pred_region
      %s3185 = ssub.s32 256, 256
      %3186 = vsyncadd [#allocation3], %s3185
      %s3187 = sshll.u32 [#allocation2], 4
      %s3188 = int_to_ptr.vmem [resolvable:$true] %s3187
      %3193 = dma.vmem_to_hbm [thread:$0]  %s3188, 256, %s4, [#allocation3], 128, 128, 8
    $region21: #{tpu_custom_call.1} parent=1 // pred_fallthru
      _
    // Predicated region
    $region22: #{tpu_custom_call.1} parent=1 // pred_check
      _
    $region23: #{tpu_custom_call.1} parent=1 // pred_check_branch
      %3195 = sbr.rel (0) target = $region25
    $region24: #{tpu_custom_call.1} parent=1 // pred_region
      %3196 = dma.done [#allocation3], 256
    $region25: #{tpu_custom_call.1} parent=1 // pred_fallthru
      _
    %3197 = vsyncpa [#allocation3], 1

</llo_original>
